<compile_context>
chip_gen: v7x
topology: tpu7x:2x2x1
jax: 0.10.0
libtpu: 0.0.40
codegen_flags: <defaults>
</compile_context>

<pallas_src>
import jax
import jax.numpy as jnp
from jax import lax
from jax.experimental import pallas as pl
from jax.experimental.pallas import tpu as pltpu


def lstm_kernel(tok_ref, emb_ih_ref, h0_ref, c0_ref, w_hh_t_ref, b_ref,
                w_lin_t_ref, b_lin_ref,
                out_ref, hn_ref, cn_ref, hs_ref):
    T = tok_ref.shape[0]
    V = emb_ih_ref.shape[0]
    H = h0_ref.shape[1]
    HIGH = lax.Precision.HIGHEST

    # ---- Embedding + input projection fused: one-hot gather against the pre-folded
    #      (V, 4H) table, all timesteps in one lane-dense MXU matmul. ----
    onehot = (lax.broadcasted_iota(jnp.int32, (T, V), 1) == tok_ref[...]).astype(jnp.float32)
    xg = jnp.dot(onehot, emb_ih_ref[...],
                 preferred_element_type=jnp.float32, precision=HIGH) + b_ref[...]   # (T, 4H)

    # Recurrent weights: single (H, 4H) matrix, loaded once, vreg-resident across the unroll.
    w_hh_t = w_hh_t_ref[...]

    h = h0_ref[...]          # (1, H)
    c = c0_ref[...]          # (1, H)
    # Fully unrolled recurrence: T is small and static; one fused (1,H)x(H,4H) MXU matmul
    # per step, activations as two full-width EUP passes + lane slices.
    for t in range(T):
        gates = xg[t:t + 1, :] + jnp.dot(h, w_hh_t,
                                         preferred_element_type=jnp.float32,
                                         precision=HIGH)                    # (1, 4H)
        sig = jax.nn.sigmoid(gates)                                          # one EUP pass
        tg = jnp.tanh(gates)                                                 # one EUP pass
        i = sig[:, 0 * H:1 * H]
        f = sig[:, 1 * H:2 * H]
        g = tg[:, 2 * H:3 * H]
        o = sig[:, 3 * H:4 * H]
        c = f * c + i * g
        h = o * jnp.tanh(c)
        hs_ref[t:t + 1, :] = h          # off-critical-path store of this step's hidden row

    hn_ref[...] = h
    cn_ref[...] = c

    # ---- Linear -> Dropout(eval, identity) -> LogSoftmax(dim=1). ----
    hs_all = hs_ref[...]                                                     # (T, H)
    logits = jnp.dot(hs_all, w_lin_t_ref[...],
                     preferred_element_type=jnp.float32,
                     precision=HIGH) + b_lin_ref[...]                        # (T, V)
    m = jnp.max(logits, axis=1, keepdims=True)
    shifted = logits - m
    lse = jnp.log(jnp.sum(jnp.exp(shifted), axis=1, keepdims=True))
    out_ref[...] = shifted - lse


def prepare_params(params):
    """One-time parameter prep, hoisted out of the per-call path."""
    embed_table, w_ih, w_hh, b_ih, b_hh, w_lin, b_lin = params
    H = w_hh.shape[1]
    V = w_lin.shape[0]
    # Fold embedding table into the input projection: (V, E) @ (E, 4H) -> (V, 4H).
    emb_ih = jnp.dot(embed_table, w_ih.T, precision=lax.Precision.HIGHEST)
    w_hh_t = w_hh.T                                            # (H, 4H), gate order i,f,g,o
    b_comb = (b_ih + b_hh).reshape(1, 4 * H)                   # (1, 4H)
    w_lin_t = w_lin.T                                          # (H, V)
    b_lin2 = b_lin.reshape(1, V)                               # (1, V)
    return (emb_ih, w_hh_t, b_comb, w_lin_t, b_lin2)


@jax.jit
def lstm_forward(token_ids, prepared, hidden):
    """Mirrors LSTM.forward(input, hidden) -> (log_probs, (h_n, c_n))."""
    emb_ih, w_hh_t, b_comb, w_lin_t, b_lin2 = prepared
    h0, c0 = hidden                                            # (1, 1, H) each, PyTorch convention

    T = token_ids.shape[0]
    V = emb_ih.shape[0]
    H = h0.shape[-1]

    tok2d = token_ids.reshape(T, 1).astype(jnp.int32)
    h0_2d = h0.reshape(1, H)
    c0_2d = c0.reshape(1, H)

    vmem = pl.BlockSpec(memory_space=pltpu.MemorySpace.VMEM)
    log_probs, hn, cn = pl.pallas_call(
        lstm_kernel,
        out_shape=(
            jax.ShapeDtypeStruct((T, V), jnp.float32),
            jax.ShapeDtypeStruct((1, H), jnp.float32),
            jax.ShapeDtypeStruct((1, H), jnp.float32),
        ),
        in_specs=[vmem] * 8,
        out_specs=(vmem, vmem, vmem),
        scratch_shapes=[pltpu.VMEM((T, H), jnp.float32)],
    )(tok2d, emb_ih, h0_2d, c0_2d, w_hh_t, b_comb, w_lin_t, b_lin2)

    return log_probs, (hn.reshape(1, 1, H), cn.reshape(1, 1, H))


def ref_forward(token_ids, params, hidden):
    """Pure-JAX reference of the PyTorch forward (eval-mode dropout)."""
    embed_table, w_ih, w_hh, b_ih, b_hh, w_lin, b_lin = params
    h0, c0 = hidden
    H = w_hh.shape[1]
    x = embed_table[token_ids]

    def step(carry, xt):
        h, c = carry
        gates = xt @ w_ih.T + b_ih + h @ w_hh.T + b_hh
        i, f, g, o = jnp.split(gates, 4)
        c = jax.nn.sigmoid(f) * c + jax.nn.sigmoid(i) * jnp.tanh(g)
        h = jax.nn.sigmoid(o) * jnp.tanh(c)
        return (h, c), h

    (hT, cT), hs = lax.scan(step, (h0.reshape(H), c0.reshape(H)), x)
    logits = hs @ w_lin.T + b_lin
    return jax.nn.log_softmax(logits, axis=1), (hT.reshape(1, 1, H), cT.reshape(1, 1, H))


if __name__ == "__main__":
    # Module hyperparameters (small, consistent with the PyTorch __init__).
    input_dim = 32     # vocab size
    embed_dim = 16
    hidden_dim = 32
    seq_len = 8

    key = jax.random.PRNGKey(0)
    ks = jax.random.split(key, 8)

    def uni(k, shape):
        return jax.random.uniform(k, shape, jnp.float32, -0.1, 0.1)

    embed_table = uni(ks[0], (input_dim, embed_dim))
    w_ih = uni(ks[1], (4 * hidden_dim, embed_dim))
    w_hh = uni(ks[2], (4 * hidden_dim, hidden_dim))
    b_ih = uni(ks[3], (4 * hidden_dim,))
    b_hh = uni(ks[4], (4 * hidden_dim,))
    w_lin = uni(ks[5], (input_dim, hidden_dim))
    b_lin = uni(ks[6], (input_dim,))
    params = (embed_table, w_ih, w_hh, b_ih, b_hh, w_lin, b_lin)

    token_ids = jax.random.randint(ks[7], (seq_len,), 0, input_dim, jnp.int32)

    # initHidden(): zeros of shape (1, 1, hidden_dim)
    hidden = (jnp.zeros((1, 1, hidden_dim), jnp.float32),
              jnp.zeros((1, 1, hidden_dim), jnp.float32))

    prepared = prepare_params(params)   # hoisted, one-time weight prep (embedding folded in)

    out, (hn, cn) = lstm_forward(token_ids, prepared, hidden)
    jax.block_until_ready((out, hn, cn))

    ref_out, (ref_hn, ref_cn) = ref_forward(token_ids, params, hidden)
    assert out.shape == (seq_len, input_dim)
    assert hn.shape == (1, 1, hidden_dim) and cn.shape == (1, 1, hidden_dim)
    assert jnp.allclose(out, ref_out, atol=1e-4)
    assert jnp.allclose(hn, ref_hn, atol=1e-5)
    assert jnp.allclose(cn, ref_cn, atol=1e-5)

    # TODO(synk): Dropout(p=0.1) is implemented as identity (eval semantics); training-mode
    # stochastic masking would need pltpu.prng_seed/prng_random_bits inside the kernel.
    print("KERNEL_OK")
</pallas_src>

<mosaic_0001>
module attributes {stable_mosaic.version = 11 : i64} {
  func.func @lstm_kernel(%arg0: memref<8x1xi32, #tpu.memory_space<vmem>>, %arg1: memref<32x128xf32, #tpu.memory_space<vmem>>, %arg2: memref<1x32xf32, #tpu.memory_space<vmem>>, %arg3: memref<1x32xf32, #tpu.memory_space<vmem>>, %arg4: memref<32x128xf32, #tpu.memory_space<vmem>>, %arg5: memref<1x128xf32, #tpu.memory_space<vmem>>, %arg6: memref<32x32xf32, #tpu.memory_space<vmem>>, %arg7: memref<1x32xf32, #tpu.memory_space<vmem>>, %arg8: memref<8x32xf32, #tpu.memory_space<vmem>>, %arg9: memref<1x32xf32, #tpu.memory_space<vmem>>, %arg10: memref<1x32xf32, #tpu.memory_space<vmem>>, %arg11: memref<8x32xf32, #tpu.memory_space<vmem>>) attributes {dimension_semantics = [], scalar_prefetch = 0 : i64, scratch_operands = 1 : i64, tpu.core_type = #tpu.core_type<tc>} {
    %0 = tpu.iota {dimensions = array<i32: 1>} : vector<8x32xi32>
    %c0 = arith.constant 0 : index
    %c0_0 = arith.constant 0 : index
    %1 = vector.load %arg0[%c0, %c0_0] : memref<8x1xi32, #tpu.memory_space<vmem>>, vector<8x1xi32>
    %2 = vector.broadcast %1 : vector<8x1xi32> to vector<8x32xi32>
    %3 = arith.cmpi eq, %0, %2 : vector<8x32xi32>
    %4 = arith.extui %3 : vector<8x32xi1> to vector<8x32xi32>
    %5 = arith.sitofp %4 : vector<8x32xi32> to vector<8x32xf32>
    %c0_1 = arith.constant 0 : index
    %c0_2 = arith.constant 0 : index
    %6 = vector.load %arg1[%c0_1, %c0_2] : memref<32x128xf32, #tpu.memory_space<vmem>>, vector<32x128xf32>
    %cst = arith.constant dense<0.000000e+00> : vector<8x128xf32>
    %7 = tpu.matmul %5, %6, %cst {dimension_numbers = #tpu.dot_dimension_numbers<[1], [0], [0], [1], [0, 0, 1, 1], [], []>, precision = #tpu.contract_precision<fp32>} : vector<8x32xf32>, vector<32x128xf32>, vector<8x128xf32> -> vector<8x128xf32>
    %c0_3 = arith.constant 0 : index
    %c0_4 = arith.constant 0 : index
    %8 = vector.load %arg5[%c0_3, %c0_4] : memref<1x128xf32, #tpu.memory_space<vmem>>, vector<1x128xf32>
    %9 = vector.broadcast %8 : vector<1x128xf32> to vector<8x128xf32>
    %10 = arith.addf %7, %9 : vector<8x128xf32>
    %c0_5 = arith.constant 0 : index
    %c0_6 = arith.constant 0 : index
    %11 = vector.load %arg4[%c0_5, %c0_6] : memref<32x128xf32, #tpu.memory_space<vmem>>, vector<32x128xf32>
    %c0_7 = arith.constant 0 : index
    %c0_8 = arith.constant 0 : index
    %12 = vector.load %arg2[%c0_7, %c0_8] : memref<1x32xf32, #tpu.memory_space<vmem>>, vector<1x32xf32>
    %c0_9 = arith.constant 0 : index
    %c0_10 = arith.constant 0 : index
    %13 = vector.load %arg3[%c0_9, %c0_10] : memref<1x32xf32, #tpu.memory_space<vmem>>, vector<1x32xf32>
    %14 = vector.extract_strided_slice %10 {offsets = [0, 0], sizes = [1, 128], strides = [1, 1]} : vector<8x128xf32> to vector<1x128xf32>
    %cst_11 = arith.constant dense<0.000000e+00> : vector<1x128xf32>
    %15 = tpu.matmul %12, %11, %cst_11 {dimension_numbers = #tpu.dot_dimension_numbers<[1], [0], [0], [1], [0, 0, 1, 1], [], []>, precision = #tpu.contract_precision<fp32>} : vector<1x32xf32>, vector<32x128xf32>, vector<1x128xf32> -> vector<1x128xf32>
    %16 = arith.addf %14, %15 : vector<1x128xf32>
    %17 = arith.negf %16 : vector<1x128xf32>
    %18 = math.exp %17 : vector<1x128xf32>
    %cst_12 = arith.constant 1.000000e+00 : f32
    %19 = vector.broadcast %cst_12 : f32 to vector<1x128xf32>
    %20 = arith.addf %19, %18 : vector<1x128xf32>
    %21 = arith.divf %19, %20 : vector<1x128xf32>
    %22 = math.tanh %16 : vector<1x128xf32>
    %23 = vector.extract_strided_slice %21 {offsets = [0, 0], sizes = [1, 32], strides = [1, 1]} : vector<1x128xf32> to vector<1x32xf32>
    %24 = vector.extract_strided_slice %21 {offsets = [0, 32], sizes = [1, 32], strides = [1, 1]} : vector<1x128xf32> to vector<1x32xf32>
    %25 = vector.extract_strided_slice %22 {offsets = [0, 64], sizes = [1, 32], strides = [1, 1]} : vector<1x128xf32> to vector<1x32xf32>
    %26 = vector.extract_strided_slice %21 {offsets = [0, 96], sizes = [1, 32], strides = [1, 1]} : vector<1x128xf32> to vector<1x32xf32>
    %27 = arith.mulf %24, %13 : vector<1x32xf32>
    %28 = arith.mulf %23, %25 : vector<1x32xf32>
    %29 = arith.addf %27, %28 : vector<1x32xf32>
    %30 = math.tanh %29 : vector<1x32xf32>
    %31 = arith.mulf %26, %30 : vector<1x32xf32>
    %c0_13 = arith.constant 0 : index
    %c0_14 = arith.constant 0 : index
    %32 = vector.load %arg11[%c0_13, %c0_14] : memref<8x32xf32, #tpu.memory_space<vmem>>, vector<1x32xf32>
    tpu.vector_store %arg11[%c0_13, %c0_14], %31 {strides = array<i32>} : memref<8x32xf32, #tpu.memory_space<vmem>>, vector<1x32xf32>,
    %33 = vector.extract_strided_slice %10 {offsets = [1, 0], sizes = [1, 128], strides = [1, 1]} : vector<8x128xf32> to vector<1x128xf32>
    %cst_15 = arith.constant dense<0.000000e+00> : vector<1x128xf32>
    %34 = tpu.matmul %31, %11, %cst_15 {dimension_numbers = #tpu.dot_dimension_numbers<[1], [0], [0], [1], [0, 0, 1, 1], [], []>, precision = #tpu.contract_precision<fp32>} : vector<1x32xf32>, vector<32x128xf32>, vector<1x128xf32> -> vector<1x128xf32>
    %35 = arith.addf %33, %34 : vector<1x128xf32>
    %36 = arith.negf %35 : vector<1x128xf32>
    %37 = math.exp %36 : vector<1x128xf32>
    %cst_16 = arith.constant 1.000000e+00 : f32
    %38 = vector.broadcast %cst_16 : f32 to vector<1x128xf32>
    %39 = arith.addf %38, %37 : vector<1x128xf32>
    %40 = arith.divf %38, %39 : vector<1x128xf32>
    %41 = math.tanh %35 : vector<1x128xf32>
    %42 = vector.extract_strided_slice %40 {offsets = [0, 0], sizes = [1, 32], strides = [1, 1]} : vector<1x128xf32> to vector<1x32xf32>
    %43 = vector.extract_strided_slice %40 {offsets = [0, 32], sizes = [1, 32], strides = [1, 1]} : vector<1x128xf32> to vector<1x32xf32>
    %44 = vector.extract_strided_slice %41 {offsets = [0, 64], sizes = [1, 32], strides = [1, 1]} : vector<1x128xf32> to vector<1x32xf32>
    %45 = vector.extract_strided_slice %40 {offsets = [0, 96], sizes = [1, 32], strides = [1, 1]} : vector<1x128xf32> to vector<1x32xf32>
    %46 = arith.mulf %43, %29 : vector<1x32xf32>
    %47 = arith.mulf %42, %44 : vector<1x32xf32>
    %48 = arith.addf %46, %47 : vector<1x32xf32>
    %49 = math.tanh %48 : vector<1x32xf32>
    %50 = arith.mulf %45, %49 : vector<1x32xf32>
    %c1 = arith.constant 1 : index
    %c0_17 = arith.constant 0 : index
    %51 = vector.load %arg11[%c1, %c0_17] : memref<8x32xf32, #tpu.memory_space<vmem>>, vector<1x32xf32>
    tpu.vector_store %arg11[%c1, %c0_17], %50 {strides = array<i32>} : memref<8x32xf32, #tpu.memory_space<vmem>>, vector<1x32xf32>,
    %52 = vector.extract_strided_slice %10 {offsets = [2, 0], sizes = [1, 128], strides = [1, 1]} : vector<8x128xf32> to vector<1x128xf32>
    %cst_18 = arith.constant dense<0.000000e+00> : vector<1x128xf32>
    %53 = tpu.matmul %50, %11, %cst_18 {dimension_numbers = #tpu.dot_dimension_numbers<[1], [0], [0], [1], [0, 0, 1, 1], [], []>, precision = #tpu.contract_precision<fp32>} : vector<1x32xf32>, vector<32x128xf32>, vector<1x128xf32> -> vector<1x128xf32>
    %54 = arith.addf %52, %53 : vector<1x128xf32>
    %55 = arith.negf %54 : vector<1x128xf32>
    %56 = math.exp %55 : vector<1x128xf32>
    %cst_19 = arith.constant 1.000000e+00 : f32
    %57 = vector.broadcast %cst_19 : f32 to vector<1x128xf32>
    %58 = arith.addf %57, %56 : vector<1x128xf32>
    %59 = arith.divf %57, %58 : vector<1x128xf32>
    %60 = math.tanh %54 : vector<1x128xf32>
    %61 = vector.extract_strided_slice %59 {offsets = [0, 0], sizes = [1, 32], strides = [1, 1]} : vector<1x128xf32> to vector<1x32xf32>
    %62 = vector.extract_strided_slice %59 {offsets = [0, 32], sizes = [1, 32], strides = [1, 1]} : vector<1x128xf32> to vector<1x32xf32>
    %63 = vector.extract_strided_slice %60 {offsets = [0, 64], sizes = [1, 32], strides = [1, 1]} : vector<1x128xf32> to vector<1x32xf32>
    %64 = vector.extract_strided_slice %59 {offsets = [0, 96], sizes = [1, 32], strides = [1, 1]} : vector<1x128xf32> to vector<1x32xf32>
    %65 = arith.mulf %62, %48 : vector<1x32xf32>
    %66 = arith.mulf %61, %63 : vector<1x32xf32>
    %67 = arith.addf %65, %66 : vector<1x32xf32>
    %68 = math.tanh %67 : vector<1x32xf32>
    %69 = arith.mulf %64, %68 : vector<1x32xf32>
    %c2 = arith.constant 2 : index
    %c0_20 = arith.constant 0 : index
    %70 = vector.load %arg11[%c2, %c0_20] : memref<8x32xf32, #tpu.memory_space<vmem>>, vector<1x32xf32>
    tpu.vector_store %arg11[%c2, %c0_20], %69 {strides = array<i32>} : memref<8x32xf32, #tpu.memory_space<vmem>>, vector<1x32xf32>,
    %71 = vector.extract_strided_slice %10 {offsets = [3, 0], sizes = [1, 128], strides = [1, 1]} : vector<8x128xf32> to vector<1x128xf32>
    %cst_21 = arith.constant dense<0.000000e+00> : vector<1x128xf32>
    %72 = tpu.matmul %69, %11, %cst_21 {dimension_numbers = #tpu.dot_dimension_numbers<[1], [0], [0], [1], [0, 0, 1, 1], [], []>, precision = #tpu.contract_precision<fp32>} : vector<1x32xf32>, vector<32x128xf32>, vector<1x128xf32> -> vector<1x128xf32>
    %73 = arith.addf %71, %72 : vector<1x128xf32>
    %74 = arith.negf %73 : vector<1x128xf32>
    %75 = math.exp %74 : vector<1x128xf32>
    %cst_22 = arith.constant 1.000000e+00 : f32
    %76 = vector.broadcast %cst_22 : f32 to vector<1x128xf32>
    %77 = arith.addf %76, %75 : vector<1x128xf32>
    %78 = arith.divf %76, %77 : vector<1x128xf32>
    %79 = math.tanh %73 : vector<1x128xf32>
    %80 = vector.extract_strided_slice %78 {offsets = [0, 0], sizes = [1, 32], strides = [1, 1]} : vector<1x128xf32> to vector<1x32xf32>
    %81 = vector.extract_strided_slice %78 {offsets = [0, 32], sizes = [1, 32], strides = [1, 1]} : vector<1x128xf32> to vector<1x32xf32>
    %82 = vector.extract_strided_slice %79 {offsets = [0, 64], sizes = [1, 32], strides = [1, 1]} : vector<1x128xf32> to vector<1x32xf32>
    %83 = vector.extract_strided_slice %78 {offsets = [0, 96], sizes = [1, 32], strides = [1, 1]} : vector<1x128xf32> to vector<1x32xf32>
    %84 = arith.mulf %81, %67 : vector<1x32xf32>
    %85 = arith.mulf %80, %82 : vector<1x32xf32>
    %86 = arith.addf %84, %85 : vector<1x32xf32>
    %87 = math.tanh %86 : vector<1x32xf32>
    %88 = arith.mulf %83, %87 : vector<1x32xf32>
    %c3 = arith.constant 3 : index
    %c0_23 = arith.constant 0 : index
    %89 = vector.load %arg11[%c3, %c0_23] : memref<8x32xf32, #tpu.memory_space<vmem>>, vector<1x32xf32>
    tpu.vector_store %arg11[%c3, %c0_23], %88 {strides = array<i32>} : memref<8x32xf32, #tpu.memory_space<vmem>>, vector<1x32xf32>,
    %90 = vector.extract_strided_slice %10 {offsets = [4, 0], sizes = [1, 128], strides = [1, 1]} : vector<8x128xf32> to vector<1x128xf32>
    %cst_24 = arith.constant dense<0.000000e+00> : vector<1x128xf32>
    %91 = tpu.matmul %88, %11, %cst_24 {dimension_numbers = #tpu.dot_dimension_numbers<[1], [0], [0], [1], [0, 0, 1, 1], [], []>, precision = #tpu.contract_precision<fp32>} : vector<1x32xf32>, vector<32x128xf32>, vector<1x128xf32> -> vector<1x128xf32>
    %92 = arith.addf %90, %91 : vector<1x128xf32>
    %93 = arith.negf %92 : vector<1x128xf32>
    %94 = math.exp %93 : vector<1x128xf32>
    %cst_25 = arith.constant 1.000000e+00 : f32
    %95 = vector.broadcast %cst_25 : f32 to vector<1x128xf32>
    %96 = arith.addf %95, %94 : vector<1x128xf32>
    %97 = arith.divf %95, %96 : vector<1x128xf32>
    %98 = math.tanh %92 : vector<1x128xf32>
    %99 = vector.extract_strided_slice %97 {offsets = [0, 0], sizes = [1, 32], strides = [1, 1]} : vector<1x128xf32> to vector<1x32xf32>
    %100 = vector.extract_strided_slice %97 {offsets = [0, 32], sizes = [1, 32], strides = [1, 1]} : vector<1x128xf32> to vector<1x32xf32>
    %101 = vector.extract_strided_slice %98 {offsets = [0, 64], sizes = [1, 32], strides = [1, 1]} : vector<1x128xf32> to vector<1x32xf32>
    %102 = vector.extract_strided_slice %97 {offsets = [0, 96], sizes = [1, 32], strides = [1, 1]} : vector<1x128xf32> to vector<1x32xf32>
    %103 = arith.mulf %100, %86 : vector<1x32xf32>
    %104 = arith.mulf %99, %101 : vector<1x32xf32>
    %105 = arith.addf %103, %104 : vector<1x32xf32>
    %106 = math.tanh %105 : vector<1x32xf32>
    %107 = arith.mulf %102, %106 : vector<1x32xf32>
    %c4 = arith.constant 4 : index
    %c0_26 = arith.constant 0 : index
    %108 = vector.load %arg11[%c4, %c0_26] : memref<8x32xf32, #tpu.memory_space<vmem>>, vector<1x32xf32>
    tpu.vector_store %arg11[%c4, %c0_26], %107 {strides = array<i32>} : memref<8x32xf32, #tpu.memory_space<vmem>>, vector<1x32xf32>,
    %109 = vector.extract_strided_slice %10 {offsets = [5, 0], sizes = [1, 128], strides = [1, 1]} : vector<8x128xf32> to vector<1x128xf32>
    %cst_27 = arith.constant dense<0.000000e+00> : vector<1x128xf32>
    %110 = tpu.matmul %107, %11, %cst_27 {dimension_numbers = #tpu.dot_dimension_numbers<[1], [0], [0], [1], [0, 0, 1, 1], [], []>, precision = #tpu.contract_precision<fp32>} : vector<1x32xf32>, vector<32x128xf32>, vector<1x128xf32> -> vector<1x128xf32>
    %111 = arith.addf %109, %110 : vector<1x128xf32>
    %112 = arith.negf %111 : vector<1x128xf32>
    %113 = math.exp %112 : vector<1x128xf32>
    %cst_28 = arith.constant 1.000000e+00 : f32
    %114 = vector.broadcast %cst_28 : f32 to vector<1x128xf32>
    %115 = arith.addf %114, %113 : vector<1x128xf32>
    %116 = arith.divf %114, %115 : vector<1x128xf32>
    %117 = math.tanh %111 : vector<1x128xf32>
    %118 = vector.extract_strided_slice %116 {offsets = [0, 0], sizes = [1, 32], strides = [1, 1]} : vector<1x128xf32> to vector<1x32xf32>
    %119 = vector.extract_strided_slice %116 {offsets = [0, 32], sizes = [1, 32], strides = [1, 1]} : vector<1x128xf32> to vector<1x32xf32>
    %120 = vector.extract_strided_slice %117 {offsets = [0, 64], sizes = [1, 32], strides = [1, 1]} : vector<1x128xf32> to vector<1x32xf32>
    %121 = vector.extract_strided_slice %116 {offsets = [0, 96], sizes = [1, 32], strides = [1, 1]} : vector<1x128xf32> to vector<1x32xf32>
    %122 = arith.mulf %119, %105 : vector<1x32xf32>
    %123 = arith.mulf %118, %120 : vector<1x32xf32>
    %124 = arith.addf %122, %123 : vector<1x32xf32>
    %125 = math.tanh %124 : vector<1x32xf32>
    %126 = arith.mulf %121, %125 : vector<1x32xf32>
    %c5 = arith.constant 5 : index
    %c0_29 = arith.constant 0 : index
    %127 = vector.load %arg11[%c5, %c0_29] : memref<8x32xf32, #tpu.memory_space<vmem>>, vector<1x32xf32>
    tpu.vector_store %arg11[%c5, %c0_29], %126 {strides = array<i32>} : memref<8x32xf32, #tpu.memory_space<vmem>>, vector<1x32xf32>,
    %128 = vector.extract_strided_slice %10 {offsets = [6, 0], sizes = [1, 128], strides = [1, 1]} : vector<8x128xf32> to vector<1x128xf32>
    %cst_30 = arith.constant dense<0.000000e+00> : vector<1x128xf32>
    %129 = tpu.matmul %126, %11, %cst_30 {dimension_numbers = #tpu.dot_dimension_numbers<[1], [0], [0], [1], [0, 0, 1, 1], [], []>, precision = #tpu.contract_precision<fp32>} : vector<1x32xf32>, vector<32x128xf32>, vector<1x128xf32> -> vector<1x128xf32>
    %130 = arith.addf %128, %129 : vector<1x128xf32>
    %131 = arith.negf %130 : vector<1x128xf32>
    %132 = math.exp %131 : vector<1x128xf32>
    %cst_31 = arith.constant 1.000000e+00 : f32
    %133 = vector.broadcast %cst_31 : f32 to vector<1x128xf32>
    %134 = arith.addf %133, %132 : vector<1x128xf32>
    %135 = arith.divf %133, %134 : vector<1x128xf32>
    %136 = math.tanh %130 : vector<1x128xf32>
    %137 = vector.extract_strided_slice %135 {offsets = [0, 0], sizes = [1, 32], strides = [1, 1]} : vector<1x128xf32> to vector<1x32xf32>
    %138 = vector.extract_strided_slice %135 {offsets = [0, 32], sizes = [1, 32], strides = [1, 1]} : vector<1x128xf32> to vector<1x32xf32>
    %139 = vector.extract_strided_slice %136 {offsets = [0, 64], sizes = [1, 32], strides = [1, 1]} : vector<1x128xf32> to vector<1x32xf32>
    %140 = vector.extract_strided_slice %135 {offsets = [0, 96], sizes = [1, 32], strides = [1, 1]} : vector<1x128xf32> to vector<1x32xf32>
    %141 = arith.mulf %138, %124 : vector<1x32xf32>
    %142 = arith.mulf %137, %139 : vector<1x32xf32>
    %143 = arith.addf %141, %142 : vector<1x32xf32>
    %144 = math.tanh %143 : vector<1x32xf32>
    %145 = arith.mulf %140, %144 : vector<1x32xf32>
    %c6 = arith.constant 6 : index
    %c0_32 = arith.constant 0 : index
    %146 = vector.load %arg11[%c6, %c0_32] : memref<8x32xf32, #tpu.memory_space<vmem>>, vector<1x32xf32>
    tpu.vector_store %arg11[%c6, %c0_32], %145 {strides = array<i32>} : memref<8x32xf32, #tpu.memory_space<vmem>>, vector<1x32xf32>,
    %147 = vector.extract_strided_slice %10 {offsets = [7, 0], sizes = [1, 128], strides = [1, 1]} : vector<8x128xf32> to vector<1x128xf32>
    %cst_33 = arith.constant dense<0.000000e+00> : vector<1x128xf32>
    %148 = tpu.matmul %145, %11, %cst_33 {dimension_numbers = #tpu.dot_dimension_numbers<[1], [0], [0], [1], [0, 0, 1, 1], [], []>, precision = #tpu.contract_precision<fp32>} : vector<1x32xf32>, vector<32x128xf32>, vector<1x128xf32> -> vector<1x128xf32>
    %149 = arith.addf %147, %148 : vector<1x128xf32>
    %150 = arith.negf %149 : vector<1x128xf32>
    %151 = math.exp %150 : vector<1x128xf32>
    %cst_34 = arith.constant 1.000000e+00 : f32
    %152 = vector.broadcast %cst_34 : f32 to vector<1x128xf32>
    %153 = arith.addf %152, %151 : vector<1x128xf32>
    %154 = arith.divf %152, %153 : vector<1x128xf32>
    %155 = math.tanh %149 : vector<1x128xf32>
    %156 = vector.extract_strided_slice %154 {offsets = [0, 0], sizes = [1, 32], strides = [1, 1]} : vector<1x128xf32> to vector<1x32xf32>
    %157 = vector.extract_strided_slice %154 {offsets = [0, 32], sizes = [1, 32], strides = [1, 1]} : vector<1x128xf32> to vector<1x32xf32>
    %158 = vector.extract_strided_slice %155 {offsets = [0, 64], sizes = [1, 32], strides = [1, 1]} : vector<1x128xf32> to vector<1x32xf32>
    %159 = vector.extract_strided_slice %154 {offsets = [0, 96], sizes = [1, 32], strides = [1, 1]} : vector<1x128xf32> to vector<1x32xf32>
    %160 = arith.mulf %157, %143 : vector<1x32xf32>
    %161 = arith.mulf %156, %158 : vector<1x32xf32>
    %162 = arith.addf %160, %161 : vector<1x32xf32>
    %163 = math.tanh %162 : vector<1x32xf32>
    %164 = arith.mulf %159, %163 : vector<1x32xf32>
    %c7 = arith.constant 7 : index
    %c0_35 = arith.constant 0 : index
    %165 = vector.load %arg11[%c7, %c0_35] : memref<8x32xf32, #tpu.memory_space<vmem>>, vector<1x32xf32>
    tpu.vector_store %arg11[%c7, %c0_35], %164 {strides = array<i32>} : memref<8x32xf32, #tpu.memory_space<vmem>>, vector<1x32xf32>,
    %c0_36 = arith.constant 0 : index
    %c0_37 = arith.constant 0 : index
    %166 = vector.load %arg9[%c0_36, %c0_37] : memref<1x32xf32, #tpu.memory_space<vmem>>, vector<1x32xf32>
    tpu.vector_store %arg9[%c0_36, %c0_37], %164 {strides = array<i32>} : memref<1x32xf32, #tpu.memory_space<vmem>>, vector<1x32xf32>,
    %c0_38 = arith.constant 0 : index
    %c0_39 = arith.constant 0 : index
    %167 = vector.load %arg10[%c0_38, %c0_39] : memref<1x32xf32, #tpu.memory_space<vmem>>, vector<1x32xf32>
    tpu.vector_store %arg10[%c0_38, %c0_39], %162 {strides = array<i32>} : memref<1x32xf32, #tpu.memory_space<vmem>>, vector<1x32xf32>,
    %c0_40 = arith.constant 0 : index
    %c0_41 = arith.constant 0 : index
    %168 = vector.load %arg11[%c0_40, %c0_41] : memref<8x32xf32, #tpu.memory_space<vmem>>, vector<8x32xf32>
    %c0_42 = arith.constant 0 : index
    %c0_43 = arith.constant 0 : index
    %169 = vector.load %arg6[%c0_42, %c0_43] : memref<32x32xf32, #tpu.memory_space<vmem>>, vector<32x32xf32>
    %cst_44 = arith.constant dense<0.000000e+00> : vector<8x32xf32>
    %170 = tpu.matmul %168, %169, %cst_44 {dimension_numbers = #tpu.dot_dimension_numbers<[1], [0], [0], [1], [0, 0, 1, 1], [], []>, precision = #tpu.contract_precision<fp32>} : vector<8x32xf32>, vector<32x32xf32>, vector<8x32xf32> -> vector<8x32xf32>
    %c0_45 = arith.constant 0 : index
    %c0_46 = arith.constant 0 : index
    %171 = vector.load %arg7[%c0_45, %c0_46] : memref<1x32xf32, #tpu.memory_space<vmem>>, vector<1x32xf32>
    %172 = vector.broadcast %171 : vector<1x32xf32> to vector<8x32xf32>
    %173 = arith.addf %170, %172 : vector<8x32xf32>
    %cst_47 = arith.constant dense<0xFF800000> : vector<8xf32>
    %174 = vector.multi_reduction <maximumf>, %173, %cst_47 [1] : vector<8x32xf32> to vector<8xf32>
    %175 = vector.shape_cast %174 : vector<8xf32> to vector<8x1xf32>
    %176 = vector.broadcast %175 : vector<8x1xf32> to vector<8x32xf32>
    %177 = arith.subf %173, %176 : vector<8x32xf32>
    %178 = math.exp %177 : vector<8x32xf32>
    %cst_48 = arith.constant dense<0.000000e+00> : vector<8xf32>
    %179 = vector.multi_reduction <add>, %178, %cst_48 [1] : vector<8x32xf32> to vector<8xf32>
    %180 = vector.shape_cast %179 : vector<8xf32> to vector<8x1xf32>
    %181 = math.log %180 : vector<8x1xf32>
    %182 = vector.broadcast %181 : vector<8x1xf32> to vector<8x32xf32>
    %183 = arith.subf %177, %182 : vector<8x32xf32>
    %c0_49 = arith.constant 0 : index
    %c0_50 = arith.constant 0 : index
    %184 = vector.load %arg8[%c0_49, %c0_50] : memref<8x32xf32, #tpu.memory_space<vmem>>, vector<8x32xf32>
    tpu.vector_store %arg8[%c0_49, %c0_50], %183 {strides = array<i32>} : memref<8x32xf32, #tpu.memory_space<vmem>>, vector<8x32xf32>,
    return
  }
}

</mosaic_0001>

<llo_original>
// kernel: lstm_forward.1
$region0: #{lstm_forward.1}
  #allocation0 [shape = 'u32[]', space=smem, size = 0x4, offset = 0x4, fixed_abs, tag = 'smem constant byte address 0x4 - core index']
  #allocation1 [shape = 'u32[144,128]{1,0:T(1,128)}', space=vmem, size = 0x12000, scoped, tag = 'internal scratch']
  #allocation2 [shape = 'f32[8,32]{1,0:T(8,128)}', space=vmem, size = 0x1000, scoped, tag = 'scratch operand']
  %s0 = inlined_call_operand.vmem [shape: s32[8,1], index: 0, kind: input, shape index: {}]
  %s1 = inlined_call_operand.hbm [shape: f32[32,128], index: 1, kind: input, shape index: {}]
  %s2 = inlined_call_operand.vmem [shape: f32[1,32], index: 2, kind: input, shape index: {}]
  %s3 = inlined_call_operand.vmem [shape: f32[1,32], index: 3, kind: input, shape index: {}]
  %s4 = inlined_call_operand.hbm [shape: f32[32,128], index: 4, kind: input, shape index: {}]
  %s5 = inlined_call_operand.vmem [shape: f32[1,128], index: 5, kind: input, shape index: {}]
  %s6 = inlined_call_operand.vmem [shape: f32[32,32], index: 6, kind: input, shape index: {}]
  %s7 = inlined_call_operand.vmem [shape: f32[1,32], index: 7, kind: input, shape index: {}]
  %s8 = inlined_call_operand.hbm [shape: f32[8,32], index: 8, kind: output, shape index: {0}]
  %s9 = inlined_call_operand.hbm [shape: f32[1,32], index: 9, kind: output, shape index: {1}]
  %s10 = inlined_call_operand.hbm [shape: f32[1,32], index: 10, kind: output, shape index: {2}]
  %11 = xla_tuple %s8, %s9, %s10
  %s12 = sld [smem:[#allocation0]]
  $region66: #{lstm_forward.1} parent=0
    _
  %s14 = ssub.s32 1, %s12
  %s15 = scalar_select 0, %s14, %s12
  $region1: #{lstm_forward.1} parent=0
    #allocation3 [shape = 'u8[16384]{0}', space=vmem, size = 0x4000, scoped, tag = 'input window, operand 1, single buffered']
    #allocation4 [shape = 's32[1]{0}', space=sflag, size = 0x4, scoped, tag = 'scoped memory for lstm_forward.1']
    #allocation5 [shape = 's32[1]{0}', space=sflag, size = 0x4, scoped, tag = 'scoped memory for lstm_forward.1']
    #allocation6 [shape = 'u8[16384]{0}', space=vmem, size = 0x4000, scoped, tag = 'input window, operand 4, single buffered']
    #allocation7 [shape = 's32[1]{0}', space=sflag, size = 0x4, scoped, tag = 'scoped memory for lstm_forward.1']
    #allocation8 [shape = 'u8[4096]{0}', space=vmem, size = 0x1000, scoped, tag = 'output window, operand 0, single buffered']
    #allocation9 [shape = 'u8[512]{0}', space=vmem, size = 0x400, scoped, tag = 'output window, operand 1, single buffered']
    #allocation10 [shape = 's32[1]{0}', space=sflag, size = 0x4, scoped, tag = 'scoped memory for lstm_forward.1']
    #allocation11 [shape = 'u8[512]{0}', space=vmem, size = 0x400, scoped, tag = 'output window, operand 2, single buffered']
    %16 = vsyncpa [#allocation4], 0
    %17 = vsyncpa [#allocation7], 0
    %18 = vsyncpa [#allocation5], 0
    %19 = vsyncpa [#allocation10], 0
    // Predicated region
    $region2: #{lstm_forward.1} parent=1 // pred_check
      _
    $region3: #{lstm_forward.1} parent=1 // pred_check_branch
      %21 = sbr.rel (0) target = $region5
    $region4: #{lstm_forward.1} parent=1 // pred_region
      _
    $region5: #{lstm_forward.1} parent=1 // pred_fallthru
      _
    // Predicated region
    $region6: #{lstm_forward.1} parent=1 // pred_check
      _
    $region7: #{lstm_forward.1} parent=1 // pred_check_branch
      %23 = sbr.rel (0) target = $region9
    $region8: #{lstm_forward.1} parent=1 // pred_region
      %s25 = ssub.s32 512, 512
      %26 = vsyncadd [#allocation4], %s25
      %s27 = sshll.u32 [#allocation3], 4
      %s28 = int_to_ptr.vmem [resolvable:$true] %s27
      %33 = dma.hbm_to_vmem [thread:$0]  %s1, 512, %s28, [#allocation4], 128, 128, 8
    $region9: #{lstm_forward.1} parent=1 // pred_fallthru
      _
    // Predicated region
    $region10: #{lstm_forward.1} parent=1 // pred_check
      _
    $region11: #{lstm_forward.1} parent=1 // pred_check_branch
      %35 = sbr.rel (0) target = $region13
    $region12: #{lstm_forward.1} parent=1 // pred_region
      _
    $region13: #{lstm_forward.1} parent=1 // pred_fallthru
      _
    // Predicated region
    $region14: #{lstm_forward.1} parent=1 // pred_check
      _
    $region15: #{lstm_forward.1} parent=1 // pred_check_branch
      %37 = sbr.rel (0) target = $region17
    $region16: #{lstm_forward.1} parent=1 // pred_region
      _
    $region17: #{lstm_forward.1} parent=1 // pred_fallthru
      _
    // Predicated region
    $region18: #{lstm_forward.1} parent=1 // pred_check
      _
    $region19: #{lstm_forward.1} parent=1 // pred_check_branch
      %39 = sbr.rel (0) target = $region21
    $region20: #{lstm_forward.1} parent=1 // pred_region
      %s41 = ssub.s32 512, 512
      %42 = vsyncadd [#allocation7], %s41
      %s43 = sshll.u32 [#allocation6], 4
      %s44 = int_to_ptr.vmem [resolvable:$true] %s43
      %49 = dma.hbm_to_vmem [thread:$0]  %s4, 512, %s44, [#allocation7], 128, 128, 8
    $region21: #{lstm_forward.1} parent=1 // pred_fallthru
      _
    // Predicated region
    $region22: #{lstm_forward.1} parent=1 // pred_check
      _
    $region23: #{lstm_forward.1} parent=1 // pred_check_branch
      %51 = sbr.rel (0) target = $region25
    $region24: #{lstm_forward.1} parent=1 // pred_region
      _
    $region25: #{lstm_forward.1} parent=1 // pred_fallthru
      _
    // Predicated region
    $region26: #{lstm_forward.1} parent=1 // pred_check
      _
    $region27: #{lstm_forward.1} parent=1 // pred_check_branch
      %53 = sbr.rel (0) target = $region29
    $region28: #{lstm_forward.1} parent=1 // pred_region
      _
    $region29: #{lstm_forward.1} parent=1 // pred_fallthru
      _
    // Predicated region
    $region30: #{lstm_forward.1} parent=1 // pred_check
      _
    $region31: #{lstm_forward.1} parent=1 // pred_check_branch
      %55 = sbr.rel (0) target = $region33
    $region32: #{lstm_forward.1} parent=1 // pred_region
      _
    $region33: #{lstm_forward.1} parent=1 // pred_fallthru
      _
    // Predicated region
    $region34: #{lstm_forward.1} parent=1 // pred_check
      _
    $region35: #{lstm_forward.1} parent=1 // pred_check_branch
      %57 = sbr.rel (0) target = $region37
    $region36: #{lstm_forward.1} parent=1 // pred_region
      %58 = dma.done [#allocation4], 512
    $region37: #{lstm_forward.1} parent=1 // pred_fallthru
      _
    // Predicated region
    $region38: #{lstm_forward.1} parent=1 // pred_check
      _
    $region39: #{lstm_forward.1} parent=1 // pred_check_branch
      %60 = sbr.rel (0) target = $region41
    $region40: #{lstm_forward.1} parent=1 // pred_region
      %61 = dma.done [#allocation7], 512
    $region41: #{lstm_forward.1} parent=1 // pred_fallthru
      _
    %v62 = vlaneseq
    %v63 = vand.u32 %v62, 127
    %v64 = vld [vmem:[%s0] sm:$0xff]
    %65 = vset.pattern.permute.xlu0 0
    %66 = vperm.xlu0 %65, %v64
    %v67 = vpop.permute.xlu0 %66
    %vm68 = vcmp.eq.s32.totalorder %v63, %v67
    %v69 = vsel %vm68, 1, 0
    %v70 = vcvt.s32.f32 %v69
    %v71 = vld [vmem:[#allocation3] sm:$0xff]
    %v72 = vld [vmem:[#allocation3 + $0x8] sm:$0xff]
    %v73 = vld [vmem:[#allocation3 + $0x10] sm:$0xff]
    %v74 = vld [vmem:[#allocation3 + $0x18] sm:$0xff]
    %v75 = vld [vmem:[%s5] sm:$0x1]
    %v77 = vlaneseq
    %v78 = vshrl.u32 %v77, 7
    %v79 = vsub.s32 0, %v78
    %v80 = vrot.slane %v75, %v79
    %vm82 = vcmask 261120
    %v84 = vsel %vm82, %v70, 0
    %86 = vmatprep.subr.mxu0 0.0
    %v87 = vand.u32 %v71, 4294901760
    %88 = vmatpush1.msra.mxu0 %v87
    %89 = vmatprep.subr.mxu0 0.0
    %v90 = vand.u32 %v72, 4294901760
    %91 = vmatpush1.msra.mxu0 %v90
    %92 = vmatprep.subr.mxu0 0.0
    %v93 = vand.u32 %v73, 4294901760
    %94 = vmatpush1.msra.mxu0 %v93
    %95 = vmatprep.subr.mxu0 0.0
    %v96 = vand.u32 %v74, 4294901760
    %97 = vmatpush1.msra.mxu0 %v96
    %98 = vmatprep.subr.mxu0 0.0
    %99 = vmatpush1.msra.mxu0 0.0
    %100 = vmatprep.subr.mxu0 0.0
    %101 = vmatpush1.msra.mxu0 0.0
    %102 = vmatprep.subr.mxu0 0.0
    %103 = vmatpush1.msra.mxu0 0.0
    %104 = vmatprep.subr.mxu0 0.0
    %105 = vmatpush1.msra.mxu0 0.0
    %106 = vmatprep.subr.mxu0 0.0
    %107 = vmatpush1.msra.mxu0 0.0
    %108 = vmatprep.subr.mxu0 0.0
    %109 = vmatpush1.msra.mxu0 0.0
    %110 = vmatprep.subr.mxu0 0.0
    %111 = vmatpush1.msra.mxu0 0.0
    %112 = vmatprep.subr.mxu0 0.0
    %113 = vmatpush1.msra.mxu0 0.0
    %114 = vmatprep.subr.mxu0 0.0
    %115 = vmatpush1.msra.mxu0 0.0
    %116 = vmatprep.subr.mxu0 0.0
    %117 = vmatpush1.msra.mxu0 0.0
    %118 = vmatprep.subr.mxu0 0.0
    %119 = vmatpush1.msra.mxu0 0.0
    %120 = vmatprep.subr.mxu0 0.0
    %121 = vmatpush1.msra.mxu0 0.0
    %122 = vmatprep.subr.mxu0 0.0
    %123 = vmatpush1.msra.mxu0 0.0
    %124 = vmatprep.subr.mxu0 0.0
    %125 = vmatpush1.msra.mxu0 0.0
    %126 = vmatprep.subr.mxu0 0.0
    %127 = vmatpush1.msra.mxu0 0.0
    %128 = vmatprep.subr.mxu0 0.0
    %129 = vmatpush1.msra.mxu0 0.0
    %130 = vmatprep.subr.mxu0 0.0
    %131 = vmatpush1.msra.mxu0 0.0
    %132 = vmatprep.subr.mxu0 0.0
    %133 = vmatpush1.msra.mxu0 0.0
    %134 = vmatprep.subr.mxu0 0.0
    %135 = vmatpush1.msra.mxu0 0.0
    %136 = vmatprep.subr.mxu0 0.0
    %137 = vmatpush1.msra.mxu0 0.0
    %138 = vmatprep.subr.mxu0 0.0
    %139 = vmatpush1.msra.mxu0 0.0
    %140 = vmatprep.subr.mxu0 0.0
    %141 = vmatpush1.msra.mxu0 0.0
    %142 = vmatprep.subr.mxu0 0.0
    %143 = vmatpush1.msra.mxu0 0.0
    %144 = vmatprep.subr.mxu0 0.0
    %145 = vmatpush1.msra.mxu0 0.0
    %146 = vmatprep.subr.mxu0 0.0
    %147 = vmatpush1.msra.mxu0 0.0
    %148 = vmatprep.subr.mxu0 0.0
    %149 = vmatpush1.msra.mxu0 0.0
    %150 = vmatprep.subr.mxu0 0.0
    %151 = vmatpush1.msra.mxu0 0.0
    %152 = vmatprep.subr.mxu0 0.0
    %153 = vmatpush1.msra.mxu0 0.0
    %154 = vmatprep.mubr.f32.mxu0 0.0
    %v155 = vand.u32 %v84, 4294901760
    %v156 = vsub.f32 %v84, %v155
    %v157 = vand.u32 %v156, 4294901760
    %v158 = vsub.f32 %v156, %v157
    %v159 = vand.u32 %v158, 4294901760
    %160 = vmatmul.mubr.f32.gmra.mrb[0].mxu0 %v159
    %v161 = vpop.f32.mrb[0].mxu0
    %v162 = vadd.f32 %v80, %v161
    %v163 = vpop.f32.mrb[0].mxu0
    %164 = vdwg.mxu0
    %165 = vmatprep.subr.mxu0 0.0
    %v166 = vand.u32 %v71, 4294901760
    %v167 = vsub.f32 %v71, %v166
    %v168 = vand.u32 %v167, 4294901760
    %v169 = vsub.f32 %v167, %v168
    %v170 = vand.u32 %v169, 4294901760
    %171 = vmatpush1.msra.mxu0 %v170
    %172 = vmatprep.subr.mxu0 0.0
    %v173 = vand.u32 %v72, 4294901760
    %v174 = vsub.f32 %v72, %v173
    %v175 = vand.u32 %v174, 4294901760
    %v176 = vsub.f32 %v174, %v175
    %v177 = vand.u32 %v176, 4294901760
    %178 = vmatpush1.msra.mxu0 %v177
    %179 = vmatprep.subr.mxu0 0.0
    %v180 = vand.u32 %v73, 4294901760
    %v181 = vsub.f32 %v73, %v180
    %v182 = vand.u32 %v181, 4294901760
    %v183 = vsub.f32 %v181, %v182
    %v184 = vand.u32 %v183, 4294901760
    %185 = vmatpush1.msra.mxu0 %v184
    %186 = vmatprep.subr.mxu0 0.0
    %v187 = vand.u32 %v74, 4294901760
    %v188 = vsub.f32 %v74, %v187
    %v189 = vand.u32 %v188, 4294901760
    %v190 = vsub.f32 %v188, %v189
    %v191 = vand.u32 %v190, 4294901760
    %192 = vmatpush1.msra.mxu0 %v191
    %193 = vmatprep.subr.mxu0 0.0
    %194 = vmatpush1.msra.mxu0 0.0
    %195 = vmatprep.subr.mxu0 0.0
    %196 = vmatpush1.msra.mxu0 0.0
    %197 = vmatprep.subr.mxu0 0.0
    %198 = vmatpush1.msra.mxu0 0.0
    %199 = vmatprep.subr.mxu0 0.0
    %200 = vmatpush1.msra.mxu0 0.0
    %201 = vmatprep.subr.mxu0 0.0
    %202 = vmatpush1.msra.mxu0 0.0
    %203 = vmatprep.subr.mxu0 0.0
    %204 = vmatpush1.msra.mxu0 0.0
    %205 = vmatprep.subr.mxu0 0.0
    %206 = vmatpush1.msra.mxu0 0.0
    %207 = vmatprep.subr.mxu0 0.0
    %208 = vmatpush1.msra.mxu0 0.0
    %209 = vmatprep.subr.mxu0 0.0
    %210 = vmatpush1.msra.mxu0 0.0
    %211 = vmatprep.subr.mxu0 0.0
    %212 = vmatpush1.msra.mxu0 0.0
    %213 = vmatprep.subr.mxu0 0.0
    %214 = vmatpush1.msra.mxu0 0.0
    %215 = vmatprep.subr.mxu0 0.0
    %216 = vmatpush1.msra.mxu0 0.0
    %217 = vmatprep.subr.mxu0 0.0
    %218 = vmatpush1.msra.mxu0 0.0
    %219 = vmatprep.subr.mxu0 0.0
    %220 = vmatpush1.msra.mxu0 0.0
    %221 = vmatprep.subr.mxu0 0.0
    %222 = vmatpush1.msra.mxu0 0.0
    %223 = vmatprep.subr.mxu0 0.0
    %224 = vmatpush1.msra.mxu0 0.0
    %225 = vmatprep.subr.mxu0 0.0
    %226 = vmatpush1.msra.mxu0 0.0
    %227 = vmatprep.subr.mxu0 0.0
    %228 = vmatpush1.msra.mxu0 0.0
    %229 = vmatprep.subr.mxu0 0.0
    %230 = vmatpush1.msra.mxu0 0.0
    %231 = vmatprep.subr.mxu0 0.0
    %232 = vmatpush1.msra.mxu0 0.0
    %233 = vmatprep.subr.mxu0 0.0
    %234 = vmatpush1.msra.mxu0 0.0
    %235 = vmatprep.subr.mxu0 0.0
    %236 = vmatpush1.msra.mxu0 0.0
    %237 = vmatprep.subr.mxu0 0.0
    %238 = vmatpush1.msra.mxu0 0.0
    %239 = vmatprep.subr.mxu0 0.0
    %240 = vmatpush1.msra.mxu0 0.0
    %241 = vmatprep.subr.mxu0 0.0
    %242 = vmatpush1.msra.mxu0 0.0
    %243 = vmatprep.subr.mxu0 0.0
    %244 = vmatpush1.msra.mxu0 0.0
    %245 = vmatprep.subr.mxu0 0.0
    %246 = vmatpush1.msra.mxu0 0.0
    %247 = vmatprep.subr.mxu0 0.0
    %248 = vmatpush1.msra.mxu0 0.0
    %249 = vmatprep.mubr.f32.mxu0 0.0
    %v250 = vand.u32 %v84, 4294901760
    %251 = vmatmul.mubr.f32.gmra.mrb[0].mxu0 %v250
    %v252 = vpop.f32.mrb[0].mxu0
    %v253 = vadd.f32 %v162, %v252
    %v254 = vpop.f32.mrb[0].mxu0
    %255 = vdwg.mxu0
    %256 = vmatprep.subr.mxu0 0.0
    %v257 = vand.u32 %v71, 4294901760
    %v258 = vsub.f32 %v71, %v257
    %259 = vmatpush1.msra.mxu0 %v258
    %260 = vmatprep.subr.mxu0 0.0
    %v261 = vand.u32 %v72, 4294901760
    %v262 = vsub.f32 %v72, %v261
    %263 = vmatpush1.msra.mxu0 %v262
    %264 = vmatprep.subr.mxu0 0.0
    %v265 = vand.u32 %v73, 4294901760
    %v266 = vsub.f32 %v73, %v265
    %267 = vmatpush1.msra.mxu0 %v266
    %268 = vmatprep.subr.mxu0 0.0
    %v269 = vand.u32 %v74, 4294901760
    %v270 = vsub.f32 %v74, %v269
    %271 = vmatpush1.msra.mxu0 %v270
    %272 = vmatprep.subr.mxu0 0.0
    %273 = vmatpush1.msra.mxu0 0.0
    %274 = vmatprep.subr.mxu0 0.0
    %275 = vmatpush1.msra.mxu0 0.0
    %276 = vmatprep.subr.mxu0 0.0
    %277 = vmatpush1.msra.mxu0 0.0
    %278 = vmatprep.subr.mxu0 0.0
    %279 = vmatpush1.msra.mxu0 0.0
    %280 = vmatprep.subr.mxu0 0.0
    %281 = vmatpush1.msra.mxu0 0.0
    %282 = vmatprep.subr.mxu0 0.0
    %283 = vmatpush1.msra.mxu0 0.0
    %284 = vmatprep.subr.mxu0 0.0
    %285 = vmatpush1.msra.mxu0 0.0
    %286 = vmatprep.subr.mxu0 0.0
    %287 = vmatpush1.msra.mxu0 0.0
    %288 = vmatprep.subr.mxu0 0.0
    %289 = vmatpush1.msra.mxu0 0.0
    %290 = vmatprep.subr.mxu0 0.0
    %291 = vmatpush1.msra.mxu0 0.0
    %292 = vmatprep.subr.mxu0 0.0
    %293 = vmatpush1.msra.mxu0 0.0
    %294 = vmatprep.subr.mxu0 0.0
    %295 = vmatpush1.msra.mxu0 0.0
    %296 = vmatprep.subr.mxu0 0.0
    %297 = vmatpush1.msra.mxu0 0.0
    %298 = vmatprep.subr.mxu0 0.0
    %299 = vmatpush1.msra.mxu0 0.0
    %300 = vmatprep.subr.mxu0 0.0
    %301 = vmatpush1.msra.mxu0 0.0
    %302 = vmatprep.subr.mxu0 0.0
    %303 = vmatpush1.msra.mxu0 0.0
    %304 = vmatprep.subr.mxu0 0.0
    %305 = vmatpush1.msra.mxu0 0.0
    %306 = vmatprep.subr.mxu0 0.0
    %307 = vmatpush1.msra.mxu0 0.0
    %308 = vmatprep.subr.mxu0 0.0
    %309 = vmatpush1.msra.mxu0 0.0
    %310 = vmatprep.subr.mxu0 0.0
    %311 = vmatpush1.msra.mxu0 0.0
    %312 = vmatprep.subr.mxu0 0.0
    %313 = vmatpush1.msra.mxu0 0.0
    %314 = vmatprep.subr.mxu0 0.0
    %315 = vmatpush1.msra.mxu0 0.0
    %316 = vmatprep.subr.mxu0 0.0
    %317 = vmatpush1.msra.mxu0 0.0
    %318 = vmatprep.subr.mxu0 0.0
    %319 = vmatpush1.msra.mxu0 0.0
    %320 = vmatprep.subr.mxu0 0.0
    %321 = vmatpush1.msra.mxu0 0.0
    %322 = vmatprep.subr.mxu0 0.0
    %323 = vmatpush1.msra.mxu0 0.0
    %324 = vmatprep.subr.mxu0 0.0
    %325 = vmatpush1.msra.mxu0 0.0
    %326 = vmatprep.subr.mxu0 0.0
    %327 = vmatpush1.msra.mxu0 0.0
    %328 = vmatprep.mubr.f32.mxu0 0.0
    %v329 = vand.u32 %v84, 4294901760
    %v330 = vsub.f32 %v84, %v329
    %331 = vmatmul.mubr.f32.gmra.mrb[0].mxu0 %v330
    %v332 = vpop.f32.mrb[0].mxu0
    %v333 = vadd.f32 %v253, %v332
    %v334 = vpop.f32.mrb[0].mxu0
    %335 = vdwg.mxu0
    %336 = vmatprep.subr.mxu0 0.0
    %v337 = vand.u32 %v71, 4294901760
    %338 = vmatpush1.msra.mxu0 %v337
    %339 = vmatprep.subr.mxu0 0.0
    %v340 = vand.u32 %v72, 4294901760
    %341 = vmatpush1.msra.mxu0 %v340
    %342 = vmatprep.subr.mxu0 0.0
    %v343 = vand.u32 %v73, 4294901760
    %344 = vmatpush1.msra.mxu0 %v343
    %345 = vmatprep.subr.mxu0 0.0
    %v346 = vand.u32 %v74, 4294901760
    %347 = vmatpush1.msra.mxu0 %v346
    %348 = vmatprep.subr.mxu0 0.0
    %349 = vmatpush1.msra.mxu0 0.0
    %350 = vmatprep.subr.mxu0 0.0
    %351 = vmatpush1.msra.mxu0 0.0
    %352 = vmatprep.subr.mxu0 0.0
    %353 = vmatpush1.msra.mxu0 0.0
    %354 = vmatprep.subr.mxu0 0.0
    %355 = vmatpush1.msra.mxu0 0.0
    %356 = vmatprep.subr.mxu0 0.0
    %357 = vmatpush1.msra.mxu0 0.0
    %358 = vmatprep.subr.mxu0 0.0
    %359 = vmatpush1.msra.mxu0 0.0
    %360 = vmatprep.subr.mxu0 0.0
    %361 = vmatpush1.msra.mxu0 0.0
    %362 = vmatprep.subr.mxu0 0.0
    %363 = vmatpush1.msra.mxu0 0.0
    %364 = vmatprep.subr.mxu0 0.0
    %365 = vmatpush1.msra.mxu0 0.0
    %366 = vmatprep.subr.mxu0 0.0
    %367 = vmatpush1.msra.mxu0 0.0
    %368 = vmatprep.subr.mxu0 0.0
    %369 = vmatpush1.msra.mxu0 0.0
    %370 = vmatprep.subr.mxu0 0.0
    %371 = vmatpush1.msra.mxu0 0.0
    %372 = vmatprep.subr.mxu0 0.0
    %373 = vmatpush1.msra.mxu0 0.0
    %374 = vmatprep.subr.mxu0 0.0
    %375 = vmatpush1.msra.mxu0 0.0
    %376 = vmatprep.subr.mxu0 0.0
    %377 = vmatpush1.msra.mxu0 0.0
    %378 = vmatprep.subr.mxu0 0.0
    %379 = vmatpush1.msra.mxu0 0.0
    %380 = vmatprep.subr.mxu0 0.0
    %381 = vmatpush1.msra.mxu0 0.0
    %382 = vmatprep.subr.mxu0 0.0
    %383 = vmatpush1.msra.mxu0 0.0
    %384 = vmatprep.subr.mxu0 0.0
    %385 = vmatpush1.msra.mxu0 0.0
    %386 = vmatprep.subr.mxu0 0.0
    %387 = vmatpush1.msra.mxu0 0.0
    %388 = vmatprep.subr.mxu0 0.0
    %389 = vmatpush1.msra.mxu0 0.0
    %390 = vmatprep.subr.mxu0 0.0
    %391 = vmatpush1.msra.mxu0 0.0
    %392 = vmatprep.subr.mxu0 0.0
    %393 = vmatpush1.msra.mxu0 0.0
    %394 = vmatprep.subr.mxu0 0.0
    %395 = vmatpush1.msra.mxu0 0.0
    %396 = vmatprep.subr.mxu0 0.0
    %397 = vmatpush1.msra.mxu0 0.0
    %398 = vmatprep.subr.mxu0 0.0
    %399 = vmatpush1.msra.mxu0 0.0
    %400 = vmatprep.subr.mxu0 0.0
    %401 = vmatpush1.msra.mxu0 0.0
    %402 = vmatprep.subr.mxu0 0.0
    %403 = vmatpush1.msra.mxu0 0.0
    %404 = vmatprep.mubr.f32.mxu0 0.0
    %v405 = vand.u32 %v84, 4294901760
    %v406 = vsub.f32 %v84, %v405
    %v407 = vand.u32 %v406, 4294901760
    %408 = vmatmul.mubr.f32.gmra.mrb[0].mxu0 %v407
    %v409 = vpop.f32.mrb[0].mxu0
    %v410 = vadd.f32 %v333, %v409
    %v411 = vpop.f32.mrb[0].mxu0
    %412 = vdwg.mxu0
    %413 = vmatprep.subr.mxu0 0.0
    %v414 = vand.u32 %v71, 4294901760
    %v415 = vsub.f32 %v71, %v414
    %v416 = vand.u32 %v415, 4294901760
    %417 = vmatpush1.msra.mxu0 %v416
    %418 = vmatprep.subr.mxu0 0.0
    %v419 = vand.u32 %v72, 4294901760
    %v420 = vsub.f32 %v72, %v419
    %v421 = vand.u32 %v420, 4294901760
    %422 = vmatpush1.msra.mxu0 %v421
    %423 = vmatprep.subr.mxu0 0.0
    %v424 = vand.u32 %v73, 4294901760
    %v425 = vsub.f32 %v73, %v424
    %v426 = vand.u32 %v425, 4294901760
    %427 = vmatpush1.msra.mxu0 %v426
    %428 = vmatprep.subr.mxu0 0.0
    %v429 = vand.u32 %v74, 4294901760
    %v430 = vsub.f32 %v74, %v429
    %v431 = vand.u32 %v430, 4294901760
    %432 = vmatpush1.msra.mxu0 %v431
    %433 = vmatprep.subr.mxu0 0.0
    %434 = vmatpush1.msra.mxu0 0.0
    %435 = vmatprep.subr.mxu0 0.0
    %436 = vmatpush1.msra.mxu0 0.0
    %437 = vmatprep.subr.mxu0 0.0
    %438 = vmatpush1.msra.mxu0 0.0
    %439 = vmatprep.subr.mxu0 0.0
    %440 = vmatpush1.msra.mxu0 0.0
    %441 = vmatprep.subr.mxu0 0.0
    %442 = vmatpush1.msra.mxu0 0.0
    %443 = vmatprep.subr.mxu0 0.0
    %444 = vmatpush1.msra.mxu0 0.0
    %445 = vmatprep.subr.mxu0 0.0
    %446 = vmatpush1.msra.mxu0 0.0
    %447 = vmatprep.subr.mxu0 0.0
    %448 = vmatpush1.msra.mxu0 0.0
    %449 = vmatprep.subr.mxu0 0.0
    %450 = vmatpush1.msra.mxu0 0.0
    %451 = vmatprep.subr.mxu0 0.0
    %452 = vmatpush1.msra.mxu0 0.0
    %453 = vmatprep.subr.mxu0 0.0
    %454 = vmatpush1.msra.mxu0 0.0
    %455 = vmatprep.subr.mxu0 0.0
    %456 = vmatpush1.msra.mxu0 0.0
    %457 = vmatprep.subr.mxu0 0.0
    %458 = vmatpush1.msra.mxu0 0.0
    %459 = vmatprep.subr.mxu0 0.0
    %460 = vmatpush1.msra.mxu0 0.0
    %461 = vmatprep.subr.mxu0 0.0
    %462 = vmatpush1.msra.mxu0 0.0
    %463 = vmatprep.subr.mxu0 0.0
    %464 = vmatpush1.msra.mxu0 0.0
    %465 = vmatprep.subr.mxu0 0.0
    %466 = vmatpush1.msra.mxu0 0.0
    %467 = vmatprep.subr.mxu0 0.0
    %468 = vmatpush1.msra.mxu0 0.0
    %469 = vmatprep.subr.mxu0 0.0
    %470 = vmatpush1.msra.mxu0 0.0
    %471 = vmatprep.subr.mxu0 0.0
    %472 = vmatpush1.msra.mxu0 0.0
    %473 = vmatprep.subr.mxu0 0.0
    %474 = vmatpush1.msra.mxu0 0.0
    %475 = vmatprep.subr.mxu0 0.0
    %476 = vmatpush1.msra.mxu0 0.0
    %477 = vmatprep.subr.mxu0 0.0
    %478 = vmatpush1.msra.mxu0 0.0
    %479 = vmatprep.subr.mxu0 0.0
    %480 = vmatpush1.msra.mxu0 0.0
    %481 = vmatprep.subr.mxu0 0.0
    %482 = vmatpush1.msra.mxu0 0.0
    %483 = vmatprep.subr.mxu0 0.0
    %484 = vmatpush1.msra.mxu0 0.0
    %485 = vmatprep.subr.mxu0 0.0
    %486 = vmatpush1.msra.mxu0 0.0
    %487 = vmatprep.subr.mxu0 0.0
    %488 = vmatpush1.msra.mxu0 0.0
    %489 = vmatprep.mubr.f32.mxu0 0.0
    %v490 = vand.u32 %v84, 4294901760
    %491 = vmatmul.mubr.f32.gmra.mrb[0].mxu0 %v490
    %v492 = vpop.f32.mrb[0].mxu0
    %v493 = vadd.f32 %v410, %v492
    %v494 = vpop.f32.mrb[0].mxu0
    %495 = vdwg.mxu0
    %496 = vmatprep.subr.mxu0 0.0
    %v497 = vand.u32 %v71, 4294901760
    %498 = vmatpush1.msra.mxu0 %v497
    %499 = vmatprep.subr.mxu0 0.0
    %v500 = vand.u32 %v72, 4294901760
    %501 = vmatpush1.msra.mxu0 %v500
    %502 = vmatprep.subr.mxu0 0.0
    %v503 = vand.u32 %v73, 4294901760
    %504 = vmatpush1.msra.mxu0 %v503
    %505 = vmatprep.subr.mxu0 0.0
    %v506 = vand.u32 %v74, 4294901760
    %507 = vmatpush1.msra.mxu0 %v506
    %508 = vmatprep.subr.mxu0 0.0
    %509 = vmatpush1.msra.mxu0 0.0
    %510 = vmatprep.subr.mxu0 0.0
    %511 = vmatpush1.msra.mxu0 0.0
    %512 = vmatprep.subr.mxu0 0.0
    %513 = vmatpush1.msra.mxu0 0.0
    %514 = vmatprep.subr.mxu0 0.0
    %515 = vmatpush1.msra.mxu0 0.0
    %516 = vmatprep.subr.mxu0 0.0
    %517 = vmatpush1.msra.mxu0 0.0
    %518 = vmatprep.subr.mxu0 0.0
    %519 = vmatpush1.msra.mxu0 0.0
    %520 = vmatprep.subr.mxu0 0.0
    %521 = vmatpush1.msra.mxu0 0.0
    %522 = vmatprep.subr.mxu0 0.0
    %523 = vmatpush1.msra.mxu0 0.0
    %524 = vmatprep.subr.mxu0 0.0
    %525 = vmatpush1.msra.mxu0 0.0
    %526 = vmatprep.subr.mxu0 0.0
    %527 = vmatpush1.msra.mxu0 0.0
    %528 = vmatprep.subr.mxu0 0.0
    %529 = vmatpush1.msra.mxu0 0.0
    %530 = vmatprep.subr.mxu0 0.0
    %531 = vmatpush1.msra.mxu0 0.0
    %532 = vmatprep.subr.mxu0 0.0
    %533 = vmatpush1.msra.mxu0 0.0
    %534 = vmatprep.subr.mxu0 0.0
    %535 = vmatpush1.msra.mxu0 0.0
    %536 = vmatprep.subr.mxu0 0.0
    %537 = vmatpush1.msra.mxu0 0.0
    %538 = vmatprep.subr.mxu0 0.0
    %539 = vmatpush1.msra.mxu0 0.0
    %540 = vmatprep.subr.mxu0 0.0
    %541 = vmatpush1.msra.mxu0 0.0
    %542 = vmatprep.subr.mxu0 0.0
    %543 = vmatpush1.msra.mxu0 0.0
    %544 = vmatprep.subr.mxu0 0.0
    %545 = vmatpush1.msra.mxu0 0.0
    %546 = vmatprep.subr.mxu0 0.0
    %547 = vmatpush1.msra.mxu0 0.0
    %548 = vmatprep.subr.mxu0 0.0
    %549 = vmatpush1.msra.mxu0 0.0
    %550 = vmatprep.subr.mxu0 0.0
    %551 = vmatpush1.msra.mxu0 0.0
    %552 = vmatprep.subr.mxu0 0.0
    %553 = vmatpush1.msra.mxu0 0.0
    %554 = vmatprep.subr.mxu0 0.0
    %555 = vmatpush1.msra.mxu0 0.0
    %556 = vmatprep.subr.mxu0 0.0
    %557 = vmatpush1.msra.mxu0 0.0
    %558 = vmatprep.subr.mxu0 0.0
    %559 = vmatpush1.msra.mxu0 0.0
    %560 = vmatprep.subr.mxu0 0.0
    %561 = vmatpush1.msra.mxu0 0.0
    %562 = vmatprep.subr.mxu0 0.0
    %563 = vmatpush1.msra.mxu0 0.0
    %564 = vmatprep.mubr.f32.mxu0 0.0
    %v565 = vand.u32 %v84, 4294901760
    %566 = vmatmul.mubr.f32.gmra.mrb[0].mxu0 %v565
    %v567 = vpop.f32.mrb[0].mxu0
    %v568 = vadd.f32 %v493, %v567
    %v569 = vpop.f32.mrb[0].mxu0
    %570 = vdwg.mxu0
    %v571 = vld [vmem:[#allocation6] sm:$0xff]
    %v572 = vld [vmem:[#allocation6 + $0x8] sm:$0xff]
    %v573 = vld [vmem:[#allocation6 + $0x10] sm:$0xff]
    %v574 = vld [vmem:[#allocation6 + $0x18] sm:$0xff]
    %v575 = vld [vmem:[%s2] sm:$0x1]
    %v576 = vld [vmem:[%s3] sm:$0x1]
    %v578 = vsel %vm82, %v575, 0
    %580 = vmatprep.subr.mxu0 0.0
    %v581 = vand.u32 %v571, 4294901760
    %582 = vmatpush1.msra.mxu0 %v581
    %583 = vmatprep.subr.mxu0 0.0
    %v584 = vand.u32 %v572, 4294901760
    %585 = vmatpush1.msra.mxu0 %v584
    %586 = vmatprep.subr.mxu0 0.0
    %v587 = vand.u32 %v573, 4294901760
    %588 = vmatpush1.msra.mxu0 %v587
    %589 = vmatprep.subr.mxu0 0.0
    %v590 = vand.u32 %v574, 4294901760
    %591 = vmatpush1.msra.mxu0 %v590
    %592 = vmatprep.subr.mxu0 0.0
    %593 = vmatpush1.msra.mxu0 0.0
    %594 = vmatprep.subr.mxu0 0.0
    %595 = vmatpush1.msra.mxu0 0.0
    %596 = vmatprep.subr.mxu0 0.0
    %597 = vmatpush1.msra.mxu0 0.0
    %598 = vmatprep.subr.mxu0 0.0
    %599 = vmatpush1.msra.mxu0 0.0
    %600 = vmatprep.subr.mxu0 0.0
    %601 = vmatpush1.msra.mxu0 0.0
    %602 = vmatprep.subr.mxu0 0.0
    %603 = vmatpush1.msra.mxu0 0.0
    %604 = vmatprep.subr.mxu0 0.0
    %605 = vmatpush1.msra.mxu0 0.0
    %606 = vmatprep.subr.mxu0 0.0
    %607 = vmatpush1.msra.mxu0 0.0
    %608 = vmatprep.subr.mxu0 0.0
    %609 = vmatpush1.msra.mxu0 0.0
    %610 = vmatprep.subr.mxu0 0.0
    %611 = vmatpush1.msra.mxu0 0.0
    %612 = vmatprep.subr.mxu0 0.0
    %613 = vmatpush1.msra.mxu0 0.0
    %614 = vmatprep.subr.mxu0 0.0
    %615 = vmatpush1.msra.mxu0 0.0
    %616 = vmatprep.subr.mxu0 0.0
    %617 = vmatpush1.msra.mxu0 0.0
    %618 = vmatprep.subr.mxu0 0.0
    %619 = vmatpush1.msra.mxu0 0.0
    %620 = vmatprep.subr.mxu0 0.0
    %621 = vmatpush1.msra.mxu0 0.0
    %622 = vmatprep.subr.mxu0 0.0
    %623 = vmatpush1.msra.mxu0 0.0
    %624 = vmatprep.subr.mxu0 0.0
    %625 = vmatpush1.msra.mxu0 0.0
    %626 = vmatprep.subr.mxu0 0.0
    %627 = vmatpush1.msra.mxu0 0.0
    %628 = vmatprep.subr.mxu0 0.0
    %629 = vmatpush1.msra.mxu0 0.0
    %630 = vmatprep.subr.mxu0 0.0
    %631 = vmatpush1.msra.mxu0 0.0
    %632 = vmatprep.subr.mxu0 0.0
    %633 = vmatpush1.msra.mxu0 0.0
    %634 = vmatprep.subr.mxu0 0.0
    %635 = vmatpush1.msra.mxu0 0.0
    %636 = vmatprep.subr.mxu0 0.0
    %637 = vmatpush1.msra.mxu0 0.0
    %638 = vmatprep.subr.mxu0 0.0
    %639 = vmatpush1.msra.mxu0 0.0
    %640 = vmatprep.subr.mxu0 0.0
    %641 = vmatpush1.msra.mxu0 0.0
    %642 = vmatprep.subr.mxu0 0.0
    %643 = vmatpush1.msra.mxu0 0.0
    %644 = vmatprep.subr.mxu0 0.0
    %645 = vmatpush1.msra.mxu0 0.0
    %646 = vmatprep.subr.mxu0 0.0
    %647 = vmatpush1.msra.mxu0 0.0
    %648 = vmatprep.mubr.f32.mxu0 0.0
    %v649 = vand.u32 %v578, 4294901760
    %v650 = vsub.f32 %v578, %v649
    %v651 = vand.u32 %v650, 4294901760
    %v652 = vsub.f32 %v650, %v651
    %v653 = vand.u32 %v652, 4294901760
    %654 = vmatmul.mubr.f32.gmra.mrb[0].mxu0 %v653
    %v655 = vpop.f32.mrb[0].mxu0
    %v656 = vadd.f32 0.0, %v655
    %v657 = vpop.f32.mrb[0].mxu0
    %658 = vdwg.mxu0
    %659 = vmatprep.subr.mxu0 0.0
    %v660 = vand.u32 %v571, 4294901760
    %v661 = vsub.f32 %v571, %v660
    %v662 = vand.u32 %v661, 4294901760
    %v663 = vsub.f32 %v661, %v662
    %v664 = vand.u32 %v663, 4294901760
    %665 = vmatpush1.msra.mxu0 %v664
    %666 = vmatprep.subr.mxu0 0.0
    %v667 = vand.u32 %v572, 4294901760
    %v668 = vsub.f32 %v572, %v667
    %v669 = vand.u32 %v668, 4294901760
    %v670 = vsub.f32 %v668, %v669
    %v671 = vand.u32 %v670, 4294901760
    %672 = vmatpush1.msra.mxu0 %v671
    %673 = vmatprep.subr.mxu0 0.0
    %v674 = vand.u32 %v573, 4294901760
    %v675 = vsub.f32 %v573, %v674
    %v676 = vand.u32 %v675, 4294901760
    %v677 = vsub.f32 %v675, %v676
    %v678 = vand.u32 %v677, 4294901760
    %679 = vmatpush1.msra.mxu0 %v678
    %680 = vmatprep.subr.mxu0 0.0
    %v681 = vand.u32 %v574, 4294901760
    %v682 = vsub.f32 %v574, %v681
    %v683 = vand.u32 %v682, 4294901760
    %v684 = vsub.f32 %v682, %v683
    %v685 = vand.u32 %v684, 4294901760
    %686 = vmatpush1.msra.mxu0 %v685
    %687 = vmatprep.subr.mxu0 0.0
    %688 = vmatpush1.msra.mxu0 0.0
    %689 = vmatprep.subr.mxu0 0.0
    %690 = vmatpush1.msra.mxu0 0.0
    %691 = vmatprep.subr.mxu0 0.0
    %692 = vmatpush1.msra.mxu0 0.0
    %693 = vmatprep.subr.mxu0 0.0
    %694 = vmatpush1.msra.mxu0 0.0
    %695 = vmatprep.subr.mxu0 0.0
    %696 = vmatpush1.msra.mxu0 0.0
    %697 = vmatprep.subr.mxu0 0.0
    %698 = vmatpush1.msra.mxu0 0.0
    %699 = vmatprep.subr.mxu0 0.0
    %700 = vmatpush1.msra.mxu0 0.0
    %701 = vmatprep.subr.mxu0 0.0
    %702 = vmatpush1.msra.mxu0 0.0
    %703 = vmatprep.subr.mxu0 0.0
    %704 = vmatpush1.msra.mxu0 0.0
    %705 = vmatprep.subr.mxu0 0.0
    %706 = vmatpush1.msra.mxu0 0.0
    %707 = vmatprep.subr.mxu0 0.0
    %708 = vmatpush1.msra.mxu0 0.0
    %709 = vmatprep.subr.mxu0 0.0
    %710 = vmatpush1.msra.mxu0 0.0
    %711 = vmatprep.subr.mxu0 0.0
    %712 = vmatpush1.msra.mxu0 0.0
    %713 = vmatprep.subr.mxu0 0.0
    %714 = vmatpush1.msra.mxu0 0.0
    %715 = vmatprep.subr.mxu0 0.0
    %716 = vmatpush1.msra.mxu0 0.0
    %717 = vmatprep.subr.mxu0 0.0
    %718 = vmatpush1.msra.mxu0 0.0
    %719 = vmatprep.subr.mxu0 0.0
    %720 = vmatpush1.msra.mxu0 0.0
    %721 = vmatprep.subr.mxu0 0.0
    %722 = vmatpush1.msra.mxu0 0.0
    %723 = vmatprep.subr.mxu0 0.0
    %724 = vmatpush1.msra.mxu0 0.0
    %725 = vmatprep.subr.mxu0 0.0
    %726 = vmatpush1.msra.mxu0 0.0
    %727 = vmatprep.subr.mxu0 0.0
    %728 = vmatpush1.msra.mxu0 0.0
    %729 = vmatprep.subr.mxu0 0.0
    %730 = vmatpush1.msra.mxu0 0.0
    %731 = vmatprep.subr.mxu0 0.0
    %732 = vmatpush1.msra.mxu0 0.0
    %733 = vmatprep.subr.mxu0 0.0
    %734 = vmatpush1.msra.mxu0 0.0
    %735 = vmatprep.subr.mxu0 0.0
    %736 = vmatpush1.msra.mxu0 0.0
    %737 = vmatprep.subr.mxu0 0.0
    %738 = vmatpush1.msra.mxu0 0.0
    %739 = vmatprep.subr.mxu0 0.0
    %740 = vmatpush1.msra.mxu0 0.0
    %741 = vmatprep.subr.mxu0 0.0
    %742 = vmatpush1.msra.mxu0 0.0
    %743 = vmatprep.mubr.f32.mxu0 0.0
    %v744 = vand.u32 %v578, 4294901760
    %745 = vmatmul.mubr.f32.gmra.mrb[0].mxu0 %v744
    %v746 = vpop.f32.mrb[0].mxu0
    %v747 = vadd.f32 %v656, %v746
    %v748 = vpop.f32.mrb[0].mxu0
    %749 = vdwg.mxu0
    %750 = vmatprep.subr.mxu0 0.0
    %v751 = vand.u32 %v571, 4294901760
    %v752 = vsub.f32 %v571, %v751
    %753 = vmatpush1.msra.mxu0 %v752
    %754 = vmatprep.subr.mxu0 0.0
    %v755 = vand.u32 %v572, 4294901760
    %v756 = vsub.f32 %v572, %v755
    %757 = vmatpush1.msra.mxu0 %v756
    %758 = vmatprep.subr.mxu0 0.0
    %v759 = vand.u32 %v573, 4294901760
    %v760 = vsub.f32 %v573, %v759
    %761 = vmatpush1.msra.mxu0 %v760
    %762 = vmatprep.subr.mxu0 0.0
    %v763 = vand.u32 %v574, 4294901760
    %v764 = vsub.f32 %v574, %v763
    %765 = vmatpush1.msra.mxu0 %v764
    %766 = vmatprep.subr.mxu0 0.0
    %767 = vmatpush1.msra.mxu0 0.0
    %768 = vmatprep.subr.mxu0 0.0
    %769 = vmatpush1.msra.mxu0 0.0
    %770 = vmatprep.subr.mxu0 0.0
    %771 = vmatpush1.msra.mxu0 0.0
    %772 = vmatprep.subr.mxu0 0.0
    %773 = vmatpush1.msra.mxu0 0.0
    %774 = vmatprep.subr.mxu0 0.0
    %775 = vmatpush1.msra.mxu0 0.0
    %776 = vmatprep.subr.mxu0 0.0
    %777 = vmatpush1.msra.mxu0 0.0
    %778 = vmatprep.subr.mxu0 0.0
    %779 = vmatpush1.msra.mxu0 0.0
    %780 = vmatprep.subr.mxu0 0.0
    %781 = vmatpush1.msra.mxu0 0.0
    %782 = vmatprep.subr.mxu0 0.0
    %783 = vmatpush1.msra.mxu0 0.0
    %784 = vmatprep.subr.mxu0 0.0
    %785 = vmatpush1.msra.mxu0 0.0
    %786 = vmatprep.subr.mxu0 0.0
    %787 = vmatpush1.msra.mxu0 0.0
    %788 = vmatprep.subr.mxu0 0.0
    %789 = vmatpush1.msra.mxu0 0.0
    %790 = vmatprep.subr.mxu0 0.0
    %791 = vmatpush1.msra.mxu0 0.0
    %792 = vmatprep.subr.mxu0 0.0
    %793 = vmatpush1.msra.mxu0 0.0
    %794 = vmatprep.subr.mxu0 0.0
    %795 = vmatpush1.msra.mxu0 0.0
    %796 = vmatprep.subr.mxu0 0.0
    %797 = vmatpush1.msra.mxu0 0.0
    %798 = vmatprep.subr.mxu0 0.0
    %799 = vmatpush1.msra.mxu0 0.0
    %800 = vmatprep.subr.mxu0 0.0
    %801 = vmatpush1.msra.mxu0 0.0
    %802 = vmatprep.subr.mxu0 0.0
    %803 = vmatpush1.msra.mxu0 0.0
    %804 = vmatprep.subr.mxu0 0.0
    %805 = vmatpush1.msra.mxu0 0.0
    %806 = vmatprep.subr.mxu0 0.0
    %807 = vmatpush1.msra.mxu0 0.0
    %808 = vmatprep.subr.mxu0 0.0
    %809 = vmatpush1.msra.mxu0 0.0
    %810 = vmatprep.subr.mxu0 0.0
    %811 = vmatpush1.msra.mxu0 0.0
    %812 = vmatprep.subr.mxu0 0.0
    %813 = vmatpush1.msra.mxu0 0.0
    %814 = vmatprep.subr.mxu0 0.0
    %815 = vmatpush1.msra.mxu0 0.0
    %816 = vmatprep.subr.mxu0 0.0
    %817 = vmatpush1.msra.mxu0 0.0
    %818 = vmatprep.subr.mxu0 0.0
    %819 = vmatpush1.msra.mxu0 0.0
    %820 = vmatprep.subr.mxu0 0.0
    %821 = vmatpush1.msra.mxu0 0.0
    %822 = vmatprep.mubr.f32.mxu0 0.0
    %v823 = vand.u32 %v578, 4294901760
    %v824 = vsub.f32 %v578, %v823
    %825 = vmatmul.mubr.f32.gmra.mrb[0].mxu0 %v824
    %v826 = vpop.f32.mrb[0].mxu0
    %v827 = vadd.f32 %v747, %v826
    %v828 = vpop.f32.mrb[0].mxu0
    %829 = vdwg.mxu0
    %830 = vmatprep.subr.mxu0 0.0
    %v831 = vand.u32 %v571, 4294901760
    %832 = vmatpush1.msra.mxu0 %v831
    %833 = vmatprep.subr.mxu0 0.0
    %v834 = vand.u32 %v572, 4294901760
    %835 = vmatpush1.msra.mxu0 %v834
    %836 = vmatprep.subr.mxu0 0.0
    %v837 = vand.u32 %v573, 4294901760
    %838 = vmatpush1.msra.mxu0 %v837
    %839 = vmatprep.subr.mxu0 0.0
    %v840 = vand.u32 %v574, 4294901760
    %841 = vmatpush1.msra.mxu0 %v840
    %842 = vmatprep.subr.mxu0 0.0
    %843 = vmatpush1.msra.mxu0 0.0
    %844 = vmatprep.subr.mxu0 0.0
    %845 = vmatpush1.msra.mxu0 0.0
    %846 = vmatprep.subr.mxu0 0.0
    %847 = vmatpush1.msra.mxu0 0.0
    %848 = vmatprep.subr.mxu0 0.0
    %849 = vmatpush1.msra.mxu0 0.0
    %850 = vmatprep.subr.mxu0 0.0
    %851 = vmatpush1.msra.mxu0 0.0
    %852 = vmatprep.subr.mxu0 0.0
    %853 = vmatpush1.msra.mxu0 0.0
    %854 = vmatprep.subr.mxu0 0.0
    %855 = vmatpush1.msra.mxu0 0.0
    %856 = vmatprep.subr.mxu0 0.0
    %857 = vmatpush1.msra.mxu0 0.0
    %858 = vmatprep.subr.mxu0 0.0
    %859 = vmatpush1.msra.mxu0 0.0
    %860 = vmatprep.subr.mxu0 0.0
    %861 = vmatpush1.msra.mxu0 0.0
    %862 = vmatprep.subr.mxu0 0.0
    %863 = vmatpush1.msra.mxu0 0.0
    %864 = vmatprep.subr.mxu0 0.0
    %865 = vmatpush1.msra.mxu0 0.0
    %866 = vmatprep.subr.mxu0 0.0
    %867 = vmatpush1.msra.mxu0 0.0
    %868 = vmatprep.subr.mxu0 0.0
    %869 = vmatpush1.msra.mxu0 0.0
    %870 = vmatprep.subr.mxu0 0.0
    %871 = vmatpush1.msra.mxu0 0.0
    %872 = vmatprep.subr.mxu0 0.0
    %873 = vmatpush1.msra.mxu0 0.0
    %874 = vmatprep.subr.mxu0 0.0
    %875 = vmatpush1.msra.mxu0 0.0
    %876 = vmatprep.subr.mxu0 0.0
    %877 = vmatpush1.msra.mxu0 0.0
    %878 = vmatprep.subr.mxu0 0.0
    %879 = vmatpush1.msra.mxu0 0.0
    %880 = vmatprep.subr.mxu0 0.0
    %881 = vmatpush1.msra.mxu0 0.0
    %882 = vmatprep.subr.mxu0 0.0
    %883 = vmatpush1.msra.mxu0 0.0
    %884 = vmatprep.subr.mxu0 0.0
    %885 = vmatpush1.msra.mxu0 0.0
    %886 = vmatprep.subr.mxu0 0.0
    %887 = vmatpush1.msra.mxu0 0.0
    %888 = vmatprep.subr.mxu0 0.0
    %889 = vmatpush1.msra.mxu0 0.0
    %890 = vmatprep.subr.mxu0 0.0
    %891 = vmatpush1.msra.mxu0 0.0
    %892 = vmatprep.subr.mxu0 0.0
    %893 = vmatpush1.msra.mxu0 0.0
    %894 = vmatprep.subr.mxu0 0.0
    %895 = vmatpush1.msra.mxu0 0.0
    %896 = vmatprep.subr.mxu0 0.0
    %897 = vmatpush1.msra.mxu0 0.0
    %898 = vmatprep.mubr.f32.mxu0 0.0
    %v899 = vand.u32 %v578, 4294901760
    %v900 = vsub.f32 %v578, %v899
    %v901 = vand.u32 %v900, 4294901760
    %902 = vmatmul.mubr.f32.gmra.mrb[0].mxu0 %v901
    %v903 = vpop.f32.mrb[0].mxu0
    %v904 = vadd.f32 %v827, %v903
    %v905 = vpop.f32.mrb[0].mxu0
    %906 = vdwg.mxu0
    %907 = vmatprep.subr.mxu0 0.0
    %v908 = vand.u32 %v571, 4294901760
    %v909 = vsub.f32 %v571, %v908
    %v910 = vand.u32 %v909, 4294901760
    %911 = vmatpush1.msra.mxu0 %v910
    %912 = vmatprep.subr.mxu0 0.0
    %v913 = vand.u32 %v572, 4294901760
    %v914 = vsub.f32 %v572, %v913
    %v915 = vand.u32 %v914, 4294901760
    %916 = vmatpush1.msra.mxu0 %v915
    %917 = vmatprep.subr.mxu0 0.0
    %v918 = vand.u32 %v573, 4294901760
    %v919 = vsub.f32 %v573, %v918
    %v920 = vand.u32 %v919, 4294901760
    %921 = vmatpush1.msra.mxu0 %v920
    %922 = vmatprep.subr.mxu0 0.0
    %v923 = vand.u32 %v574, 4294901760
    %v924 = vsub.f32 %v574, %v923
    %v925 = vand.u32 %v924, 4294901760
    %926 = vmatpush1.msra.mxu0 %v925
    %927 = vmatprep.subr.mxu0 0.0
    %928 = vmatpush1.msra.mxu0 0.0
    %929 = vmatprep.subr.mxu0 0.0
    %930 = vmatpush1.msra.mxu0 0.0
    %931 = vmatprep.subr.mxu0 0.0
    %932 = vmatpush1.msra.mxu0 0.0
    %933 = vmatprep.subr.mxu0 0.0
    %934 = vmatpush1.msra.mxu0 0.0
    %935 = vmatprep.subr.mxu0 0.0
    %936 = vmatpush1.msra.mxu0 0.0
    %937 = vmatprep.subr.mxu0 0.0
    %938 = vmatpush1.msra.mxu0 0.0
    %939 = vmatprep.subr.mxu0 0.0
    %940 = vmatpush1.msra.mxu0 0.0
    %941 = vmatprep.subr.mxu0 0.0
    %942 = vmatpush1.msra.mxu0 0.0
    %943 = vmatprep.subr.mxu0 0.0
    %944 = vmatpush1.msra.mxu0 0.0
    %945 = vmatprep.subr.mxu0 0.0
    %946 = vmatpush1.msra.mxu0 0.0
    %947 = vmatprep.subr.mxu0 0.0
    %948 = vmatpush1.msra.mxu0 0.0
    %949 = vmatprep.subr.mxu0 0.0
    %950 = vmatpush1.msra.mxu0 0.0
    %951 = vmatprep.subr.mxu0 0.0
    %952 = vmatpush1.msra.mxu0 0.0
    %953 = vmatprep.subr.mxu0 0.0
    %954 = vmatpush1.msra.mxu0 0.0
    %955 = vmatprep.subr.mxu0 0.0
    %956 = vmatpush1.msra.mxu0 0.0
    %957 = vmatprep.subr.mxu0 0.0
    %958 = vmatpush1.msra.mxu0 0.0
    %959 = vmatprep.subr.mxu0 0.0
    %960 = vmatpush1.msra.mxu0 0.0
    %961 = vmatprep.subr.mxu0 0.0
    %962 = vmatpush1.msra.mxu0 0.0
    %963 = vmatprep.subr.mxu0 0.0
    %964 = vmatpush1.msra.mxu0 0.0
    %965 = vmatprep.subr.mxu0 0.0
    %966 = vmatpush1.msra.mxu0 0.0
    %967 = vmatprep.subr.mxu0 0.0
    %968 = vmatpush1.msra.mxu0 0.0
    %969 = vmatprep.subr.mxu0 0.0
    %970 = vmatpush1.msra.mxu0 0.0
    %971 = vmatprep.subr.mxu0 0.0
    %972 = vmatpush1.msra.mxu0 0.0
    %973 = vmatprep.subr.mxu0 0.0
    %974 = vmatpush1.msra.mxu0 0.0
    %975 = vmatprep.subr.mxu0 0.0
    %976 = vmatpush1.msra.mxu0 0.0
    %977 = vmatprep.subr.mxu0 0.0
    %978 = vmatpush1.msra.mxu0 0.0
    %979 = vmatprep.subr.mxu0 0.0
    %980 = vmatpush1.msra.mxu0 0.0
    %981 = vmatprep.subr.mxu0 0.0
    %982 = vmatpush1.msra.mxu0 0.0
    %983 = vmatprep.mubr.f32.mxu0 0.0
    %v984 = vand.u32 %v578, 4294901760
    %985 = vmatmul.mubr.f32.gmra.mrb[0].mxu0 %v984
    %v986 = vpop.f32.mrb[0].mxu0
    %v987 = vadd.f32 %v904, %v986
    %v988 = vpop.f32.mrb[0].mxu0
    %989 = vdwg.mxu0
    %990 = vmatprep.subr.mxu0 0.0
    %v991 = vand.u32 %v571, 4294901760
    %992 = vmatpush1.msra.mxu0 %v991
    %993 = vmatprep.subr.mxu0 0.0
    %v994 = vand.u32 %v572, 4294901760
    %995 = vmatpush1.msra.mxu0 %v994
    %996 = vmatprep.subr.mxu0 0.0
    %v997 = vand.u32 %v573, 4294901760
    %998 = vmatpush1.msra.mxu0 %v997
    %999 = vmatprep.subr.mxu0 0.0
    %v1000 = vand.u32 %v574, 4294901760
    %1001 = vmatpush1.msra.mxu0 %v1000
    %1002 = vmatprep.subr.mxu0 0.0
    %1003 = vmatpush1.msra.mxu0 0.0
    %1004 = vmatprep.subr.mxu0 0.0
    %1005 = vmatpush1.msra.mxu0 0.0
    %1006 = vmatprep.subr.mxu0 0.0
    %1007 = vmatpush1.msra.mxu0 0.0
    %1008 = vmatprep.subr.mxu0 0.0
    %1009 = vmatpush1.msra.mxu0 0.0
    %1010 = vmatprep.subr.mxu0 0.0
    %1011 = vmatpush1.msra.mxu0 0.0
    %1012 = vmatprep.subr.mxu0 0.0
    %1013 = vmatpush1.msra.mxu0 0.0
    %1014 = vmatprep.subr.mxu0 0.0
    %1015 = vmatpush1.msra.mxu0 0.0
    %1016 = vmatprep.subr.mxu0 0.0
    %1017 = vmatpush1.msra.mxu0 0.0
    %1018 = vmatprep.subr.mxu0 0.0
    %1019 = vmatpush1.msra.mxu0 0.0
    %1020 = vmatprep.subr.mxu0 0.0
    %1021 = vmatpush1.msra.mxu0 0.0
    %1022 = vmatprep.subr.mxu0 0.0
    %1023 = vmatpush1.msra.mxu0 0.0
    %1024 = vmatprep.subr.mxu0 0.0
    %1025 = vmatpush1.msra.mxu0 0.0
    %1026 = vmatprep.subr.mxu0 0.0
    %1027 = vmatpush1.msra.mxu0 0.0
    %1028 = vmatprep.subr.mxu0 0.0
    %1029 = vmatpush1.msra.mxu0 0.0
    %1030 = vmatprep.subr.mxu0 0.0
    %1031 = vmatpush1.msra.mxu0 0.0
    %1032 = vmatprep.subr.mxu0 0.0
    %1033 = vmatpush1.msra.mxu0 0.0
    %1034 = vmatprep.subr.mxu0 0.0
    %1035 = vmatpush1.msra.mxu0 0.0
    %1036 = vmatprep.subr.mxu0 0.0
    %1037 = vmatpush1.msra.mxu0 0.0
    %1038 = vmatprep.subr.mxu0 0.0
    %1039 = vmatpush1.msra.mxu0 0.0
    %1040 = vmatprep.subr.mxu0 0.0
    %1041 = vmatpush1.msra.mxu0 0.0
    %1042 = vmatprep.subr.mxu0 0.0
    %1043 = vmatpush1.msra.mxu0 0.0
    %1044 = vmatprep.subr.mxu0 0.0
    %1045 = vmatpush1.msra.mxu0 0.0
    %1046 = vmatprep.subr.mxu0 0.0
    %1047 = vmatpush1.msra.mxu0 0.0
    %1048 = vmatprep.subr.mxu0 0.0
    %1049 = vmatpush1.msra.mxu0 0.0
    %1050 = vmatprep.subr.mxu0 0.0
    %1051 = vmatpush1.msra.mxu0 0.0
    %1052 = vmatprep.subr.mxu0 0.0
    %1053 = vmatpush1.msra.mxu0 0.0
    %1054 = vmatprep.subr.mxu0 0.0
    %1055 = vmatpush1.msra.mxu0 0.0
    %1056 = vmatprep.subr.mxu0 0.0
    %1057 = vmatpush1.msra.mxu0 0.0
    %1058 = vmatprep.mubr.f32.mxu0 0.0
    %v1059 = vand.u32 %v578, 4294901760
    %1060 = vmatmul.mubr.f32.gmra.mrb[0].mxu0 %v1059
    %v1061 = vpop.f32.mrb[0].mxu0
    %v1062 = vadd.f32 %v987, %v1061
    %v1063 = vpop.f32.mrb[0].mxu0
    %1064 = vdwg.mxu0
    %v1065 = vadd.f32 %v568, %v1062
    %v1066 = vxor.u32 %v1065, 2147483648
    %v1067 = vmul.f32 %v1066, 1.442695
    %v1068 = vpow.pop %v1067
    %v1069 = vadd.f32 %v1068, 1.0
    %v1070 = vrcp.pop %v1069
    %v1071 = vmul.f32 1.0, %v1070
    %v1072 = vtanh.pop %v1065
    %v1074 = vlaneseq
    %v1075 = vshrl.u32 %v1074, 7
    %v1076 = vsub.s32 0, %v1075
    %v1077 = vrot.slane %v576, %v1076
    %1078 = vrot.lane.b32.xlu0 %v1077, 32
    %v1079 = vpop.permute.xlu0 %1078
    %v1081 = vmul.f32 %v1071, %v1079
    %1083 = vrot.lane.b32.xlu0 %v1072, 64
    %v1084 = vpop.permute.xlu0 %1083
    %v1086 = vmul.f32 %v1071, %v1084
    %1088 = vrot.lane.b32.xlu0 %v1086, 32
    %v1089 = vpop.permute.xlu0 %1088
    %v1091 = vadd.f32 %v1081, %v1089
    %v1092 = vtanh.pop %v1091
    %1094 = vrot.lane.b32.xlu0 %v1092, 64
    %v1095 = vpop.permute.xlu0 %1094
    %v1097 = vmul.f32 %v1071, %v1095
    %1099 = vrot.lane.b32.xlu0 %v1097, 32
    %v1100 = vpop.permute.xlu0 %1099
    %vm1102 = vcmask 253952
    %1103 = vst.msk [vmem:[#allocation2] sm:$0x1] %vm1102, %v1100
    %v1104 = vsel %vm82, %v1100, 0
    %1106 = vmatprep.subr.mxu0 0.0
    %v1107 = vand.u32 %v571, 4294901760
    %1108 = vmatpush1.msra.mxu0 %v1107
    %1109 = vmatprep.subr.mxu0 0.0
    %v1110 = vand.u32 %v572, 4294901760
    %1111 = vmatpush1.msra.mxu0 %v1110
    %1112 = vmatprep.subr.mxu0 0.0
    %v1113 = vand.u32 %v573, 4294901760
    %1114 = vmatpush1.msra.mxu0 %v1113
    %1115 = vmatprep.subr.mxu0 0.0
    %v1116 = vand.u32 %v574, 4294901760
    %1117 = vmatpush1.msra.mxu0 %v1116
    %1118 = vmatprep.subr.mxu0 0.0
    %1119 = vmatpush1.msra.mxu0 0.0
    %1120 = vmatprep.subr.mxu0 0.0
    %1121 = vmatpush1.msra.mxu0 0.0
    %1122 = vmatprep.subr.mxu0 0.0
    %1123 = vmatpush1.msra.mxu0 0.0
    %1124 = vmatprep.subr.mxu0 0.0
    %1125 = vmatpush1.msra.mxu0 0.0
    %1126 = vmatprep.subr.mxu0 0.0
    %1127 = vmatpush1.msra.mxu0 0.0
    %1128 = vmatprep.subr.mxu0 0.0
    %1129 = vmatpush1.msra.mxu0 0.0
    %1130 = vmatprep.subr.mxu0 0.0
    %1131 = vmatpush1.msra.mxu0 0.0
    %1132 = vmatprep.subr.mxu0 0.0
    %1133 = vmatpush1.msra.mxu0 0.0
    %1134 = vmatprep.subr.mxu0 0.0
    %1135 = vmatpush1.msra.mxu0 0.0
    %1136 = vmatprep.subr.mxu0 0.0
    %1137 = vmatpush1.msra.mxu0 0.0
    %1138 = vmatprep.subr.mxu0 0.0
    %1139 = vmatpush1.msra.mxu0 0.0
    %1140 = vmatprep.subr.mxu0 0.0
    %1141 = vmatpush1.msra.mxu0 0.0
    %1142 = vmatprep.subr.mxu0 0.0
    %1143 = vmatpush1.msra.mxu0 0.0
    %1144 = vmatprep.subr.mxu0 0.0
    %1145 = vmatpush1.msra.mxu0 0.0
    %1146 = vmatprep.subr.mxu0 0.0
    %1147 = vmatpush1.msra.mxu0 0.0
    %1148 = vmatprep.subr.mxu0 0.0
    %1149 = vmatpush1.msra.mxu0 0.0
    %1150 = vmatprep.subr.mxu0 0.0
    %1151 = vmatpush1.msra.mxu0 0.0
    %1152 = vmatprep.subr.mxu0 0.0
    %1153 = vmatpush1.msra.mxu0 0.0
    %1154 = vmatprep.subr.mxu0 0.0
    %1155 = vmatpush1.msra.mxu0 0.0
    %1156 = vmatprep.subr.mxu0 0.0
    %1157 = vmatpush1.msra.mxu0 0.0
    %1158 = vmatprep.subr.mxu0 0.0
    %1159 = vmatpush1.msra.mxu0 0.0
    %1160 = vmatprep.subr.mxu0 0.0
    %1161 = vmatpush1.msra.mxu0 0.0
    %1162 = vmatprep.subr.mxu0 0.0
    %1163 = vmatpush1.msra.mxu0 0.0
    %1164 = vmatprep.subr.mxu0 0.0
    %1165 = vmatpush1.msra.mxu0 0.0
    %1166 = vmatprep.subr.mxu0 0.0
    %1167 = vmatpush1.msra.mxu0 0.0
    %1168 = vmatprep.subr.mxu0 0.0
    %1169 = vmatpush1.msra.mxu0 0.0
    %1170 = vmatprep.subr.mxu0 0.0
    %1171 = vmatpush1.msra.mxu0 0.0
    %1172 = vmatprep.subr.mxu0 0.0
    %1173 = vmatpush1.msra.mxu0 0.0
    %1174 = vmatprep.mubr.f32.mxu0 0.0
    %v1175 = vand.u32 %v1104, 4294901760
    %v1176 = vsub.f32 %v1104, %v1175
    %v1177 = vand.u32 %v1176, 4294901760
    %v1178 = vsub.f32 %v1176, %v1177
    %v1179 = vand.u32 %v1178, 4294901760
    %1180 = vmatmul.mubr.f32.gmra.mrb[0].mxu0 %v1179
    %v1181 = vpop.f32.mrb[0].mxu0
    %v1182 = vadd.f32 0.0, %v1181
    %v1183 = vpop.f32.mrb[0].mxu0
    %1184 = vdwg.mxu0
    %1185 = vmatprep.subr.mxu0 0.0
    %v1186 = vand.u32 %v571, 4294901760
    %v1187 = vsub.f32 %v571, %v1186
    %v1188 = vand.u32 %v1187, 4294901760
    %v1189 = vsub.f32 %v1187, %v1188
    %v1190 = vand.u32 %v1189, 4294901760
    %1191 = vmatpush1.msra.mxu0 %v1190
    %1192 = vmatprep.subr.mxu0 0.0
    %v1193 = vand.u32 %v572, 4294901760
    %v1194 = vsub.f32 %v572, %v1193
    %v1195 = vand.u32 %v1194, 4294901760
    %v1196 = vsub.f32 %v1194, %v1195
    %v1197 = vand.u32 %v1196, 4294901760
    %1198 = vmatpush1.msra.mxu0 %v1197
    %1199 = vmatprep.subr.mxu0 0.0
    %v1200 = vand.u32 %v573, 4294901760
    %v1201 = vsub.f32 %v573, %v1200
    %v1202 = vand.u32 %v1201, 4294901760
    %v1203 = vsub.f32 %v1201, %v1202
    %v1204 = vand.u32 %v1203, 4294901760
    %1205 = vmatpush1.msra.mxu0 %v1204
    %1206 = vmatprep.subr.mxu0 0.0
    %v1207 = vand.u32 %v574, 4294901760
    %v1208 = vsub.f32 %v574, %v1207
    %v1209 = vand.u32 %v1208, 4294901760
    %v1210 = vsub.f32 %v1208, %v1209
    %v1211 = vand.u32 %v1210, 4294901760
    %1212 = vmatpush1.msra.mxu0 %v1211
    %1213 = vmatprep.subr.mxu0 0.0
    %1214 = vmatpush1.msra.mxu0 0.0
    %1215 = vmatprep.subr.mxu0 0.0
    %1216 = vmatpush1.msra.mxu0 0.0
    %1217 = vmatprep.subr.mxu0 0.0
    %1218 = vmatpush1.msra.mxu0 0.0
    %1219 = vmatprep.subr.mxu0 0.0
    %1220 = vmatpush1.msra.mxu0 0.0
    %1221 = vmatprep.subr.mxu0 0.0
    %1222 = vmatpush1.msra.mxu0 0.0
    %1223 = vmatprep.subr.mxu0 0.0
    %1224 = vmatpush1.msra.mxu0 0.0
    %1225 = vmatprep.subr.mxu0 0.0
    %1226 = vmatpush1.msra.mxu0 0.0
    %1227 = vmatprep.subr.mxu0 0.0
    %1228 = vmatpush1.msra.mxu0 0.0
    %1229 = vmatprep.subr.mxu0 0.0
    %1230 = vmatpush1.msra.mxu0 0.0
    %1231 = vmatprep.subr.mxu0 0.0
    %1232 = vmatpush1.msra.mxu0 0.0
    %1233 = vmatprep.subr.mxu0 0.0
    %1234 = vmatpush1.msra.mxu0 0.0
    %1235 = vmatprep.subr.mxu0 0.0
    %1236 = vmatpush1.msra.mxu0 0.0
    %1237 = vmatprep.subr.mxu0 0.0
    %1238 = vmatpush1.msra.mxu0 0.0
    %1239 = vmatprep.subr.mxu0 0.0
    %1240 = vmatpush1.msra.mxu0 0.0
    %1241 = vmatprep.subr.mxu0 0.0
    %1242 = vmatpush1.msra.mxu0 0.0
    %1243 = vmatprep.subr.mxu0 0.0
    %1244 = vmatpush1.msra.mxu0 0.0
    %1245 = vmatprep.subr.mxu0 0.0
    %1246 = vmatpush1.msra.mxu0 0.0
    %1247 = vmatprep.subr.mxu0 0.0
    %1248 = vmatpush1.msra.mxu0 0.0
    %1249 = vmatprep.subr.mxu0 0.0
    %1250 = vmatpush1.msra.mxu0 0.0
    %1251 = vmatprep.subr.mxu0 0.0
    %1252 = vmatpush1.msra.mxu0 0.0
    %1253 = vmatprep.subr.mxu0 0.0
    %1254 = vmatpush1.msra.mxu0 0.0
    %1255 = vmatprep.subr.mxu0 0.0
    %1256 = vmatpush1.msra.mxu0 0.0
    %1257 = vmatprep.subr.mxu0 0.0
    %1258 = vmatpush1.msra.mxu0 0.0
    %1259 = vmatprep.subr.mxu0 0.0
    %1260 = vmatpush1.msra.mxu0 0.0
    %1261 = vmatprep.subr.mxu0 0.0
    %1262 = vmatpush1.msra.mxu0 0.0
    %1263 = vmatprep.subr.mxu0 0.0
    %1264 = vmatpush1.msra.mxu0 0.0
    %1265 = vmatprep.subr.mxu0 0.0
    %1266 = vmatpush1.msra.mxu0 0.0
    %1267 = vmatprep.subr.mxu0 0.0
    %1268 = vmatpush1.msra.mxu0 0.0
    %1269 = vmatprep.mubr.f32.mxu0 0.0
    %v1270 = vand.u32 %v1104, 4294901760
    %1271 = vmatmul.mubr.f32.gmra.mrb[0].mxu0 %v1270
    %v1272 = vpop.f32.mrb[0].mxu0
    %v1273 = vadd.f32 %v1182, %v1272
    %v1274 = vpop.f32.mrb[0].mxu0
    %1275 = vdwg.mxu0
    %1276 = vmatprep.subr.mxu0 0.0
    %v1277 = vand.u32 %v571, 4294901760
    %v1278 = vsub.f32 %v571, %v1277
    %1279 = vmatpush1.msra.mxu0 %v1278
    %1280 = vmatprep.subr.mxu0 0.0
    %v1281 = vand.u32 %v572, 4294901760
    %v1282 = vsub.f32 %v572, %v1281
    %1283 = vmatpush1.msra.mxu0 %v1282
    %1284 = vmatprep.subr.mxu0 0.0
    %v1285 = vand.u32 %v573, 4294901760
    %v1286 = vsub.f32 %v573, %v1285
    %1287 = vmatpush1.msra.mxu0 %v1286
    %1288 = vmatprep.subr.mxu0 0.0
    %v1289 = vand.u32 %v574, 4294901760
    %v1290 = vsub.f32 %v574, %v1289
    %1291 = vmatpush1.msra.mxu0 %v1290
    %1292 = vmatprep.subr.mxu0 0.0
    %1293 = vmatpush1.msra.mxu0 0.0
    %1294 = vmatprep.subr.mxu0 0.0
    %1295 = vmatpush1.msra.mxu0 0.0
    %1296 = vmatprep.subr.mxu0 0.0
    %1297 = vmatpush1.msra.mxu0 0.0
    %1298 = vmatprep.subr.mxu0 0.0
    %1299 = vmatpush1.msra.mxu0 0.0
    %1300 = vmatprep.subr.mxu0 0.0
    %1301 = vmatpush1.msra.mxu0 0.0
    %1302 = vmatprep.subr.mxu0 0.0
    %1303 = vmatpush1.msra.mxu0 0.0
    %1304 = vmatprep.subr.mxu0 0.0
    %1305 = vmatpush1.msra.mxu0 0.0
    %1306 = vmatprep.subr.mxu0 0.0
    %1307 = vmatpush1.msra.mxu0 0.0
    %1308 = vmatprep.subr.mxu0 0.0
    %1309 = vmatpush1.msra.mxu0 0.0
    %1310 = vmatprep.subr.mxu0 0.0
    %1311 = vmatpush1.msra.mxu0 0.0
    %1312 = vmatprep.subr.mxu0 0.0
    %1313 = vmatpush1.msra.mxu0 0.0
    %1314 = vmatprep.subr.mxu0 0.0
    %1315 = vmatpush1.msra.mxu0 0.0
    %1316 = vmatprep.subr.mxu0 0.0
    %1317 = vmatpush1.msra.mxu0 0.0
    %1318 = vmatprep.subr.mxu0 0.0
    %1319 = vmatpush1.msra.mxu0 0.0
    %1320 = vmatprep.subr.mxu0 0.0
    %1321 = vmatpush1.msra.mxu0 0.0
    %1322 = vmatprep.subr.mxu0 0.0
    %1323 = vmatpush1.msra.mxu0 0.0
    %1324 = vmatprep.subr.mxu0 0.0
    %1325 = vmatpush1.msra.mxu0 0.0
    %1326 = vmatprep.subr.mxu0 0.0
    %1327 = vmatpush1.msra.mxu0 0.0
    %1328 = vmatprep.subr.mxu0 0.0
    %1329 = vmatpush1.msra.mxu0 0.0
    %1330 = vmatprep.subr.mxu0 0.0
    %1331 = vmatpush1.msra.mxu0 0.0
    %1332 = vmatprep.subr.mxu0 0.0
    %1333 = vmatpush1.msra.mxu0 0.0
    %1334 = vmatprep.subr.mxu0 0.0
    %1335 = vmatpush1.msra.mxu0 0.0
    %1336 = vmatprep.subr.mxu0 0.0
    %1337 = vmatpush1.msra.mxu0 0.0
    %1338 = vmatprep.subr.mxu0 0.0
    %1339 = vmatpush1.msra.mxu0 0.0
    %1340 = vmatprep.subr.mxu0 0.0
    %1341 = vmatpush1.msra.mxu0 0.0
    %1342 = vmatprep.subr.mxu0 0.0
    %1343 = vmatpush1.msra.mxu0 0.0
    %1344 = vmatprep.subr.mxu0 0.0
    %1345 = vmatpush1.msra.mxu0 0.0
    %1346 = vmatprep.subr.mxu0 0.0
    %1347 = vmatpush1.msra.mxu0 0.0
    %1348 = vmatprep.mubr.f32.mxu0 0.0
    %v1349 = vand.u32 %v1104, 4294901760
    %v1350 = vsub.f32 %v1104, %v1349
    %1351 = vmatmul.mubr.f32.gmra.mrb[0].mxu0 %v1350
    %v1352 = vpop.f32.mrb[0].mxu0
    %v1353 = vadd.f32 %v1273, %v1352
    %v1354 = vpop.f32.mrb[0].mxu0
    %1355 = vdwg.mxu0
    %1356 = vmatprep.subr.mxu0 0.0
    %v1357 = vand.u32 %v571, 4294901760
    %1358 = vmatpush1.msra.mxu0 %v1357
    %1359 = vmatprep.subr.mxu0 0.0
    %v1360 = vand.u32 %v572, 4294901760
    %1361 = vmatpush1.msra.mxu0 %v1360
    %1362 = vmatprep.subr.mxu0 0.0
    %v1363 = vand.u32 %v573, 4294901760
    %1364 = vmatpush1.msra.mxu0 %v1363
    %1365 = vmatprep.subr.mxu0 0.0
    %v1366 = vand.u32 %v574, 4294901760
    %1367 = vmatpush1.msra.mxu0 %v1366
    %1368 = vmatprep.subr.mxu0 0.0
    %1369 = vmatpush1.msra.mxu0 0.0
    %1370 = vmatprep.subr.mxu0 0.0
    %1371 = vmatpush1.msra.mxu0 0.0
    %1372 = vmatprep.subr.mxu0 0.0
    %1373 = vmatpush1.msra.mxu0 0.0
    %1374 = vmatprep.subr.mxu0 0.0
    %1375 = vmatpush1.msra.mxu0 0.0
    %1376 = vmatprep.subr.mxu0 0.0
    %1377 = vmatpush1.msra.mxu0 0.0
    %1378 = vmatprep.subr.mxu0 0.0
    %1379 = vmatpush1.msra.mxu0 0.0
    %1380 = vmatprep.subr.mxu0 0.0
    %1381 = vmatpush1.msra.mxu0 0.0
    %1382 = vmatprep.subr.mxu0 0.0
    %1383 = vmatpush1.msra.mxu0 0.0
    %1384 = vmatprep.subr.mxu0 0.0
    %1385 = vmatpush1.msra.mxu0 0.0
    %1386 = vmatprep.subr.mxu0 0.0
    %1387 = vmatpush1.msra.mxu0 0.0
    %1388 = vmatprep.subr.mxu0 0.0
    %1389 = vmatpush1.msra.mxu0 0.0
    %1390 = vmatprep.subr.mxu0 0.0
    %1391 = vmatpush1.msra.mxu0 0.0
    %1392 = vmatprep.subr.mxu0 0.0
    %1393 = vmatpush1.msra.mxu0 0.0
    %1394 = vmatprep.subr.mxu0 0.0
    %1395 = vmatpush1.msra.mxu0 0.0
    %1396 = vmatprep.subr.mxu0 0.0
    %1397 = vmatpush1.msra.mxu0 0.0
    %1398 = vmatprep.subr.mxu0 0.0
    %1399 = vmatpush1.msra.mxu0 0.0
    %1400 = vmatprep.subr.mxu0 0.0
    %1401 = vmatpush1.msra.mxu0 0.0
    %1402 = vmatprep.subr.mxu0 0.0
    %1403 = vmatpush1.msra.mxu0 0.0
    %1404 = vmatprep.subr.mxu0 0.0
    %1405 = vmatpush1.msra.mxu0 0.0
    %1406 = vmatprep.subr.mxu0 0.0
    %1407 = vmatpush1.msra.mxu0 0.0
    %1408 = vmatprep.subr.mxu0 0.0
    %1409 = vmatpush1.msra.mxu0 0.0
    %1410 = vmatprep.subr.mxu0 0.0
    %1411 = vmatpush1.msra.mxu0 0.0
    %1412 = vmatprep.subr.mxu0 0.0
    %1413 = vmatpush1.msra.mxu0 0.0
    %1414 = vmatprep.subr.mxu0 0.0
    %1415 = vmatpush1.msra.mxu0 0.0
    %1416 = vmatprep.subr.mxu0 0.0
    %1417 = vmatpush1.msra.mxu0 0.0
    %1418 = vmatprep.subr.mxu0 0.0
    %1419 = vmatpush1.msra.mxu0 0.0
    %1420 = vmatprep.subr.mxu0 0.0
    %1421 = vmatpush1.msra.mxu0 0.0
    %1422 = vmatprep.subr.mxu0 0.0
    %1423 = vmatpush1.msra.mxu0 0.0
    %1424 = vmatprep.mubr.f32.mxu0 0.0
    %v1425 = vand.u32 %v1104, 4294901760
    %v1426 = vsub.f32 %v1104, %v1425
    %v1427 = vand.u32 %v1426, 4294901760
    %1428 = vmatmul.mubr.f32.gmra.mrb[0].mxu0 %v1427
    %v1429 = vpop.f32.mrb[0].mxu0
    %v1430 = vadd.f32 %v1353, %v1429
    %v1431 = vpop.f32.mrb[0].mxu0
    %1432 = vdwg.mxu0
    %1433 = vmatprep.subr.mxu0 0.0
    %v1434 = vand.u32 %v571, 4294901760
    %v1435 = vsub.f32 %v571, %v1434
    %v1436 = vand.u32 %v1435, 4294901760
    %1437 = vmatpush1.msra.mxu0 %v1436
    %1438 = vmatprep.subr.mxu0 0.0
    %v1439 = vand.u32 %v572, 4294901760
    %v1440 = vsub.f32 %v572, %v1439
    %v1441 = vand.u32 %v1440, 4294901760
    %1442 = vmatpush1.msra.mxu0 %v1441
    %1443 = vmatprep.subr.mxu0 0.0
    %v1444 = vand.u32 %v573, 4294901760
    %v1445 = vsub.f32 %v573, %v1444
    %v1446 = vand.u32 %v1445, 4294901760
    %1447 = vmatpush1.msra.mxu0 %v1446
    %1448 = vmatprep.subr.mxu0 0.0
    %v1449 = vand.u32 %v574, 4294901760
    %v1450 = vsub.f32 %v574, %v1449
    %v1451 = vand.u32 %v1450, 4294901760
    %1452 = vmatpush1.msra.mxu0 %v1451
    %1453 = vmatprep.subr.mxu0 0.0
    %1454 = vmatpush1.msra.mxu0 0.0
    %1455 = vmatprep.subr.mxu0 0.0
    %1456 = vmatpush1.msra.mxu0 0.0
    %1457 = vmatprep.subr.mxu0 0.0
    %1458 = vmatpush1.msra.mxu0 0.0
    %1459 = vmatprep.subr.mxu0 0.0
    %1460 = vmatpush1.msra.mxu0 0.0
    %1461 = vmatprep.subr.mxu0 0.0
    %1462 = vmatpush1.msra.mxu0 0.0
    %1463 = vmatprep.subr.mxu0 0.0
    %1464 = vmatpush1.msra.mxu0 0.0
    %1465 = vmatprep.subr.mxu0 0.0
    %1466 = vmatpush1.msra.mxu0 0.0
    %1467 = vmatprep.subr.mxu0 0.0
    %1468 = vmatpush1.msra.mxu0 0.0
    %1469 = vmatprep.subr.mxu0 0.0
    %1470 = vmatpush1.msra.mxu0 0.0
    %1471 = vmatprep.subr.mxu0 0.0
    %1472 = vmatpush1.msra.mxu0 0.0
    %1473 = vmatprep.subr.mxu0 0.0
    %1474 = vmatpush1.msra.mxu0 0.0
    %1475 = vmatprep.subr.mxu0 0.0
    %1476 = vmatpush1.msra.mxu0 0.0
    %1477 = vmatprep.subr.mxu0 0.0
    %1478 = vmatpush1.msra.mxu0 0.0
    %1479 = vmatprep.subr.mxu0 0.0
    %1480 = vmatpush1.msra.mxu0 0.0
    %1481 = vmatprep.subr.mxu0 0.0
    %1482 = vmatpush1.msra.mxu0 0.0
    %1483 = vmatprep.subr.mxu0 0.0
    %1484 = vmatpush1.msra.mxu0 0.0
    %1485 = vmatprep.subr.mxu0 0.0
    %1486 = vmatpush1.msra.mxu0 0.0
    %1487 = vmatprep.subr.mxu0 0.0
    %1488 = vmatpush1.msra.mxu0 0.0
    %1489 = vmatprep.subr.mxu0 0.0
    %1490 = vmatpush1.msra.mxu0 0.0
    %1491 = vmatprep.subr.mxu0 0.0
    %1492 = vmatpush1.msra.mxu0 0.0
    %1493 = vmatprep.subr.mxu0 0.0
    %1494 = vmatpush1.msra.mxu0 0.0
    %1495 = vmatprep.subr.mxu0 0.0
    %1496 = vmatpush1.msra.mxu0 0.0
    %1497 = vmatprep.subr.mxu0 0.0
    %1498 = vmatpush1.msra.mxu0 0.0
    %1499 = vmatprep.subr.mxu0 0.0
    %1500 = vmatpush1.msra.mxu0 0.0
    %1501 = vmatprep.subr.mxu0 0.0
    %1502 = vmatpush1.msra.mxu0 0.0
    %1503 = vmatprep.subr.mxu0 0.0
    %1504 = vmatpush1.msra.mxu0 0.0
    %1505 = vmatprep.subr.mxu0 0.0
    %1506 = vmatpush1.msra.mxu0 0.0
    %1507 = vmatprep.subr.mxu0 0.0
    %1508 = vmatpush1.msra.mxu0 0.0
    %1509 = vmatprep.mubr.f32.mxu0 0.0
    %v1510 = vand.u32 %v1104, 4294901760
    %1511 = vmatmul.mubr.f32.gmra.mrb[0].mxu0 %v1510
    %v1512 = vpop.f32.mrb[0].mxu0
    %v1513 = vadd.f32 %v1430, %v1512
    %v1514 = vpop.f32.mrb[0].mxu0
    %1515 = vdwg.mxu0
    %1516 = vmatprep.subr.mxu0 0.0
    %v1517 = vand.u32 %v571, 4294901760
    %1518 = vmatpush1.msra.mxu0 %v1517
    %1519 = vmatprep.subr.mxu0 0.0
    %v1520 = vand.u32 %v572, 4294901760
    %1521 = vmatpush1.msra.mxu0 %v1520
    %1522 = vmatprep.subr.mxu0 0.0
    %v1523 = vand.u32 %v573, 4294901760
    %1524 = vmatpush1.msra.mxu0 %v1523
    %1525 = vmatprep.subr.mxu0 0.0
    %v1526 = vand.u32 %v574, 4294901760
    %1527 = vmatpush1.msra.mxu0 %v1526
    %1528 = vmatprep.subr.mxu0 0.0
    %1529 = vmatpush1.msra.mxu0 0.0
    %1530 = vmatprep.subr.mxu0 0.0
    %1531 = vmatpush1.msra.mxu0 0.0
    %1532 = vmatprep.subr.mxu0 0.0
    %1533 = vmatpush1.msra.mxu0 0.0
    %1534 = vmatprep.subr.mxu0 0.0
    %1535 = vmatpush1.msra.mxu0 0.0
    %1536 = vmatprep.subr.mxu0 0.0
    %1537 = vmatpush1.msra.mxu0 0.0
    %1538 = vmatprep.subr.mxu0 0.0
    %1539 = vmatpush1.msra.mxu0 0.0
    %1540 = vmatprep.subr.mxu0 0.0
    %1541 = vmatpush1.msra.mxu0 0.0
    %1542 = vmatprep.subr.mxu0 0.0
    %1543 = vmatpush1.msra.mxu0 0.0
    %1544 = vmatprep.subr.mxu0 0.0
    %1545 = vmatpush1.msra.mxu0 0.0
    %1546 = vmatprep.subr.mxu0 0.0
    %1547 = vmatpush1.msra.mxu0 0.0
    %1548 = vmatprep.subr.mxu0 0.0
    %1549 = vmatpush1.msra.mxu0 0.0
    %1550 = vmatprep.subr.mxu0 0.0
    %1551 = vmatpush1.msra.mxu0 0.0
    %1552 = vmatprep.subr.mxu0 0.0
    %1553 = vmatpush1.msra.mxu0 0.0
    %1554 = vmatprep.subr.mxu0 0.0
    %1555 = vmatpush1.msra.mxu0 0.0
    %1556 = vmatprep.subr.mxu0 0.0
    %1557 = vmatpush1.msra.mxu0 0.0
    %1558 = vmatprep.subr.mxu0 0.0
    %1559 = vmatpush1.msra.mxu0 0.0
    %1560 = vmatprep.subr.mxu0 0.0
    %1561 = vmatpush1.msra.mxu0 0.0
    %1562 = vmatprep.subr.mxu0 0.0
    %1563 = vmatpush1.msra.mxu0 0.0
    %1564 = vmatprep.subr.mxu0 0.0
    %1565 = vmatpush1.msra.mxu0 0.0
    %1566 = vmatprep.subr.mxu0 0.0
    %1567 = vmatpush1.msra.mxu0 0.0
    %1568 = vmatprep.subr.mxu0 0.0
    %1569 = vmatpush1.msra.mxu0 0.0
    %1570 = vmatprep.subr.mxu0 0.0
    %1571 = vmatpush1.msra.mxu0 0.0
    %1572 = vmatprep.subr.mxu0 0.0
    %1573 = vmatpush1.msra.mxu0 0.0
    %1574 = vmatprep.subr.mxu0 0.0
    %1575 = vmatpush1.msra.mxu0 0.0
    %1576 = vmatprep.subr.mxu0 0.0
    %1577 = vmatpush1.msra.mxu0 0.0
    %1578 = vmatprep.subr.mxu0 0.0
    %1579 = vmatpush1.msra.mxu0 0.0
    %1580 = vmatprep.subr.mxu0 0.0
    %1581 = vmatpush1.msra.mxu0 0.0
    %1582 = vmatprep.subr.mxu0 0.0
    %1583 = vmatpush1.msra.mxu0 0.0
    %1584 = vmatprep.mubr.f32.mxu0 0.0
    %v1585 = vand.u32 %v1104, 4294901760
    %1586 = vmatmul.mubr.f32.gmra.mrb[0].mxu0 %v1585
    %v1587 = vpop.f32.mrb[0].mxu0
    %v1588 = vadd.f32 %v1513, %v1587
    %v1589 = vpop.f32.mrb[0].mxu0
    %1590 = vdwg.mxu0
    %v1592 = vrot.slane %v1588, 7
    %v1594 = vadd.f32 %v568, %v1592
    %v1595 = vxor.u32 %v1594, 2147483648
    %v1596 = vmul.f32 %v1595, 1.442695
    %v1597 = vpow.pop %v1596
    %v1598 = vadd.f32 %v1597, 1.0
    %v1599 = vrcp.pop %v1598
    %v1600 = vmul.f32 1.0, %v1599
    %v1601 = vtanh.pop %v1594
    %v1603 = vrot.slane %v1091, 7
    %v1605 = vmul.f32 %v1600, %v1603
    %1607 = vrot.lane.b32.xlu0 %v1601, 64
    %v1608 = vpop.permute.xlu0 %1607
    %v1610 = vmul.f32 %v1600, %v1608
    %1612 = vrot.lane.b32.xlu0 %v1610, 32
    %v1613 = vpop.permute.xlu0 %1612
    %v1615 = vadd.f32 %v1605, %v1613
    %v1616 = vtanh.pop %v1615
    %1618 = vrot.lane.b32.xlu0 %v1616, 64
    %v1619 = vpop.permute.xlu0 %1618
    %v1621 = vmul.f32 %v1600, %v1619
    %1623 = vrot.lane.b32.xlu0 %v1621, 32
    %v1624 = vpop.permute.xlu0 %1623
    %vm1626 = vcmask 254977
    %1627 = vst.msk [vmem:[#allocation2] sm:$0x2] %vm1626, %v1624
    %v1628 = vrot.slane %v1621, 1
    %1629 = vrot.lane.b32.xlu0 %v1628, 32
    %v1630 = vpop.permute.xlu0 %1629
    %v1631 = vsel %vm82, %v1630, 0
    %1633 = vmatprep.subr.mxu0 0.0
    %v1634 = vand.u32 %v571, 4294901760
    %1635 = vmatpush1.msra.mxu0 %v1634
    %1636 = vmatprep.subr.mxu0 0.0
    %v1637 = vand.u32 %v572, 4294901760
    %1638 = vmatpush1.msra.mxu0 %v1637
    %1639 = vmatprep.subr.mxu0 0.0
    %v1640 = vand.u32 %v573, 4294901760
    %1641 = vmatpush1.msra.mxu0 %v1640
    %1642 = vmatprep.subr.mxu0 0.0
    %v1643 = vand.u32 %v574, 4294901760
    %1644 = vmatpush1.msra.mxu0 %v1643
    %1645 = vmatprep.subr.mxu0 0.0
    %1646 = vmatpush1.msra.mxu0 0.0
    %1647 = vmatprep.subr.mxu0 0.0
    %1648 = vmatpush1.msra.mxu0 0.0
    %1649 = vmatprep.subr.mxu0 0.0
    %1650 = vmatpush1.msra.mxu0 0.0
    %1651 = vmatprep.subr.mxu0 0.0
    %1652 = vmatpush1.msra.mxu0 0.0
    %1653 = vmatprep.subr.mxu0 0.0
    %1654 = vmatpush1.msra.mxu0 0.0
    %1655 = vmatprep.subr.mxu0 0.0
    %1656 = vmatpush1.msra.mxu0 0.0
    %1657 = vmatprep.subr.mxu0 0.0
    %1658 = vmatpush1.msra.mxu0 0.0
    %1659 = vmatprep.subr.mxu0 0.0
    %1660 = vmatpush1.msra.mxu0 0.0
    %1661 = vmatprep.subr.mxu0 0.0
    %1662 = vmatpush1.msra.mxu0 0.0
    %1663 = vmatprep.subr.mxu0 0.0
    %1664 = vmatpush1.msra.mxu0 0.0
    %1665 = vmatprep.subr.mxu0 0.0
    %1666 = vmatpush1.msra.mxu0 0.0
    %1667 = vmatprep.subr.mxu0 0.0
    %1668 = vmatpush1.msra.mxu0 0.0
    %1669 = vmatprep.subr.mxu0 0.0
    %1670 = vmatpush1.msra.mxu0 0.0
    %1671 = vmatprep.subr.mxu0 0.0
    %1672 = vmatpush1.msra.mxu0 0.0
    %1673 = vmatprep.subr.mxu0 0.0
    %1674 = vmatpush1.msra.mxu0 0.0
    %1675 = vmatprep.subr.mxu0 0.0
    %1676 = vmatpush1.msra.mxu0 0.0
    %1677 = vmatprep.subr.mxu0 0.0
    %1678 = vmatpush1.msra.mxu0 0.0
    %1679 = vmatprep.subr.mxu0 0.0
    %1680 = vmatpush1.msra.mxu0 0.0
    %1681 = vmatprep.subr.mxu0 0.0
    %1682 = vmatpush1.msra.mxu0 0.0
    %1683 = vmatprep.subr.mxu0 0.0
    %1684 = vmatpush1.msra.mxu0 0.0
    %1685 = vmatprep.subr.mxu0 0.0
    %1686 = vmatpush1.msra.mxu0 0.0
    %1687 = vmatprep.subr.mxu0 0.0
    %1688 = vmatpush1.msra.mxu0 0.0
    %1689 = vmatprep.subr.mxu0 0.0
    %1690 = vmatpush1.msra.mxu0 0.0
    %1691 = vmatprep.subr.mxu0 0.0
    %1692 = vmatpush1.msra.mxu0 0.0
    %1693 = vmatprep.subr.mxu0 0.0
    %1694 = vmatpush1.msra.mxu0 0.0
    %1695 = vmatprep.subr.mxu0 0.0
    %1696 = vmatpush1.msra.mxu0 0.0
    %1697 = vmatprep.subr.mxu0 0.0
    %1698 = vmatpush1.msra.mxu0 0.0
    %1699 = vmatprep.subr.mxu0 0.0
    %1700 = vmatpush1.msra.mxu0 0.0
    %1701 = vmatprep.mubr.f32.mxu0 0.0
    %v1702 = vand.u32 %v1631, 4294901760
    %v1703 = vsub.f32 %v1631, %v1702
    %v1704 = vand.u32 %v1703, 4294901760
    %v1705 = vsub.f32 %v1703, %v1704
    %v1706 = vand.u32 %v1705, 4294901760
    %1707 = vmatmul.mubr.f32.gmra.mrb[0].mxu0 %v1706
    %v1708 = vpop.f32.mrb[0].mxu0
    %v1709 = vadd.f32 0.0, %v1708
    %v1710 = vpop.f32.mrb[0].mxu0
    %1711 = vdwg.mxu0
    %1712 = vmatprep.subr.mxu0 0.0
    %v1713 = vand.u32 %v571, 4294901760
    %v1714 = vsub.f32 %v571, %v1713
    %v1715 = vand.u32 %v1714, 4294901760
    %v1716 = vsub.f32 %v1714, %v1715
    %v1717 = vand.u32 %v1716, 4294901760
    %1718 = vmatpush1.msra.mxu0 %v1717
    %1719 = vmatprep.subr.mxu0 0.0
    %v1720 = vand.u32 %v572, 4294901760
    %v1721 = vsub.f32 %v572, %v1720
    %v1722 = vand.u32 %v1721, 4294901760
    %v1723 = vsub.f32 %v1721, %v1722
    %v1724 = vand.u32 %v1723, 4294901760
    %1725 = vmatpush1.msra.mxu0 %v1724
    %1726 = vmatprep.subr.mxu0 0.0
    %v1727 = vand.u32 %v573, 4294901760
    %v1728 = vsub.f32 %v573, %v1727
    %v1729 = vand.u32 %v1728, 4294901760
    %v1730 = vsub.f32 %v1728, %v1729
    %v1731 = vand.u32 %v1730, 4294901760
    %1732 = vmatpush1.msra.mxu0 %v1731
    %1733 = vmatprep.subr.mxu0 0.0
    %v1734 = vand.u32 %v574, 4294901760
    %v1735 = vsub.f32 %v574, %v1734
    %v1736 = vand.u32 %v1735, 4294901760
    %v1737 = vsub.f32 %v1735, %v1736
    %v1738 = vand.u32 %v1737, 4294901760
    %1739 = vmatpush1.msra.mxu0 %v1738
    %1740 = vmatprep.subr.mxu0 0.0
    %1741 = vmatpush1.msra.mxu0 0.0
    %1742 = vmatprep.subr.mxu0 0.0
    %1743 = vmatpush1.msra.mxu0 0.0
    %1744 = vmatprep.subr.mxu0 0.0
    %1745 = vmatpush1.msra.mxu0 0.0
    %1746 = vmatprep.subr.mxu0 0.0
    %1747 = vmatpush1.msra.mxu0 0.0
    %1748 = vmatprep.subr.mxu0 0.0
    %1749 = vmatpush1.msra.mxu0 0.0
    %1750 = vmatprep.subr.mxu0 0.0
    %1751 = vmatpush1.msra.mxu0 0.0
    %1752 = vmatprep.subr.mxu0 0.0
    %1753 = vmatpush1.msra.mxu0 0.0
    %1754 = vmatprep.subr.mxu0 0.0
    %1755 = vmatpush1.msra.mxu0 0.0
    %1756 = vmatprep.subr.mxu0 0.0
    %1757 = vmatpush1.msra.mxu0 0.0
    %1758 = vmatprep.subr.mxu0 0.0
    %1759 = vmatpush1.msra.mxu0 0.0
    %1760 = vmatprep.subr.mxu0 0.0
    %1761 = vmatpush1.msra.mxu0 0.0
    %1762 = vmatprep.subr.mxu0 0.0
    %1763 = vmatpush1.msra.mxu0 0.0
    %1764 = vmatprep.subr.mxu0 0.0
    %1765 = vmatpush1.msra.mxu0 0.0
    %1766 = vmatprep.subr.mxu0 0.0
    %1767 = vmatpush1.msra.mxu0 0.0
    %1768 = vmatprep.subr.mxu0 0.0
    %1769 = vmatpush1.msra.mxu0 0.0
    %1770 = vmatprep.subr.mxu0 0.0
    %1771 = vmatpush1.msra.mxu0 0.0
    %1772 = vmatprep.subr.mxu0 0.0
    %1773 = vmatpush1.msra.mxu0 0.0
    %1774 = vmatprep.subr.mxu0 0.0
    %1775 = vmatpush1.msra.mxu0 0.0
    %1776 = vmatprep.subr.mxu0 0.0
    %1777 = vmatpush1.msra.mxu0 0.0
    %1778 = vmatprep.subr.mxu0 0.0
    %1779 = vmatpush1.msra.mxu0 0.0
    %1780 = vmatprep.subr.mxu0 0.0
    %1781 = vmatpush1.msra.mxu0 0.0
    %1782 = vmatprep.subr.mxu0 0.0
    %1783 = vmatpush1.msra.mxu0 0.0
    %1784 = vmatprep.subr.mxu0 0.0
    %1785 = vmatpush1.msra.mxu0 0.0
    %1786 = vmatprep.subr.mxu0 0.0
    %1787 = vmatpush1.msra.mxu0 0.0
    %1788 = vmatprep.subr.mxu0 0.0
    %1789 = vmatpush1.msra.mxu0 0.0
    %1790 = vmatprep.subr.mxu0 0.0
    %1791 = vmatpush1.msra.mxu0 0.0
    %1792 = vmatprep.subr.mxu0 0.0
    %1793 = vmatpush1.msra.mxu0 0.0
    %1794 = vmatprep.subr.mxu0 0.0
    %1795 = vmatpush1.msra.mxu0 0.0
    %1796 = vmatprep.mubr.f32.mxu0 0.0
    %v1797 = vand.u32 %v1631, 4294901760
    %1798 = vmatmul.mubr.f32.gmra.mrb[0].mxu0 %v1797
    %v1799 = vpop.f32.mrb[0].mxu0
    %v1800 = vadd.f32 %v1709, %v1799
    %v1801 = vpop.f32.mrb[0].mxu0
    %1802 = vdwg.mxu0
    %1803 = vmatprep.subr.mxu0 0.0
    %v1804 = vand.u32 %v571, 4294901760
    %v1805 = vsub.f32 %v571, %v1804
    %1806 = vmatpush1.msra.mxu0 %v1805
    %1807 = vmatprep.subr.mxu0 0.0
    %v1808 = vand.u32 %v572, 4294901760
    %v1809 = vsub.f32 %v572, %v1808
    %1810 = vmatpush1.msra.mxu0 %v1809
    %1811 = vmatprep.subr.mxu0 0.0
    %v1812 = vand.u32 %v573, 4294901760
    %v1813 = vsub.f32 %v573, %v1812
    %1814 = vmatpush1.msra.mxu0 %v1813
    %1815 = vmatprep.subr.mxu0 0.0
    %v1816 = vand.u32 %v574, 4294901760
    %v1817 = vsub.f32 %v574, %v1816
    %1818 = vmatpush1.msra.mxu0 %v1817
    %1819 = vmatprep.subr.mxu0 0.0
    %1820 = vmatpush1.msra.mxu0 0.0
    %1821 = vmatprep.subr.mxu0 0.0
    %1822 = vmatpush1.msra.mxu0 0.0
    %1823 = vmatprep.subr.mxu0 0.0
    %1824 = vmatpush1.msra.mxu0 0.0
    %1825 = vmatprep.subr.mxu0 0.0
    %1826 = vmatpush1.msra.mxu0 0.0
    %1827 = vmatprep.subr.mxu0 0.0
    %1828 = vmatpush1.msra.mxu0 0.0
    %1829 = vmatprep.subr.mxu0 0.0
    %1830 = vmatpush1.msra.mxu0 0.0
    %1831 = vmatprep.subr.mxu0 0.0
    %1832 = vmatpush1.msra.mxu0 0.0
    %1833 = vmatprep.subr.mxu0 0.0
    %1834 = vmatpush1.msra.mxu0 0.0
    %1835 = vmatprep.subr.mxu0 0.0
    %1836 = vmatpush1.msra.mxu0 0.0
    %1837 = vmatprep.subr.mxu0 0.0
    %1838 = vmatpush1.msra.mxu0 0.0
    %1839 = vmatprep.subr.mxu0 0.0
    %1840 = vmatpush1.msra.mxu0 0.0
    %1841 = vmatprep.subr.mxu0 0.0
    %1842 = vmatpush1.msra.mxu0 0.0
    %1843 = vmatprep.subr.mxu0 0.0
    %1844 = vmatpush1.msra.mxu0 0.0
    %1845 = vmatprep.subr.mxu0 0.0
    %1846 = vmatpush1.msra.mxu0 0.0
    %1847 = vmatprep.subr.mxu0 0.0
    %1848 = vmatpush1.msra.mxu0 0.0
    %1849 = vmatprep.subr.mxu0 0.0
    %1850 = vmatpush1.msra.mxu0 0.0
    %1851 = vmatprep.subr.mxu0 0.0
    %1852 = vmatpush1.msra.mxu0 0.0
    %1853 = vmatprep.subr.mxu0 0.0
    %1854 = vmatpush1.msra.mxu0 0.0
    %1855 = vmatprep.subr.mxu0 0.0
    %1856 = vmatpush1.msra.mxu0 0.0
    %1857 = vmatprep.subr.mxu0 0.0
    %1858 = vmatpush1.msra.mxu0 0.0
    %1859 = vmatprep.subr.mxu0 0.0
    %1860 = vmatpush1.msra.mxu0 0.0
    %1861 = vmatprep.subr.mxu0 0.0
    %1862 = vmatpush1.msra.mxu0 0.0
    %1863 = vmatprep.subr.mxu0 0.0
    %1864 = vmatpush1.msra.mxu0 0.0
    %1865 = vmatprep.subr.mxu0 0.0
    %1866 = vmatpush1.msra.mxu0 0.0
    %1867 = vmatprep.subr.mxu0 0.0
    %1868 = vmatpush1.msra.mxu0 0.0
    %1869 = vmatprep.subr.mxu0 0.0
    %1870 = vmatpush1.msra.mxu0 0.0
    %1871 = vmatprep.subr.mxu0 0.0
    %1872 = vmatpush1.msra.mxu0 0.0
    %1873 = vmatprep.subr.mxu0 0.0
    %1874 = vmatpush1.msra.mxu0 0.0
    %1875 = vmatprep.mubr.f32.mxu0 0.0
    %v1876 = vand.u32 %v1631, 4294901760
    %v1877 = vsub.f32 %v1631, %v1876
    %1878 = vmatmul.mubr.f32.gmra.mrb[0].mxu0 %v1877
    %v1879 = vpop.f32.mrb[0].mxu0
    %v1880 = vadd.f32 %v1800, %v1879
    %v1881 = vpop.f32.mrb[0].mxu0
    %1882 = vdwg.mxu0
    %1883 = vmatprep.subr.mxu0 0.0
    %v1884 = vand.u32 %v571, 4294901760
    %1885 = vmatpush1.msra.mxu0 %v1884
    %1886 = vmatprep.subr.mxu0 0.0
    %v1887 = vand.u32 %v572, 4294901760
    %1888 = vmatpush1.msra.mxu0 %v1887
    %1889 = vmatprep.subr.mxu0 0.0
    %v1890 = vand.u32 %v573, 4294901760
    %1891 = vmatpush1.msra.mxu0 %v1890
    %1892 = vmatprep.subr.mxu0 0.0
    %v1893 = vand.u32 %v574, 4294901760
    %1894 = vmatpush1.msra.mxu0 %v1893
    %1895 = vmatprep.subr.mxu0 0.0
    %1896 = vmatpush1.msra.mxu0 0.0
    %1897 = vmatprep.subr.mxu0 0.0
    %1898 = vmatpush1.msra.mxu0 0.0
    %1899 = vmatprep.subr.mxu0 0.0
    %1900 = vmatpush1.msra.mxu0 0.0
    %1901 = vmatprep.subr.mxu0 0.0
    %1902 = vmatpush1.msra.mxu0 0.0
    %1903 = vmatprep.subr.mxu0 0.0
    %1904 = vmatpush1.msra.mxu0 0.0
    %1905 = vmatprep.subr.mxu0 0.0
    %1906 = vmatpush1.msra.mxu0 0.0
    %1907 = vmatprep.subr.mxu0 0.0
    %1908 = vmatpush1.msra.mxu0 0.0
    %1909 = vmatprep.subr.mxu0 0.0
    %1910 = vmatpush1.msra.mxu0 0.0
    %1911 = vmatprep.subr.mxu0 0.0
    %1912 = vmatpush1.msra.mxu0 0.0
    %1913 = vmatprep.subr.mxu0 0.0
    %1914 = vmatpush1.msra.mxu0 0.0
    %1915 = vmatprep.subr.mxu0 0.0
    %1916 = vmatpush1.msra.mxu0 0.0
    %1917 = vmatprep.subr.mxu0 0.0
    %1918 = vmatpush1.msra.mxu0 0.0
    %1919 = vmatprep.subr.mxu0 0.0
    %1920 = vmatpush1.msra.mxu0 0.0
    %1921 = vmatprep.subr.mxu0 0.0
    %1922 = vmatpush1.msra.mxu0 0.0
    %1923 = vmatprep.subr.mxu0 0.0
    %1924 = vmatpush1.msra.mxu0 0.0
    %1925 = vmatprep.subr.mxu0 0.0
    %1926 = vmatpush1.msra.mxu0 0.0
    %1927 = vmatprep.subr.mxu0 0.0
    %1928 = vmatpush1.msra.mxu0 0.0
    %1929 = vmatprep.subr.mxu0 0.0
    %1930 = vmatpush1.msra.mxu0 0.0
    %1931 = vmatprep.subr.mxu0 0.0
    %1932 = vmatpush1.msra.mxu0 0.0
    %1933 = vmatprep.subr.mxu0 0.0
    %1934 = vmatpush1.msra.mxu0 0.0
    %1935 = vmatprep.subr.mxu0 0.0
    %1936 = vmatpush1.msra.mxu0 0.0
    %1937 = vmatprep.subr.mxu0 0.0
    %1938 = vmatpush1.msra.mxu0 0.0
    %1939 = vmatprep.subr.mxu0 0.0
    %1940 = vmatpush1.msra.mxu0 0.0
    %1941 = vmatprep.subr.mxu0 0.0
    %1942 = vmatpush1.msra.mxu0 0.0
    %1943 = vmatprep.subr.mxu0 0.0
    %1944 = vmatpush1.msra.mxu0 0.0
    %1945 = vmatprep.subr.mxu0 0.0
    %1946 = vmatpush1.msra.mxu0 0.0
    %1947 = vmatprep.subr.mxu0 0.0
    %1948 = vmatpush1.msra.mxu0 0.0
    %1949 = vmatprep.subr.mxu0 0.0
    %1950 = vmatpush1.msra.mxu0 0.0
    %1951 = vmatprep.mubr.f32.mxu0 0.0
    %v1952 = vand.u32 %v1631, 4294901760
    %v1953 = vsub.f32 %v1631, %v1952
    %v1954 = vand.u32 %v1953, 4294901760
    %1955 = vmatmul.mubr.f32.gmra.mrb[0].mxu0 %v1954
    %v1956 = vpop.f32.mrb[0].mxu0
    %v1957 = vadd.f32 %v1880, %v1956
    %v1958 = vpop.f32.mrb[0].mxu0
    %1959 = vdwg.mxu0
    %1960 = vmatprep.subr.mxu0 0.0
    %v1961 = vand.u32 %v571, 4294901760
    %v1962 = vsub.f32 %v571, %v1961
    %v1963 = vand.u32 %v1962, 4294901760
    %1964 = vmatpush1.msra.mxu0 %v1963
    %1965 = vmatprep.subr.mxu0 0.0
    %v1966 = vand.u32 %v572, 4294901760
    %v1967 = vsub.f32 %v572, %v1966
    %v1968 = vand.u32 %v1967, 4294901760
    %1969 = vmatpush1.msra.mxu0 %v1968
    %1970 = vmatprep.subr.mxu0 0.0
    %v1971 = vand.u32 %v573, 4294901760
    %v1972 = vsub.f32 %v573, %v1971
    %v1973 = vand.u32 %v1972, 4294901760
    %1974 = vmatpush1.msra.mxu0 %v1973
    %1975 = vmatprep.subr.mxu0 0.0
    %v1976 = vand.u32 %v574, 4294901760
    %v1977 = vsub.f32 %v574, %v1976
    %v1978 = vand.u32 %v1977, 4294901760
    %1979 = vmatpush1.msra.mxu0 %v1978
    %1980 = vmatprep.subr.mxu0 0.0
    %1981 = vmatpush1.msra.mxu0 0.0
    %1982 = vmatprep.subr.mxu0 0.0
    %1983 = vmatpush1.msra.mxu0 0.0
    %1984 = vmatprep.subr.mxu0 0.0
    %1985 = vmatpush1.msra.mxu0 0.0
    %1986 = vmatprep.subr.mxu0 0.0
    %1987 = vmatpush1.msra.mxu0 0.0
    %1988 = vmatprep.subr.mxu0 0.0
    %1989 = vmatpush1.msra.mxu0 0.0
    %1990 = vmatprep.subr.mxu0 0.0
    %1991 = vmatpush1.msra.mxu0 0.0
    %1992 = vmatprep.subr.mxu0 0.0
    %1993 = vmatpush1.msra.mxu0 0.0
    %1994 = vmatprep.subr.mxu0 0.0
    %1995 = vmatpush1.msra.mxu0 0.0
    %1996 = vmatprep.subr.mxu0 0.0
    %1997 = vmatpush1.msra.mxu0 0.0
    %1998 = vmatprep.subr.mxu0 0.0
    %1999 = vmatpush1.msra.mxu0 0.0
    %2000 = vmatprep.subr.mxu0 0.0
    %2001 = vmatpush1.msra.mxu0 0.0
    %2002 = vmatprep.subr.mxu0 0.0
    %2003 = vmatpush1.msra.mxu0 0.0
    %2004 = vmatprep.subr.mxu0 0.0
    %2005 = vmatpush1.msra.mxu0 0.0
    %2006 = vmatprep.subr.mxu0 0.0
    %2007 = vmatpush1.msra.mxu0 0.0
    %2008 = vmatprep.subr.mxu0 0.0
    %2009 = vmatpush1.msra.mxu0 0.0
    %2010 = vmatprep.subr.mxu0 0.0
    %2011 = vmatpush1.msra.mxu0 0.0
    %2012 = vmatprep.subr.mxu0 0.0
    %2013 = vmatpush1.msra.mxu0 0.0
    %2014 = vmatprep.subr.mxu0 0.0
    %2015 = vmatpush1.msra.mxu0 0.0
    %2016 = vmatprep.subr.mxu0 0.0
    %2017 = vmatpush1.msra.mxu0 0.0
    %2018 = vmatprep.subr.mxu0 0.0
    %2019 = vmatpush1.msra.mxu0 0.0
    %2020 = vmatprep.subr.mxu0 0.0
    %2021 = vmatpush1.msra.mxu0 0.0
    %2022 = vmatprep.subr.mxu0 0.0
    %2023 = vmatpush1.msra.mxu0 0.0
    %2024 = vmatprep.subr.mxu0 0.0
    %2025 = vmatpush1.msra.mxu0 0.0
    %2026 = vmatprep.subr.mxu0 0.0
    %2027 = vmatpush1.msra.mxu0 0.0
    %2028 = vmatprep.subr.mxu0 0.0
    %2029 = vmatpush1.msra.mxu0 0.0
    %2030 = vmatprep.subr.mxu0 0.0
    %2031 = vmatpush1.msra.mxu0 0.0
    %2032 = vmatprep.subr.mxu0 0.0
    %2033 = vmatpush1.msra.mxu0 0.0
    %2034 = vmatprep.subr.mxu0 0.0
    %2035 = vmatpush1.msra.mxu0 0.0
    %2036 = vmatprep.mubr.f32.mxu0 0.0
    %v2037 = vand.u32 %v1631, 4294901760
    %2038 = vmatmul.mubr.f32.gmra.mrb[0].mxu0 %v2037
    %v2039 = vpop.f32.mrb[0].mxu0
    %v2040 = vadd.f32 %v1957, %v2039
    %v2041 = vpop.f32.mrb[0].mxu0
    %2042 = vdwg.mxu0
    %2043 = vmatprep.subr.mxu0 0.0
    %v2044 = vand.u32 %v571, 4294901760
    %2045 = vmatpush1.msra.mxu0 %v2044
    %2046 = vmatprep.subr.mxu0 0.0
    %v2047 = vand.u32 %v572, 4294901760
    %2048 = vmatpush1.msra.mxu0 %v2047
    %2049 = vmatprep.subr.mxu0 0.0
    %v2050 = vand.u32 %v573, 4294901760
    %2051 = vmatpush1.msra.mxu0 %v2050
    %2052 = vmatprep.subr.mxu0 0.0
    %v2053 = vand.u32 %v574, 4294901760
    %2054 = vmatpush1.msra.mxu0 %v2053
    %2055 = vmatprep.subr.mxu0 0.0
    %2056 = vmatpush1.msra.mxu0 0.0
    %2057 = vmatprep.subr.mxu0 0.0
    %2058 = vmatpush1.msra.mxu0 0.0
    %2059 = vmatprep.subr.mxu0 0.0
    %2060 = vmatpush1.msra.mxu0 0.0
    %2061 = vmatprep.subr.mxu0 0.0
    %2062 = vmatpush1.msra.mxu0 0.0
    %2063 = vmatprep.subr.mxu0 0.0
    %2064 = vmatpush1.msra.mxu0 0.0
    %2065 = vmatprep.subr.mxu0 0.0
    %2066 = vmatpush1.msra.mxu0 0.0
    %2067 = vmatprep.subr.mxu0 0.0
    %2068 = vmatpush1.msra.mxu0 0.0
    %2069 = vmatprep.subr.mxu0 0.0
    %2070 = vmatpush1.msra.mxu0 0.0
    %2071 = vmatprep.subr.mxu0 0.0
    %2072 = vmatpush1.msra.mxu0 0.0
    %2073 = vmatprep.subr.mxu0 0.0
    %2074 = vmatpush1.msra.mxu0 0.0
    %2075 = vmatprep.subr.mxu0 0.0
    %2076 = vmatpush1.msra.mxu0 0.0
    %2077 = vmatprep.subr.mxu0 0.0
    %2078 = vmatpush1.msra.mxu0 0.0
    %2079 = vmatprep.subr.mxu0 0.0
    %2080 = vmatpush1.msra.mxu0 0.0
    %2081 = vmatprep.subr.mxu0 0.0
    %2082 = vmatpush1.msra.mxu0 0.0
    %2083 = vmatprep.subr.mxu0 0.0
    %2084 = vmatpush1.msra.mxu0 0.0
    %2085 = vmatprep.subr.mxu0 0.0
    %2086 = vmatpush1.msra.mxu0 0.0
    %2087 = vmatprep.subr.mxu0 0.0
    %2088 = vmatpush1.msra.mxu0 0.0
    %2089 = vmatprep.subr.mxu0 0.0
    %2090 = vmatpush1.msra.mxu0 0.0
    %2091 = vmatprep.subr.mxu0 0.0
    %2092 = vmatpush1.msra.mxu0 0.0
    %2093 = vmatprep.subr.mxu0 0.0
    %2094 = vmatpush1.msra.mxu0 0.0
    %2095 = vmatprep.subr.mxu0 0.0
    %2096 = vmatpush1.msra.mxu0 0.0
    %2097 = vmatprep.subr.mxu0 0.0
    %2098 = vmatpush1.msra.mxu0 0.0
    %2099 = vmatprep.subr.mxu0 0.0
    %2100 = vmatpush1.msra.mxu0 0.0
    %2101 = vmatprep.subr.mxu0 0.0
    %2102 = vmatpush1.msra.mxu0 0.0
    %2103 = vmatprep.subr.mxu0 0.0
    %2104 = vmatpush1.msra.mxu0 0.0
    %2105 = vmatprep.subr.mxu0 0.0
    %2106 = vmatpush1.msra.mxu0 0.0
    %2107 = vmatprep.subr.mxu0 0.0
    %2108 = vmatpush1.msra.mxu0 0.0
    %2109 = vmatprep.subr.mxu0 0.0
    %2110 = vmatpush1.msra.mxu0 0.0
    %2111 = vmatprep.mubr.f32.mxu0 0.0
    %v2112 = vand.u32 %v1631, 4294901760
    %2113 = vmatmul.mubr.f32.gmra.mrb[0].mxu0 %v2112
    %v2114 = vpop.f32.mrb[0].mxu0
    %v2115 = vadd.f32 %v2040, %v2114
    %v2116 = vpop.f32.mrb[0].mxu0
    %2117 = vdwg.mxu0
    %v2119 = vrot.slane %v2115, 6
    %v2121 = vadd.f32 %v568, %v2119
    %v2122 = vxor.u32 %v2121, 2147483648
    %v2123 = vmul.f32 %v2122, 1.442695
    %v2124 = vpow.pop %v2123
    %v2125 = vadd.f32 %v2124, 1.0
    %v2126 = vrcp.pop %v2125
    %v2127 = vmul.f32 1.0, %v2126
    %v2128 = vtanh.pop %v2121
    %v2130 = vrot.slane %v1615, 7
    %v2132 = vmul.f32 %v2127, %v2130
    %2134 = vrot.lane.b32.xlu0 %v2128, 64
    %v2135 = vpop.permute.xlu0 %2134
    %v2137 = vmul.f32 %v2127, %v2135
    %2139 = vrot.lane.b32.xlu0 %v2137, 32
    %v2140 = vpop.permute.xlu0 %2139
    %v2142 = vadd.f32 %v2132, %v2140
    %v2143 = vtanh.pop %v2142
    %2145 = vrot.lane.b32.xlu0 %v2143, 64
    %v2146 = vpop.permute.xlu0 %2145
    %v2148 = vmul.f32 %v2127, %v2146
    %2150 = vrot.lane.b32.xlu0 %v2148, 32
    %v2151 = vpop.permute.xlu0 %2150
    %vm2153 = vcmask 256002
    %2154 = vst.msk [vmem:[#allocation2] sm:$0x4] %vm2153, %v2151
    %v2155 = vrot.slane %v2148, 2
    %2156 = vrot.lane.b32.xlu0 %v2155, 32
    %v2157 = vpop.permute.xlu0 %2156
    %v2158 = vsel %vm82, %v2157, 0
    %2160 = vmatprep.subr.mxu0 0.0
    %v2161 = vand.u32 %v571, 4294901760
    %2162 = vmatpush1.msra.mxu0 %v2161
    %2163 = vmatprep.subr.mxu0 0.0
    %v2164 = vand.u32 %v572, 4294901760
    %2165 = vmatpush1.msra.mxu0 %v2164
    %2166 = vmatprep.subr.mxu0 0.0
    %v2167 = vand.u32 %v573, 4294901760
    %2168 = vmatpush1.msra.mxu0 %v2167
    %2169 = vmatprep.subr.mxu0 0.0
    %v2170 = vand.u32 %v574, 4294901760
    %2171 = vmatpush1.msra.mxu0 %v2170
    %2172 = vmatprep.subr.mxu0 0.0
    %2173 = vmatpush1.msra.mxu0 0.0
    %2174 = vmatprep.subr.mxu0 0.0
    %2175 = vmatpush1.msra.mxu0 0.0
    %2176 = vmatprep.subr.mxu0 0.0
    %2177 = vmatpush1.msra.mxu0 0.0
    %2178 = vmatprep.subr.mxu0 0.0
    %2179 = vmatpush1.msra.mxu0 0.0
    %2180 = vmatprep.subr.mxu0 0.0
    %2181 = vmatpush1.msra.mxu0 0.0
    %2182 = vmatprep.subr.mxu0 0.0
    %2183 = vmatpush1.msra.mxu0 0.0
    %2184 = vmatprep.subr.mxu0 0.0
    %2185 = vmatpush1.msra.mxu0 0.0
    %2186 = vmatprep.subr.mxu0 0.0
    %2187 = vmatpush1.msra.mxu0 0.0
    %2188 = vmatprep.subr.mxu0 0.0
    %2189 = vmatpush1.msra.mxu0 0.0
    %2190 = vmatprep.subr.mxu0 0.0
    %2191 = vmatpush1.msra.mxu0 0.0
    %2192 = vmatprep.subr.mxu0 0.0
    %2193 = vmatpush1.msra.mxu0 0.0
    %2194 = vmatprep.subr.mxu0 0.0
    %2195 = vmatpush1.msra.mxu0 0.0
    %2196 = vmatprep.subr.mxu0 0.0
    %2197 = vmatpush1.msra.mxu0 0.0
    %2198 = vmatprep.subr.mxu0 0.0
    %2199 = vmatpush1.msra.mxu0 0.0
    %2200 = vmatprep.subr.mxu0 0.0
    %2201 = vmatpush1.msra.mxu0 0.0
    %2202 = vmatprep.subr.mxu0 0.0
    %2203 = vmatpush1.msra.mxu0 0.0
    %2204 = vmatprep.subr.mxu0 0.0
    %2205 = vmatpush1.msra.mxu0 0.0
    %2206 = vmatprep.subr.mxu0 0.0
    %2207 = vmatpush1.msra.mxu0 0.0
    %2208 = vmatprep.subr.mxu0 0.0
    %2209 = vmatpush1.msra.mxu0 0.0
    %2210 = vmatprep.subr.mxu0 0.0
    %2211 = vmatpush1.msra.mxu0 0.0
    %2212 = vmatprep.subr.mxu0 0.0
    %2213 = vmatpush1.msra.mxu0 0.0
    %2214 = vmatprep.subr.mxu0 0.0
    %2215 = vmatpush1.msra.mxu0 0.0
    %2216 = vmatprep.subr.mxu0 0.0
    %2217 = vmatpush1.msra.mxu0 0.0
    %2218 = vmatprep.subr.mxu0 0.0
    %2219 = vmatpush1.msra.mxu0 0.0
    %2220 = vmatprep.subr.mxu0 0.0
    %2221 = vmatpush1.msra.mxu0 0.0
    %2222 = vmatprep.subr.mxu0 0.0
    %2223 = vmatpush1.msra.mxu0 0.0
    %2224 = vmatprep.subr.mxu0 0.0
    %2225 = vmatpush1.msra.mxu0 0.0
    %2226 = vmatprep.subr.mxu0 0.0
    %2227 = vmatpush1.msra.mxu0 0.0
    %2228 = vmatprep.mubr.f32.mxu0 0.0
    %v2229 = vand.u32 %v2158, 4294901760
    %v2230 = vsub.f32 %v2158, %v2229
    %v2231 = vand.u32 %v2230, 4294901760
    %v2232 = vsub.f32 %v2230, %v2231
    %v2233 = vand.u32 %v2232, 4294901760
    %2234 = vmatmul.mubr.f32.gmra.mrb[0].mxu0 %v2233
    %v2235 = vpop.f32.mrb[0].mxu0
    %v2236 = vadd.f32 0.0, %v2235
    %v2237 = vpop.f32.mrb[0].mxu0
    %2238 = vdwg.mxu0
    %2239 = vmatprep.subr.mxu0 0.0
    %v2240 = vand.u32 %v571, 4294901760
    %v2241 = vsub.f32 %v571, %v2240
    %v2242 = vand.u32 %v2241, 4294901760
    %v2243 = vsub.f32 %v2241, %v2242
    %v2244 = vand.u32 %v2243, 4294901760
    %2245 = vmatpush1.msra.mxu0 %v2244
    %2246 = vmatprep.subr.mxu0 0.0
    %v2247 = vand.u32 %v572, 4294901760
    %v2248 = vsub.f32 %v572, %v2247
    %v2249 = vand.u32 %v2248, 4294901760
    %v2250 = vsub.f32 %v2248, %v2249
    %v2251 = vand.u32 %v2250, 4294901760
    %2252 = vmatpush1.msra.mxu0 %v2251
    %2253 = vmatprep.subr.mxu0 0.0
    %v2254 = vand.u32 %v573, 4294901760
    %v2255 = vsub.f32 %v573, %v2254
    %v2256 = vand.u32 %v2255, 4294901760
    %v2257 = vsub.f32 %v2255, %v2256
    %v2258 = vand.u32 %v2257, 4294901760
    %2259 = vmatpush1.msra.mxu0 %v2258
    %2260 = vmatprep.subr.mxu0 0.0
    %v2261 = vand.u32 %v574, 4294901760
    %v2262 = vsub.f32 %v574, %v2261
    %v2263 = vand.u32 %v2262, 4294901760
    %v2264 = vsub.f32 %v2262, %v2263
    %v2265 = vand.u32 %v2264, 4294901760
    %2266 = vmatpush1.msra.mxu0 %v2265
    %2267 = vmatprep.subr.mxu0 0.0
    %2268 = vmatpush1.msra.mxu0 0.0
    %2269 = vmatprep.subr.mxu0 0.0
    %2270 = vmatpush1.msra.mxu0 0.0
    %2271 = vmatprep.subr.mxu0 0.0
    %2272 = vmatpush1.msra.mxu0 0.0
    %2273 = vmatprep.subr.mxu0 0.0
    %2274 = vmatpush1.msra.mxu0 0.0
    %2275 = vmatprep.subr.mxu0 0.0
    %2276 = vmatpush1.msra.mxu0 0.0
    %2277 = vmatprep.subr.mxu0 0.0
    %2278 = vmatpush1.msra.mxu0 0.0
    %2279 = vmatprep.subr.mxu0 0.0
    %2280 = vmatpush1.msra.mxu0 0.0
    %2281 = vmatprep.subr.mxu0 0.0
    %2282 = vmatpush1.msra.mxu0 0.0
    %2283 = vmatprep.subr.mxu0 0.0
    %2284 = vmatpush1.msra.mxu0 0.0
    %2285 = vmatprep.subr.mxu0 0.0
    %2286 = vmatpush1.msra.mxu0 0.0
    %2287 = vmatprep.subr.mxu0 0.0
    %2288 = vmatpush1.msra.mxu0 0.0
    %2289 = vmatprep.subr.mxu0 0.0
    %2290 = vmatpush1.msra.mxu0 0.0
    %2291 = vmatprep.subr.mxu0 0.0
    %2292 = vmatpush1.msra.mxu0 0.0
    %2293 = vmatprep.subr.mxu0 0.0
    %2294 = vmatpush1.msra.mxu0 0.0
    %2295 = vmatprep.subr.mxu0 0.0
    %2296 = vmatpush1.msra.mxu0 0.0
    %2297 = vmatprep.subr.mxu0 0.0
    %2298 = vmatpush1.msra.mxu0 0.0
    %2299 = vmatprep.subr.mxu0 0.0
    %2300 = vmatpush1.msra.mxu0 0.0
    %2301 = vmatprep.subr.mxu0 0.0
    %2302 = vmatpush1.msra.mxu0 0.0
    %2303 = vmatprep.subr.mxu0 0.0
    %2304 = vmatpush1.msra.mxu0 0.0
    %2305 = vmatprep.subr.mxu0 0.0
    %2306 = vmatpush1.msra.mxu0 0.0
    %2307 = vmatprep.subr.mxu0 0.0
    %2308 = vmatpush1.msra.mxu0 0.0
    %2309 = vmatprep.subr.mxu0 0.0
    %2310 = vmatpush1.msra.mxu0 0.0
    %2311 = vmatprep.subr.mxu0 0.0
    %2312 = vmatpush1.msra.mxu0 0.0
    %2313 = vmatprep.subr.mxu0 0.0
    %2314 = vmatpush1.msra.mxu0 0.0
    %2315 = vmatprep.subr.mxu0 0.0
    %2316 = vmatpush1.msra.mxu0 0.0
    %2317 = vmatprep.subr.mxu0 0.0
    %2318 = vmatpush1.msra.mxu0 0.0
    %2319 = vmatprep.subr.mxu0 0.0
    %2320 = vmatpush1.msra.mxu0 0.0
    %2321 = vmatprep.subr.mxu0 0.0
    %2322 = vmatpush1.msra.mxu0 0.0
    %2323 = vmatprep.mubr.f32.mxu0 0.0
    %v2324 = vand.u32 %v2158, 4294901760
    %2325 = vmatmul.mubr.f32.gmra.mrb[0].mxu0 %v2324
    %v2326 = vpop.f32.mrb[0].mxu0
    %v2327 = vadd.f32 %v2236, %v2326
    %v2328 = vpop.f32.mrb[0].mxu0
    %2329 = vdwg.mxu0
    %2330 = vmatprep.subr.mxu0 0.0
    %v2331 = vand.u32 %v571, 4294901760
    %v2332 = vsub.f32 %v571, %v2331
    %2333 = vmatpush1.msra.mxu0 %v2332
    %2334 = vmatprep.subr.mxu0 0.0
    %v2335 = vand.u32 %v572, 4294901760
    %v2336 = vsub.f32 %v572, %v2335
    %2337 = vmatpush1.msra.mxu0 %v2336
    %2338 = vmatprep.subr.mxu0 0.0
    %v2339 = vand.u32 %v573, 4294901760
    %v2340 = vsub.f32 %v573, %v2339
    %2341 = vmatpush1.msra.mxu0 %v2340
    %2342 = vmatprep.subr.mxu0 0.0
    %v2343 = vand.u32 %v574, 4294901760
    %v2344 = vsub.f32 %v574, %v2343
    %2345 = vmatpush1.msra.mxu0 %v2344
    %2346 = vmatprep.subr.mxu0 0.0
    %2347 = vmatpush1.msra.mxu0 0.0
    %2348 = vmatprep.subr.mxu0 0.0
    %2349 = vmatpush1.msra.mxu0 0.0
    %2350 = vmatprep.subr.mxu0 0.0
    %2351 = vmatpush1.msra.mxu0 0.0
    %2352 = vmatprep.subr.mxu0 0.0
    %2353 = vmatpush1.msra.mxu0 0.0
    %2354 = vmatprep.subr.mxu0 0.0
    %2355 = vmatpush1.msra.mxu0 0.0
    %2356 = vmatprep.subr.mxu0 0.0
    %2357 = vmatpush1.msra.mxu0 0.0
    %2358 = vmatprep.subr.mxu0 0.0
    %2359 = vmatpush1.msra.mxu0 0.0
    %2360 = vmatprep.subr.mxu0 0.0
    %2361 = vmatpush1.msra.mxu0 0.0
    %2362 = vmatprep.subr.mxu0 0.0
    %2363 = vmatpush1.msra.mxu0 0.0
    %2364 = vmatprep.subr.mxu0 0.0
    %2365 = vmatpush1.msra.mxu0 0.0
    %2366 = vmatprep.subr.mxu0 0.0
    %2367 = vmatpush1.msra.mxu0 0.0
    %2368 = vmatprep.subr.mxu0 0.0
    %2369 = vmatpush1.msra.mxu0 0.0
    %2370 = vmatprep.subr.mxu0 0.0
    %2371 = vmatpush1.msra.mxu0 0.0
    %2372 = vmatprep.subr.mxu0 0.0
    %2373 = vmatpush1.msra.mxu0 0.0
    %2374 = vmatprep.subr.mxu0 0.0
    %2375 = vmatpush1.msra.mxu0 0.0
    %2376 = vmatprep.subr.mxu0 0.0
    %2377 = vmatpush1.msra.mxu0 0.0
    %2378 = vmatprep.subr.mxu0 0.0
    %2379 = vmatpush1.msra.mxu0 0.0
    %2380 = vmatprep.subr.mxu0 0.0
    %2381 = vmatpush1.msra.mxu0 0.0
    %2382 = vmatprep.subr.mxu0 0.0
    %2383 = vmatpush1.msra.mxu0 0.0
    %2384 = vmatprep.subr.mxu0 0.0
    %2385 = vmatpush1.msra.mxu0 0.0
    %2386 = vmatprep.subr.mxu0 0.0
    %2387 = vmatpush1.msra.mxu0 0.0
    %2388 = vmatprep.subr.mxu0 0.0
    %2389 = vmatpush1.msra.mxu0 0.0
    %2390 = vmatprep.subr.mxu0 0.0
    %2391 = vmatpush1.msra.mxu0 0.0
    %2392 = vmatprep.subr.mxu0 0.0
    %2393 = vmatpush1.msra.mxu0 0.0
    %2394 = vmatprep.subr.mxu0 0.0
    %2395 = vmatpush1.msra.mxu0 0.0
    %2396 = vmatprep.subr.mxu0 0.0
    %2397 = vmatpush1.msra.mxu0 0.0
    %2398 = vmatprep.subr.mxu0 0.0
    %2399 = vmatpush1.msra.mxu0 0.0
    %2400 = vmatprep.subr.mxu0 0.0
    %2401 = vmatpush1.msra.mxu0 0.0
    %2402 = vmatprep.mubr.f32.mxu0 0.0
    %v2403 = vand.u32 %v2158, 4294901760
    %v2404 = vsub.f32 %v2158, %v2403
    %2405 = vmatmul.mubr.f32.gmra.mrb[0].mxu0 %v2404
    %v2406 = vpop.f32.mrb[0].mxu0
    %v2407 = vadd.f32 %v2327, %v2406
    %v2408 = vpop.f32.mrb[0].mxu0
    %2409 = vdwg.mxu0
    %2410 = vmatprep.subr.mxu0 0.0
    %v2411 = vand.u32 %v571, 4294901760
    %2412 = vmatpush1.msra.mxu0 %v2411
    %2413 = vmatprep.subr.mxu0 0.0
    %v2414 = vand.u32 %v572, 4294901760
    %2415 = vmatpush1.msra.mxu0 %v2414
    %2416 = vmatprep.subr.mxu0 0.0
    %v2417 = vand.u32 %v573, 4294901760
    %2418 = vmatpush1.msra.mxu0 %v2417
    %2419 = vmatprep.subr.mxu0 0.0
    %v2420 = vand.u32 %v574, 4294901760
    %2421 = vmatpush1.msra.mxu0 %v2420
    %2422 = vmatprep.subr.mxu0 0.0
    %2423 = vmatpush1.msra.mxu0 0.0
    %2424 = vmatprep.subr.mxu0 0.0
    %2425 = vmatpush1.msra.mxu0 0.0
    %2426 = vmatprep.subr.mxu0 0.0
    %2427 = vmatpush1.msra.mxu0 0.0
    %2428 = vmatprep.subr.mxu0 0.0
    %2429 = vmatpush1.msra.mxu0 0.0
    %2430 = vmatprep.subr.mxu0 0.0
    %2431 = vmatpush1.msra.mxu0 0.0
    %2432 = vmatprep.subr.mxu0 0.0
    %2433 = vmatpush1.msra.mxu0 0.0
    %2434 = vmatprep.subr.mxu0 0.0
    %2435 = vmatpush1.msra.mxu0 0.0
    %2436 = vmatprep.subr.mxu0 0.0
    %2437 = vmatpush1.msra.mxu0 0.0
    %2438 = vmatprep.subr.mxu0 0.0
    %2439 = vmatpush1.msra.mxu0 0.0
    %2440 = vmatprep.subr.mxu0 0.0
    %2441 = vmatpush1.msra.mxu0 0.0
    %2442 = vmatprep.subr.mxu0 0.0
    %2443 = vmatpush1.msra.mxu0 0.0
    %2444 = vmatprep.subr.mxu0 0.0
    %2445 = vmatpush1.msra.mxu0 0.0
    %2446 = vmatprep.subr.mxu0 0.0
    %2447 = vmatpush1.msra.mxu0 0.0
    %2448 = vmatprep.subr.mxu0 0.0
    %2449 = vmatpush1.msra.mxu0 0.0
    %2450 = vmatprep.subr.mxu0 0.0
    %2451 = vmatpush1.msra.mxu0 0.0
    %2452 = vmatprep.subr.mxu0 0.0
    %2453 = vmatpush1.msra.mxu0 0.0
    %2454 = vmatprep.subr.mxu0 0.0
    %2455 = vmatpush1.msra.mxu0 0.0
    %2456 = vmatprep.subr.mxu0 0.0
    %2457 = vmatpush1.msra.mxu0 0.0
    %2458 = vmatprep.subr.mxu0 0.0
    %2459 = vmatpush1.msra.mxu0 0.0
    %2460 = vmatprep.subr.mxu0 0.0
    %2461 = vmatpush1.msra.mxu0 0.0
    %2462 = vmatprep.subr.mxu0 0.0
    %2463 = vmatpush1.msra.mxu0 0.0
    %2464 = vmatprep.subr.mxu0 0.0
    %2465 = vmatpush1.msra.mxu0 0.0
    %2466 = vmatprep.subr.mxu0 0.0
    %2467 = vmatpush1.msra.mxu0 0.0
    %2468 = vmatprep.subr.mxu0 0.0
    %2469 = vmatpush1.msra.mxu0 0.0
    %2470 = vmatprep.subr.mxu0 0.0
    %2471 = vmatpush1.msra.mxu0 0.0
    %2472 = vmatprep.subr.mxu0 0.0
    %2473 = vmatpush1.msra.mxu0 0.0
    %2474 = vmatprep.subr.mxu0 0.0
    %2475 = vmatpush1.msra.mxu0 0.0
    %2476 = vmatprep.subr.mxu0 0.0
    %2477 = vmatpush1.msra.mxu0 0.0
    %2478 = vmatprep.mubr.f32.mxu0 0.0
    %v2479 = vand.u32 %v2158, 4294901760
    %v2480 = vsub.f32 %v2158, %v2479
    %v2481 = vand.u32 %v2480, 4294901760
    %2482 = vmatmul.mubr.f32.gmra.mrb[0].mxu0 %v2481
    %v2483 = vpop.f32.mrb[0].mxu0
    %v2484 = vadd.f32 %v2407, %v2483
    %v2485 = vpop.f32.mrb[0].mxu0
    %2486 = vdwg.mxu0
    %2487 = vmatprep.subr.mxu0 0.0
    %v2488 = vand.u32 %v571, 4294901760
    %v2489 = vsub.f32 %v571, %v2488
    %v2490 = vand.u32 %v2489, 4294901760
    %2491 = vmatpush1.msra.mxu0 %v2490
    %2492 = vmatprep.subr.mxu0 0.0
    %v2493 = vand.u32 %v572, 4294901760
    %v2494 = vsub.f32 %v572, %v2493
    %v2495 = vand.u32 %v2494, 4294901760
    %2496 = vmatpush1.msra.mxu0 %v2495
    %2497 = vmatprep.subr.mxu0 0.0
    %v2498 = vand.u32 %v573, 4294901760
    %v2499 = vsub.f32 %v573, %v2498
    %v2500 = vand.u32 %v2499, 4294901760
    %2501 = vmatpush1.msra.mxu0 %v2500
    %2502 = vmatprep.subr.mxu0 0.0
    %v2503 = vand.u32 %v574, 4294901760
    %v2504 = vsub.f32 %v574, %v2503
    %v2505 = vand.u32 %v2504, 4294901760
    %2506 = vmatpush1.msra.mxu0 %v2505
    %2507 = vmatprep.subr.mxu0 0.0
    %2508 = vmatpush1.msra.mxu0 0.0
    %2509 = vmatprep.subr.mxu0 0.0
    %2510 = vmatpush1.msra.mxu0 0.0
    %2511 = vmatprep.subr.mxu0 0.0
    %2512 = vmatpush1.msra.mxu0 0.0
    %2513 = vmatprep.subr.mxu0 0.0
    %2514 = vmatpush1.msra.mxu0 0.0
    %2515 = vmatprep.subr.mxu0 0.0
    %2516 = vmatpush1.msra.mxu0 0.0
    %2517 = vmatprep.subr.mxu0 0.0
    %2518 = vmatpush1.msra.mxu0 0.0
    %2519 = vmatprep.subr.mxu0 0.0
    %2520 = vmatpush1.msra.mxu0 0.0
    %2521 = vmatprep.subr.mxu0 0.0
    %2522 = vmatpush1.msra.mxu0 0.0
    %2523 = vmatprep.subr.mxu0 0.0
    %2524 = vmatpush1.msra.mxu0 0.0
    %2525 = vmatprep.subr.mxu0 0.0
    %2526 = vmatpush1.msra.mxu0 0.0
    %2527 = vmatprep.subr.mxu0 0.0
    %2528 = vmatpush1.msra.mxu0 0.0
    %2529 = vmatprep.subr.mxu0 0.0
    %2530 = vmatpush1.msra.mxu0 0.0
    %2531 = vmatprep.subr.mxu0 0.0
    %2532 = vmatpush1.msra.mxu0 0.0
    %2533 = vmatprep.subr.mxu0 0.0
    %2534 = vmatpush1.msra.mxu0 0.0
    %2535 = vmatprep.subr.mxu0 0.0
    %2536 = vmatpush1.msra.mxu0 0.0
    %2537 = vmatprep.subr.mxu0 0.0
    %2538 = vmatpush1.msra.mxu0 0.0
    %2539 = vmatprep.subr.mxu0 0.0
    %2540 = vmatpush1.msra.mxu0 0.0
    %2541 = vmatprep.subr.mxu0 0.0
    %2542 = vmatpush1.msra.mxu0 0.0
    %2543 = vmatprep.subr.mxu0 0.0
    %2544 = vmatpush1.msra.mxu0 0.0
    %2545 = vmatprep.subr.mxu0 0.0
    %2546 = vmatpush1.msra.mxu0 0.0
    %2547 = vmatprep.subr.mxu0 0.0
    %2548 = vmatpush1.msra.mxu0 0.0
    %2549 = vmatprep.subr.mxu0 0.0
    %2550 = vmatpush1.msra.mxu0 0.0
    %2551 = vmatprep.subr.mxu0 0.0
    %2552 = vmatpush1.msra.mxu0 0.0
    %2553 = vmatprep.subr.mxu0 0.0
    %2554 = vmatpush1.msra.mxu0 0.0
    %2555 = vmatprep.subr.mxu0 0.0
    %2556 = vmatpush1.msra.mxu0 0.0
    %2557 = vmatprep.subr.mxu0 0.0
    %2558 = vmatpush1.msra.mxu0 0.0
    %2559 = vmatprep.subr.mxu0 0.0
    %2560 = vmatpush1.msra.mxu0 0.0
    %2561 = vmatprep.subr.mxu0 0.0
    %2562 = vmatpush1.msra.mxu0 0.0
    %2563 = vmatprep.mubr.f32.mxu0 0.0
    %v2564 = vand.u32 %v2158, 4294901760
    %2565 = vmatmul.mubr.f32.gmra.mrb[0].mxu0 %v2564
    %v2566 = vpop.f32.mrb[0].mxu0
    %v2567 = vadd.f32 %v2484, %v2566
    %v2568 = vpop.f32.mrb[0].mxu0
    %2569 = vdwg.mxu0
    %2570 = vmatprep.subr.mxu0 0.0
    %v2571 = vand.u32 %v571, 4294901760
    %2572 = vmatpush1.msra.mxu0 %v2571
    %2573 = vmatprep.subr.mxu0 0.0
    %v2574 = vand.u32 %v572, 4294901760
    %2575 = vmatpush1.msra.mxu0 %v2574
    %2576 = vmatprep.subr.mxu0 0.0
    %v2577 = vand.u32 %v573, 4294901760
    %2578 = vmatpush1.msra.mxu0 %v2577
    %2579 = vmatprep.subr.mxu0 0.0
    %v2580 = vand.u32 %v574, 4294901760
    %2581 = vmatpush1.msra.mxu0 %v2580
    %2582 = vmatprep.subr.mxu0 0.0
    %2583 = vmatpush1.msra.mxu0 0.0
    %2584 = vmatprep.subr.mxu0 0.0
    %2585 = vmatpush1.msra.mxu0 0.0
    %2586 = vmatprep.subr.mxu0 0.0
    %2587 = vmatpush1.msra.mxu0 0.0
    %2588 = vmatprep.subr.mxu0 0.0
    %2589 = vmatpush1.msra.mxu0 0.0
    %2590 = vmatprep.subr.mxu0 0.0
    %2591 = vmatpush1.msra.mxu0 0.0
    %2592 = vmatprep.subr.mxu0 0.0
    %2593 = vmatpush1.msra.mxu0 0.0
    %2594 = vmatprep.subr.mxu0 0.0
    %2595 = vmatpush1.msra.mxu0 0.0
    %2596 = vmatprep.subr.mxu0 0.0
    %2597 = vmatpush1.msra.mxu0 0.0
    %2598 = vmatprep.subr.mxu0 0.0
    %2599 = vmatpush1.msra.mxu0 0.0
    %2600 = vmatprep.subr.mxu0 0.0
    %2601 = vmatpush1.msra.mxu0 0.0
    %2602 = vmatprep.subr.mxu0 0.0
    %2603 = vmatpush1.msra.mxu0 0.0
    %2604 = vmatprep.subr.mxu0 0.0
    %2605 = vmatpush1.msra.mxu0 0.0
    %2606 = vmatprep.subr.mxu0 0.0
    %2607 = vmatpush1.msra.mxu0 0.0
    %2608 = vmatprep.subr.mxu0 0.0
    %2609 = vmatpush1.msra.mxu0 0.0
    %2610 = vmatprep.subr.mxu0 0.0
    %2611 = vmatpush1.msra.mxu0 0.0
    %2612 = vmatprep.subr.mxu0 0.0
    %2613 = vmatpush1.msra.mxu0 0.0
    %2614 = vmatprep.subr.mxu0 0.0
    %2615 = vmatpush1.msra.mxu0 0.0
    %2616 = vmatprep.subr.mxu0 0.0
    %2617 = vmatpush1.msra.mxu0 0.0
    %2618 = vmatprep.subr.mxu0 0.0
    %2619 = vmatpush1.msra.mxu0 0.0
    %2620 = vmatprep.subr.mxu0 0.0
    %2621 = vmatpush1.msra.mxu0 0.0
    %2622 = vmatprep.subr.mxu0 0.0
    %2623 = vmatpush1.msra.mxu0 0.0
    %2624 = vmatprep.subr.mxu0 0.0
    %2625 = vmatpush1.msra.mxu0 0.0
    %2626 = vmatprep.subr.mxu0 0.0
    %2627 = vmatpush1.msra.mxu0 0.0
    %2628 = vmatprep.subr.mxu0 0.0
    %2629 = vmatpush1.msra.mxu0 0.0
    %2630 = vmatprep.subr.mxu0 0.0
    %2631 = vmatpush1.msra.mxu0 0.0
    %2632 = vmatprep.subr.mxu0 0.0
    %2633 = vmatpush1.msra.mxu0 0.0
    %2634 = vmatprep.subr.mxu0 0.0
    %2635 = vmatpush1.msra.mxu0 0.0
    %2636 = vmatprep.subr.mxu0 0.0
    %2637 = vmatpush1.msra.mxu0 0.0
    %2638 = vmatprep.mubr.f32.mxu0 0.0
    %v2639 = vand.u32 %v2158, 4294901760
    %2640 = vmatmul.mubr.f32.gmra.mrb[0].mxu0 %v2639
    %v2641 = vpop.f32.mrb[0].mxu0
    %v2642 = vadd.f32 %v2567, %v2641
    %v2643 = vpop.f32.mrb[0].mxu0
    %2644 = vdwg.mxu0
    %v2646 = vrot.slane %v2642, 5
    %v2648 = vadd.f32 %v568, %v2646
    %v2649 = vxor.u32 %v2648, 2147483648
    %v2650 = vmul.f32 %v2649, 1.442695
    %v2651 = vpow.pop %v2650
    %v2652 = vadd.f32 %v2651, 1.0
    %v2653 = vrcp.pop %v2652
    %v2654 = vmul.f32 1.0, %v2653
    %v2655 = vtanh.pop %v2648
    %v2657 = vrot.slane %v2142, 7
    %v2659 = vmul.f32 %v2654, %v2657
    %2661 = vrot.lane.b32.xlu0 %v2655, 64
    %v2662 = vpop.permute.xlu0 %2661
    %v2664 = vmul.f32 %v2654, %v2662
    %2666 = vrot.lane.b32.xlu0 %v2664, 32
    %v2667 = vpop.permute.xlu0 %2666
    %v2669 = vadd.f32 %v2659, %v2667
    %v2670 = vtanh.pop %v2669
    %2672 = vrot.lane.b32.xlu0 %v2670, 64
    %v2673 = vpop.permute.xlu0 %2672
    %v2675 = vmul.f32 %v2654, %v2673
    %2677 = vrot.lane.b32.xlu0 %v2675, 32
    %v2678 = vpop.permute.xlu0 %2677
    %vm2680 = vcmask 257027
    %2681 = vst.msk [vmem:[#allocation2] sm:$0x8] %vm2680, %v2678
    %v2682 = vrot.slane %v2675, 3
    %2683 = vrot.lane.b32.xlu0 %v2682, 32
    %v2684 = vpop.permute.xlu0 %2683
    %v2685 = vsel %vm82, %v2684, 0
    %2687 = vmatprep.subr.mxu0 0.0
    %v2688 = vand.u32 %v571, 4294901760
    %2689 = vmatpush1.msra.mxu0 %v2688
    %2690 = vmatprep.subr.mxu0 0.0
    %v2691 = vand.u32 %v572, 4294901760
    %2692 = vmatpush1.msra.mxu0 %v2691
    %2693 = vmatprep.subr.mxu0 0.0
    %v2694 = vand.u32 %v573, 4294901760
    %2695 = vmatpush1.msra.mxu0 %v2694
    %2696 = vmatprep.subr.mxu0 0.0
    %v2697 = vand.u32 %v574, 4294901760
    %2698 = vmatpush1.msra.mxu0 %v2697
    %2699 = vmatprep.subr.mxu0 0.0
    %2700 = vmatpush1.msra.mxu0 0.0
    %2701 = vmatprep.subr.mxu0 0.0
    %2702 = vmatpush1.msra.mxu0 0.0
    %2703 = vmatprep.subr.mxu0 0.0
    %2704 = vmatpush1.msra.mxu0 0.0
    %2705 = vmatprep.subr.mxu0 0.0
    %2706 = vmatpush1.msra.mxu0 0.0
    %2707 = vmatprep.subr.mxu0 0.0
    %2708 = vmatpush1.msra.mxu0 0.0
    %2709 = vmatprep.subr.mxu0 0.0
    %2710 = vmatpush1.msra.mxu0 0.0
    %2711 = vmatprep.subr.mxu0 0.0
    %2712 = vmatpush1.msra.mxu0 0.0
    %2713 = vmatprep.subr.mxu0 0.0
    %2714 = vmatpush1.msra.mxu0 0.0
    %2715 = vmatprep.subr.mxu0 0.0
    %2716 = vmatpush1.msra.mxu0 0.0
    %2717 = vmatprep.subr.mxu0 0.0
    %2718 = vmatpush1.msra.mxu0 0.0
    %2719 = vmatprep.subr.mxu0 0.0
    %2720 = vmatpush1.msra.mxu0 0.0
    %2721 = vmatprep.subr.mxu0 0.0
    %2722 = vmatpush1.msra.mxu0 0.0
    %2723 = vmatprep.subr.mxu0 0.0
    %2724 = vmatpush1.msra.mxu0 0.0
    %2725 = vmatprep.subr.mxu0 0.0
    %2726 = vmatpush1.msra.mxu0 0.0
    %2727 = vmatprep.subr.mxu0 0.0
    %2728 = vmatpush1.msra.mxu0 0.0
    %2729 = vmatprep.subr.mxu0 0.0
    %2730 = vmatpush1.msra.mxu0 0.0
    %2731 = vmatprep.subr.mxu0 0.0
    %2732 = vmatpush1.msra.mxu0 0.0
    %2733 = vmatprep.subr.mxu0 0.0
    %2734 = vmatpush1.msra.mxu0 0.0
    %2735 = vmatprep.subr.mxu0 0.0
    %2736 = vmatpush1.msra.mxu0 0.0
    %2737 = vmatprep.subr.mxu0 0.0
    %2738 = vmatpush1.msra.mxu0 0.0
    %2739 = vmatprep.subr.mxu0 0.0
    %2740 = vmatpush1.msra.mxu0 0.0
    %2741 = vmatprep.subr.mxu0 0.0
    %2742 = vmatpush1.msra.mxu0 0.0
    %2743 = vmatprep.subr.mxu0 0.0
    %2744 = vmatpush1.msra.mxu0 0.0
    %2745 = vmatprep.subr.mxu0 0.0
    %2746 = vmatpush1.msra.mxu0 0.0
    %2747 = vmatprep.subr.mxu0 0.0
    %2748 = vmatpush1.msra.mxu0 0.0
    %2749 = vmatprep.subr.mxu0 0.0
    %2750 = vmatpush1.msra.mxu0 0.0
    %2751 = vmatprep.subr.mxu0 0.0
    %2752 = vmatpush1.msra.mxu0 0.0
    %2753 = vmatprep.subr.mxu0 0.0
    %2754 = vmatpush1.msra.mxu0 0.0
    %2755 = vmatprep.mubr.f32.mxu0 0.0
    %v2756 = vand.u32 %v2685, 4294901760
    %v2757 = vsub.f32 %v2685, %v2756
    %v2758 = vand.u32 %v2757, 4294901760
    %v2759 = vsub.f32 %v2757, %v2758
    %v2760 = vand.u32 %v2759, 4294901760
    %2761 = vmatmul.mubr.f32.gmra.mrb[0].mxu0 %v2760
    %v2762 = vpop.f32.mrb[0].mxu0
    %v2763 = vadd.f32 0.0, %v2762
    %v2764 = vpop.f32.mrb[0].mxu0
    %2765 = vdwg.mxu0
    %2766 = vmatprep.subr.mxu0 0.0
    %v2767 = vand.u32 %v571, 4294901760
    %v2768 = vsub.f32 %v571, %v2767
    %v2769 = vand.u32 %v2768, 4294901760
    %v2770 = vsub.f32 %v2768, %v2769
    %v2771 = vand.u32 %v2770, 4294901760
    %2772 = vmatpush1.msra.mxu0 %v2771
    %2773 = vmatprep.subr.mxu0 0.0
    %v2774 = vand.u32 %v572, 4294901760
    %v2775 = vsub.f32 %v572, %v2774
    %v2776 = vand.u32 %v2775, 4294901760
    %v2777 = vsub.f32 %v2775, %v2776
    %v2778 = vand.u32 %v2777, 4294901760
    %2779 = vmatpush1.msra.mxu0 %v2778
    %2780 = vmatprep.subr.mxu0 0.0
    %v2781 = vand.u32 %v573, 4294901760
    %v2782 = vsub.f32 %v573, %v2781
    %v2783 = vand.u32 %v2782, 4294901760
    %v2784 = vsub.f32 %v2782, %v2783
    %v2785 = vand.u32 %v2784, 4294901760
    %2786 = vmatpush1.msra.mxu0 %v2785
    %2787 = vmatprep.subr.mxu0 0.0
    %v2788 = vand.u32 %v574, 4294901760
    %v2789 = vsub.f32 %v574, %v2788
    %v2790 = vand.u32 %v2789, 4294901760
    %v2791 = vsub.f32 %v2789, %v2790
    %v2792 = vand.u32 %v2791, 4294901760
    %2793 = vmatpush1.msra.mxu0 %v2792
    %2794 = vmatprep.subr.mxu0 0.0
    %2795 = vmatpush1.msra.mxu0 0.0
    %2796 = vmatprep.subr.mxu0 0.0
    %2797 = vmatpush1.msra.mxu0 0.0
    %2798 = vmatprep.subr.mxu0 0.0
    %2799 = vmatpush1.msra.mxu0 0.0
    %2800 = vmatprep.subr.mxu0 0.0
    %2801 = vmatpush1.msra.mxu0 0.0
    %2802 = vmatprep.subr.mxu0 0.0
    %2803 = vmatpush1.msra.mxu0 0.0
    %2804 = vmatprep.subr.mxu0 0.0
    %2805 = vmatpush1.msra.mxu0 0.0
    %2806 = vmatprep.subr.mxu0 0.0
    %2807 = vmatpush1.msra.mxu0 0.0
    %2808 = vmatprep.subr.mxu0 0.0
    %2809 = vmatpush1.msra.mxu0 0.0
    %2810 = vmatprep.subr.mxu0 0.0
    %2811 = vmatpush1.msra.mxu0 0.0
    %2812 = vmatprep.subr.mxu0 0.0
    %2813 = vmatpush1.msra.mxu0 0.0
    %2814 = vmatprep.subr.mxu0 0.0
    %2815 = vmatpush1.msra.mxu0 0.0
    %2816 = vmatprep.subr.mxu0 0.0
    %2817 = vmatpush1.msra.mxu0 0.0
    %2818 = vmatprep.subr.mxu0 0.0
    %2819 = vmatpush1.msra.mxu0 0.0
    %2820 = vmatprep.subr.mxu0 0.0
    %2821 = vmatpush1.msra.mxu0 0.0
    %2822 = vmatprep.subr.mxu0 0.0
    %2823 = vmatpush1.msra.mxu0 0.0
    %2824 = vmatprep.subr.mxu0 0.0
    %2825 = vmatpush1.msra.mxu0 0.0
    %2826 = vmatprep.subr.mxu0 0.0
    %2827 = vmatpush1.msra.mxu0 0.0
    %2828 = vmatprep.subr.mxu0 0.0
    %2829 = vmatpush1.msra.mxu0 0.0
    %2830 = vmatprep.subr.mxu0 0.0
    %2831 = vmatpush1.msra.mxu0 0.0
    %2832 = vmatprep.subr.mxu0 0.0
    %2833 = vmatpush1.msra.mxu0 0.0
    %2834 = vmatprep.subr.mxu0 0.0
    %2835 = vmatpush1.msra.mxu0 0.0
    %2836 = vmatprep.subr.mxu0 0.0
    %2837 = vmatpush1.msra.mxu0 0.0
    %2838 = vmatprep.subr.mxu0 0.0
    %2839 = vmatpush1.msra.mxu0 0.0
    %2840 = vmatprep.subr.mxu0 0.0
    %2841 = vmatpush1.msra.mxu0 0.0
    %2842 = vmatprep.subr.mxu0 0.0
    %2843 = vmatpush1.msra.mxu0 0.0
    %2844 = vmatprep.subr.mxu0 0.0
    %2845 = vmatpush1.msra.mxu0 0.0
    %2846 = vmatprep.subr.mxu0 0.0
    %2847 = vmatpush1.msra.mxu0 0.0
    %2848 = vmatprep.subr.mxu0 0.0
    %2849 = vmatpush1.msra.mxu0 0.0
    %2850 = vmatprep.mubr.f32.mxu0 0.0
    %v2851 = vand.u32 %v2685, 4294901760
    %2852 = vmatmul.mubr.f32.gmra.mrb[0].mxu0 %v2851
    %v2853 = vpop.f32.mrb[0].mxu0
    %v2854 = vadd.f32 %v2763, %v2853
    %v2855 = vpop.f32.mrb[0].mxu0
    %2856 = vdwg.mxu0
    %2857 = vmatprep.subr.mxu0 0.0
    %v2858 = vand.u32 %v571, 4294901760
    %v2859 = vsub.f32 %v571, %v2858
    %2860 = vmatpush1.msra.mxu0 %v2859
    %2861 = vmatprep.subr.mxu0 0.0
    %v2862 = vand.u32 %v572, 4294901760
    %v2863 = vsub.f32 %v572, %v2862
    %2864 = vmatpush1.msra.mxu0 %v2863
    %2865 = vmatprep.subr.mxu0 0.0
    %v2866 = vand.u32 %v573, 4294901760
    %v2867 = vsub.f32 %v573, %v2866
    %2868 = vmatpush1.msra.mxu0 %v2867
    %2869 = vmatprep.subr.mxu0 0.0
    %v2870 = vand.u32 %v574, 4294901760
    %v2871 = vsub.f32 %v574, %v2870
    %2872 = vmatpush1.msra.mxu0 %v2871
    %2873 = vmatprep.subr.mxu0 0.0
    %2874 = vmatpush1.msra.mxu0 0.0
    %2875 = vmatprep.subr.mxu0 0.0
    %2876 = vmatpush1.msra.mxu0 0.0
    %2877 = vmatprep.subr.mxu0 0.0
    %2878 = vmatpush1.msra.mxu0 0.0
    %2879 = vmatprep.subr.mxu0 0.0
    %2880 = vmatpush1.msra.mxu0 0.0
    %2881 = vmatprep.subr.mxu0 0.0
    %2882 = vmatpush1.msra.mxu0 0.0
    %2883 = vmatprep.subr.mxu0 0.0
    %2884 = vmatpush1.msra.mxu0 0.0
    %2885 = vmatprep.subr.mxu0 0.0
    %2886 = vmatpush1.msra.mxu0 0.0
    %2887 = vmatprep.subr.mxu0 0.0
    %2888 = vmatpush1.msra.mxu0 0.0
    %2889 = vmatprep.subr.mxu0 0.0
    %2890 = vmatpush1.msra.mxu0 0.0
    %2891 = vmatprep.subr.mxu0 0.0
    %2892 = vmatpush1.msra.mxu0 0.0
    %2893 = vmatprep.subr.mxu0 0.0
    %2894 = vmatpush1.msra.mxu0 0.0
    %2895 = vmatprep.subr.mxu0 0.0
    %2896 = vmatpush1.msra.mxu0 0.0
    %2897 = vmatprep.subr.mxu0 0.0
    %2898 = vmatpush1.msra.mxu0 0.0
    %2899 = vmatprep.subr.mxu0 0.0
    %2900 = vmatpush1.msra.mxu0 0.0
    %2901 = vmatprep.subr.mxu0 0.0
    %2902 = vmatpush1.msra.mxu0 0.0
    %2903 = vmatprep.subr.mxu0 0.0
    %2904 = vmatpush1.msra.mxu0 0.0
    %2905 = vmatprep.subr.mxu0 0.0
    %2906 = vmatpush1.msra.mxu0 0.0
    %2907 = vmatprep.subr.mxu0 0.0
    %2908 = vmatpush1.msra.mxu0 0.0
    %2909 = vmatprep.subr.mxu0 0.0
    %2910 = vmatpush1.msra.mxu0 0.0
    %2911 = vmatprep.subr.mxu0 0.0
    %2912 = vmatpush1.msra.mxu0 0.0
    %2913 = vmatprep.subr.mxu0 0.0
    %2914 = vmatpush1.msra.mxu0 0.0
    %2915 = vmatprep.subr.mxu0 0.0
    %2916 = vmatpush1.msra.mxu0 0.0
    %2917 = vmatprep.subr.mxu0 0.0
    %2918 = vmatpush1.msra.mxu0 0.0
    %2919 = vmatprep.subr.mxu0 0.0
    %2920 = vmatpush1.msra.mxu0 0.0
    %2921 = vmatprep.subr.mxu0 0.0
    %2922 = vmatpush1.msra.mxu0 0.0
    %2923 = vmatprep.subr.mxu0 0.0
    %2924 = vmatpush1.msra.mxu0 0.0
    %2925 = vmatprep.subr.mxu0 0.0
    %2926 = vmatpush1.msra.mxu0 0.0
    %2927 = vmatprep.subr.mxu0 0.0
    %2928 = vmatpush1.msra.mxu0 0.0
    %2929 = vmatprep.mubr.f32.mxu0 0.0
    %v2930 = vand.u32 %v2685, 4294901760
    %v2931 = vsub.f32 %v2685, %v2930
    %2932 = vmatmul.mubr.f32.gmra.mrb[0].mxu0 %v2931
    %v2933 = vpop.f32.mrb[0].mxu0
    %v2934 = vadd.f32 %v2854, %v2933
    %v2935 = vpop.f32.mrb[0].mxu0
    %2936 = vdwg.mxu0
    %2937 = vmatprep.subr.mxu0 0.0
    %v2938 = vand.u32 %v571, 4294901760
    %2939 = vmatpush1.msra.mxu0 %v2938
    %2940 = vmatprep.subr.mxu0 0.0
    %v2941 = vand.u32 %v572, 4294901760
    %2942 = vmatpush1.msra.mxu0 %v2941
    %2943 = vmatprep.subr.mxu0 0.0
    %v2944 = vand.u32 %v573, 4294901760
    %2945 = vmatpush1.msra.mxu0 %v2944
    %2946 = vmatprep.subr.mxu0 0.0
    %v2947 = vand.u32 %v574, 4294901760
    %2948 = vmatpush1.msra.mxu0 %v2947
    %2949 = vmatprep.subr.mxu0 0.0
    %2950 = vmatpush1.msra.mxu0 0.0
    %2951 = vmatprep.subr.mxu0 0.0
    %2952 = vmatpush1.msra.mxu0 0.0
    %2953 = vmatprep.subr.mxu0 0.0
    %2954 = vmatpush1.msra.mxu0 0.0
    %2955 = vmatprep.subr.mxu0 0.0
    %2956 = vmatpush1.msra.mxu0 0.0
    %2957 = vmatprep.subr.mxu0 0.0
    %2958 = vmatpush1.msra.mxu0 0.0
    %2959 = vmatprep.subr.mxu0 0.0
    %2960 = vmatpush1.msra.mxu0 0.0
    %2961 = vmatprep.subr.mxu0 0.0
    %2962 = vmatpush1.msra.mxu0 0.0
    %2963 = vmatprep.subr.mxu0 0.0
    %2964 = vmatpush1.msra.mxu0 0.0
    %2965 = vmatprep.subr.mxu0 0.0
    %2966 = vmatpush1.msra.mxu0 0.0
    %2967 = vmatprep.subr.mxu0 0.0
    %2968 = vmatpush1.msra.mxu0 0.0
    %2969 = vmatprep.subr.mxu0 0.0
    %2970 = vmatpush1.msra.mxu0 0.0
    %2971 = vmatprep.subr.mxu0 0.0
    %2972 = vmatpush1.msra.mxu0 0.0
    %2973 = vmatprep.subr.mxu0 0.0
    %2974 = vmatpush1.msra.mxu0 0.0
    %2975 = vmatprep.subr.mxu0 0.0
    %2976 = vmatpush1.msra.mxu0 0.0
    %2977 = vmatprep.subr.mxu0 0.0
    %2978 = vmatpush1.msra.mxu0 0.0
    %2979 = vmatprep.subr.mxu0 0.0
    %2980 = vmatpush1.msra.mxu0 0.0
    %2981 = vmatprep.subr.mxu0 0.0
    %2982 = vmatpush1.msra.mxu0 0.0
    %2983 = vmatprep.subr.mxu0 0.0
    %2984 = vmatpush1.msra.mxu0 0.0
    %2985 = vmatprep.subr.mxu0 0.0
    %2986 = vmatpush1.msra.mxu0 0.0
    %2987 = vmatprep.subr.mxu0 0.0
    %2988 = vmatpush1.msra.mxu0 0.0
    %2989 = vmatprep.subr.mxu0 0.0
    %2990 = vmatpush1.msra.mxu0 0.0
    %2991 = vmatprep.subr.mxu0 0.0
    %2992 = vmatpush1.msra.mxu0 0.0
    %2993 = vmatprep.subr.mxu0 0.0
    %2994 = vmatpush1.msra.mxu0 0.0
    %2995 = vmatprep.subr.mxu0 0.0
    %2996 = vmatpush1.msra.mxu0 0.0
    %2997 = vmatprep.subr.mxu0 0.0
    %2998 = vmatpush1.msra.mxu0 0.0
    %2999 = vmatprep.subr.mxu0 0.0
    %3000 = vmatpush1.msra.mxu0 0.0
    %3001 = vmatprep.subr.mxu0 0.0
    %3002 = vmatpush1.msra.mxu0 0.0
    %3003 = vmatprep.subr.mxu0 0.0
    %3004 = vmatpush1.msra.mxu0 0.0
    %3005 = vmatprep.mubr.f32.mxu0 0.0
    %v3006 = vand.u32 %v2685, 4294901760
    %v3007 = vsub.f32 %v2685, %v3006
    %v3008 = vand.u32 %v3007, 4294901760
    %3009 = vmatmul.mubr.f32.gmra.mrb[0].mxu0 %v3008
    %v3010 = vpop.f32.mrb[0].mxu0
    %v3011 = vadd.f32 %v2934, %v3010
    %v3012 = vpop.f32.mrb[0].mxu0
    %3013 = vdwg.mxu0
    %3014 = vmatprep.subr.mxu0 0.0
    %v3015 = vand.u32 %v571, 4294901760
    %v3016 = vsub.f32 %v571, %v3015
    %v3017 = vand.u32 %v3016, 4294901760
    %3018 = vmatpush1.msra.mxu0 %v3017
    %3019 = vmatprep.subr.mxu0 0.0
    %v3020 = vand.u32 %v572, 4294901760
    %v3021 = vsub.f32 %v572, %v3020
    %v3022 = vand.u32 %v3021, 4294901760
    %3023 = vmatpush1.msra.mxu0 %v3022
    %3024 = vmatprep.subr.mxu0 0.0
    %v3025 = vand.u32 %v573, 4294901760
    %v3026 = vsub.f32 %v573, %v3025
    %v3027 = vand.u32 %v3026, 4294901760
    %3028 = vmatpush1.msra.mxu0 %v3027
    %3029 = vmatprep.subr.mxu0 0.0
    %v3030 = vand.u32 %v574, 4294901760
    %v3031 = vsub.f32 %v574, %v3030
    %v3032 = vand.u32 %v3031, 4294901760
    %3033 = vmatpush1.msra.mxu0 %v3032
    %3034 = vmatprep.subr.mxu0 0.0
    %3035 = vmatpush1.msra.mxu0 0.0
    %3036 = vmatprep.subr.mxu0 0.0
    %3037 = vmatpush1.msra.mxu0 0.0
    %3038 = vmatprep.subr.mxu0 0.0
    %3039 = vmatpush1.msra.mxu0 0.0
    %3040 = vmatprep.subr.mxu0 0.0
    %3041 = vmatpush1.msra.mxu0 0.0
    %3042 = vmatprep.subr.mxu0 0.0
    %3043 = vmatpush1.msra.mxu0 0.0
    %3044 = vmatprep.subr.mxu0 0.0
    %3045 = vmatpush1.msra.mxu0 0.0
    %3046 = vmatprep.subr.mxu0 0.0
    %3047 = vmatpush1.msra.mxu0 0.0
    %3048 = vmatprep.subr.mxu0 0.0
    %3049 = vmatpush1.msra.mxu0 0.0
    %3050 = vmatprep.subr.mxu0 0.0
    %3051 = vmatpush1.msra.mxu0 0.0
    %3052 = vmatprep.subr.mxu0 0.0
    %3053 = vmatpush1.msra.mxu0 0.0
    %3054 = vmatprep.subr.mxu0 0.0
    %3055 = vmatpush1.msra.mxu0 0.0
    %3056 = vmatprep.subr.mxu0 0.0
    %3057 = vmatpush1.msra.mxu0 0.0
    %3058 = vmatprep.subr.mxu0 0.0
    %3059 = vmatpush1.msra.mxu0 0.0
    %3060 = vmatprep.subr.mxu0 0.0
    %3061 = vmatpush1.msra.mxu0 0.0
    %3062 = vmatprep.subr.mxu0 0.0
    %3063 = vmatpush1.msra.mxu0 0.0
    %3064 = vmatprep.subr.mxu0 0.0
    %3065 = vmatpush1.msra.mxu0 0.0
    %3066 = vmatprep.subr.mxu0 0.0
    %3067 = vmatpush1.msra.mxu0 0.0
    %3068 = vmatprep.subr.mxu0 0.0
    %3069 = vmatpush1.msra.mxu0 0.0
    %3070 = vmatprep.subr.mxu0 0.0
    %3071 = vmatpush1.msra.mxu0 0.0
    %3072 = vmatprep.subr.mxu0 0.0
    %3073 = vmatpush1.msra.mxu0 0.0
    %3074 = vmatprep.subr.mxu0 0.0
    %3075 = vmatpush1.msra.mxu0 0.0
    %3076 = vmatprep.subr.mxu0 0.0
    %3077 = vmatpush1.msra.mxu0 0.0
    %3078 = vmatprep.subr.mxu0 0.0
    %3079 = vmatpush1.msra.mxu0 0.0
    %3080 = vmatprep.subr.mxu0 0.0
    %3081 = vmatpush1.msra.mxu0 0.0
    %3082 = vmatprep.subr.mxu0 0.0
    %3083 = vmatpush1.msra.mxu0 0.0
    %3084 = vmatprep.subr.mxu0 0.0
    %3085 = vmatpush1.msra.mxu0 0.0
    %3086 = vmatprep.subr.mxu0 0.0
    %3087 = vmatpush1.msra.mxu0 0.0
    %3088 = vmatprep.subr.mxu0 0.0
    %3089 = vmatpush1.msra.mxu0 0.0
    %3090 = vmatprep.mubr.f32.mxu0 0.0
    %v3091 = vand.u32 %v2685, 4294901760
    %3092 = vmatmul.mubr.f32.gmra.mrb[0].mxu0 %v3091
    %v3093 = vpop.f32.mrb[0].mxu0
    %v3094 = vadd.f32 %v3011, %v3093
    %v3095 = vpop.f32.mrb[0].mxu0
    %3096 = vdwg.mxu0
    %3097 = vmatprep.subr.mxu0 0.0
    %v3098 = vand.u32 %v571, 4294901760
    %3099 = vmatpush1.msra.mxu0 %v3098
    %3100 = vmatprep.subr.mxu0 0.0
    %v3101 = vand.u32 %v572, 4294901760
    %3102 = vmatpush1.msra.mxu0 %v3101
    %3103 = vmatprep.subr.mxu0 0.0
    %v3104 = vand.u32 %v573, 4294901760
    %3105 = vmatpush1.msra.mxu0 %v3104
    %3106 = vmatprep.subr.mxu0 0.0
    %v3107 = vand.u32 %v574, 4294901760
    %3108 = vmatpush1.msra.mxu0 %v3107
    %3109 = vmatprep.subr.mxu0 0.0
    %3110 = vmatpush1.msra.mxu0 0.0
    %3111 = vmatprep.subr.mxu0 0.0
    %3112 = vmatpush1.msra.mxu0 0.0
    %3113 = vmatprep.subr.mxu0 0.0
    %3114 = vmatpush1.msra.mxu0 0.0
    %3115 = vmatprep.subr.mxu0 0.0
    %3116 = vmatpush1.msra.mxu0 0.0
    %3117 = vmatprep.subr.mxu0 0.0
    %3118 = vmatpush1.msra.mxu0 0.0
    %3119 = vmatprep.subr.mxu0 0.0
    %3120 = vmatpush1.msra.mxu0 0.0
    %3121 = vmatprep.subr.mxu0 0.0
    %3122 = vmatpush1.msra.mxu0 0.0
    %3123 = vmatprep.subr.mxu0 0.0
    %3124 = vmatpush1.msra.mxu0 0.0
    %3125 = vmatprep.subr.mxu0 0.0
    %3126 = vmatpush1.msra.mxu0 0.0
    %3127 = vmatprep.subr.mxu0 0.0
    %3128 = vmatpush1.msra.mxu0 0.0
    %3129 = vmatprep.subr.mxu0 0.0
    %3130 = vmatpush1.msra.mxu0 0.0
    %3131 = vmatprep.subr.mxu0 0.0
    %3132 = vmatpush1.msra.mxu0 0.0
    %3133 = vmatprep.subr.mxu0 0.0
    %3134 = vmatpush1.msra.mxu0 0.0
    %3135 = vmatprep.subr.mxu0 0.0
    %3136 = vmatpush1.msra.mxu0 0.0
    %3137 = vmatprep.subr.mxu0 0.0
    %3138 = vmatpush1.msra.mxu0 0.0
    %3139 = vmatprep.subr.mxu0 0.0
    %3140 = vmatpush1.msra.mxu0 0.0
    %3141 = vmatprep.subr.mxu0 0.0
    %3142 = vmatpush1.msra.mxu0 0.0
    %3143 = vmatprep.subr.mxu0 0.0
    %3144 = vmatpush1.msra.mxu0 0.0
    %3145 = vmatprep.subr.mxu0 0.0
    %3146 = vmatpush1.msra.mxu0 0.0
    %3147 = vmatprep.subr.mxu0 0.0
    %3148 = vmatpush1.msra.mxu0 0.0
    %3149 = vmatprep.subr.mxu0 0.0
    %3150 = vmatpush1.msra.mxu0 0.0
    %3151 = vmatprep.subr.mxu0 0.0
    %3152 = vmatpush1.msra.mxu0 0.0
    %3153 = vmatprep.subr.mxu0 0.0
    %3154 = vmatpush1.msra.mxu0 0.0
    %3155 = vmatprep.subr.mxu0 0.0
    %3156 = vmatpush1.msra.mxu0 0.0
    %3157 = vmatprep.subr.mxu0 0.0
    %3158 = vmatpush1.msra.mxu0 0.0
    %3159 = vmatprep.subr.mxu0 0.0
    %3160 = vmatpush1.msra.mxu0 0.0
    %3161 = vmatprep.subr.mxu0 0.0
    %3162 = vmatpush1.msra.mxu0 0.0
    %3163 = vmatprep.subr.mxu0 0.0
    %3164 = vmatpush1.msra.mxu0 0.0
    %3165 = vmatprep.mubr.f32.mxu0 0.0
    %v3166 = vand.u32 %v2685, 4294901760
    %3167 = vmatmul.mubr.f32.gmra.mrb[0].mxu0 %v3166
    %v3168 = vpop.f32.mrb[0].mxu0
    %v3169 = vadd.f32 %v3094, %v3168
    %v3170 = vpop.f32.mrb[0].mxu0
    %3171 = vdwg.mxu0
    %v3173 = vrot.slane %v3169, 4
    %v3175 = vadd.f32 %v568, %v3173
    %v3176 = vxor.u32 %v3175, 2147483648
    %v3177 = vmul.f32 %v3176, 1.442695
    %v3178 = vpow.pop %v3177
    %v3179 = vadd.f32 %v3178, 1.0
    %v3180 = vrcp.pop %v3179
    %v3181 = vmul.f32 1.0, %v3180
    %v3182 = vtanh.pop %v3175
    %v3184 = vrot.slane %v2669, 7
    %v3186 = vmul.f32 %v3181, %v3184
    %3188 = vrot.lane.b32.xlu0 %v3182, 64
    %v3189 = vpop.permute.xlu0 %3188
    %v3191 = vmul.f32 %v3181, %v3189
    %3193 = vrot.lane.b32.xlu0 %v3191, 32
    %v3194 = vpop.permute.xlu0 %3193
    %v3196 = vadd.f32 %v3186, %v3194
    %v3197 = vtanh.pop %v3196
    %3199 = vrot.lane.b32.xlu0 %v3197, 64
    %v3200 = vpop.permute.xlu0 %3199
    %v3202 = vmul.f32 %v3181, %v3200
    %3204 = vrot.lane.b32.xlu0 %v3202, 32
    %v3205 = vpop.permute.xlu0 %3204
    %vm3207 = vcmask 258052
    %3208 = vst.msk [vmem:[#allocation2] sm:$0x10] %vm3207, %v3205
    %v3209 = vrot.slane %v3202, 4
    %3210 = vrot.lane.b32.xlu0 %v3209, 32
    %v3211 = vpop.permute.xlu0 %3210
    %v3212 = vsel %vm82, %v3211, 0
    %3214 = vmatprep.subr.mxu0 0.0
    %v3215 = vand.u32 %v571, 4294901760
    %3216 = vmatpush1.msra.mxu0 %v3215
    %3217 = vmatprep.subr.mxu0 0.0
    %v3218 = vand.u32 %v572, 4294901760
    %3219 = vmatpush1.msra.mxu0 %v3218
    %3220 = vmatprep.subr.mxu0 0.0
    %v3221 = vand.u32 %v573, 4294901760
    %3222 = vmatpush1.msra.mxu0 %v3221
    %3223 = vmatprep.subr.mxu0 0.0
    %v3224 = vand.u32 %v574, 4294901760
    %3225 = vmatpush1.msra.mxu0 %v3224
    %3226 = vmatprep.subr.mxu0 0.0
    %3227 = vmatpush1.msra.mxu0 0.0
    %3228 = vmatprep.subr.mxu0 0.0
    %3229 = vmatpush1.msra.mxu0 0.0
    %3230 = vmatprep.subr.mxu0 0.0
    %3231 = vmatpush1.msra.mxu0 0.0
    %3232 = vmatprep.subr.mxu0 0.0
    %3233 = vmatpush1.msra.mxu0 0.0
    %3234 = vmatprep.subr.mxu0 0.0
    %3235 = vmatpush1.msra.mxu0 0.0
    %3236 = vmatprep.subr.mxu0 0.0
    %3237 = vmatpush1.msra.mxu0 0.0
    %3238 = vmatprep.subr.mxu0 0.0
    %3239 = vmatpush1.msra.mxu0 0.0
    %3240 = vmatprep.subr.mxu0 0.0
    %3241 = vmatpush1.msra.mxu0 0.0
    %3242 = vmatprep.subr.mxu0 0.0
    %3243 = vmatpush1.msra.mxu0 0.0
    %3244 = vmatprep.subr.mxu0 0.0
    %3245 = vmatpush1.msra.mxu0 0.0
    %3246 = vmatprep.subr.mxu0 0.0
    %3247 = vmatpush1.msra.mxu0 0.0
    %3248 = vmatprep.subr.mxu0 0.0
    %3249 = vmatpush1.msra.mxu0 0.0
    %3250 = vmatprep.subr.mxu0 0.0
    %3251 = vmatpush1.msra.mxu0 0.0
    %3252 = vmatprep.subr.mxu0 0.0
    %3253 = vmatpush1.msra.mxu0 0.0
    %3254 = vmatprep.subr.mxu0 0.0
    %3255 = vmatpush1.msra.mxu0 0.0
    %3256 = vmatprep.subr.mxu0 0.0
    %3257 = vmatpush1.msra.mxu0 0.0
    %3258 = vmatprep.subr.mxu0 0.0
    %3259 = vmatpush1.msra.mxu0 0.0
    %3260 = vmatprep.subr.mxu0 0.0
    %3261 = vmatpush1.msra.mxu0 0.0
    %3262 = vmatprep.subr.mxu0 0.0
    %3263 = vmatpush1.msra.mxu0 0.0
    %3264 = vmatprep.subr.mxu0 0.0
    %3265 = vmatpush1.msra.mxu0 0.0
    %3266 = vmatprep.subr.mxu0 0.0
    %3267 = vmatpush1.msra.mxu0 0.0
    %3268 = vmatprep.subr.mxu0 0.0
    %3269 = vmatpush1.msra.mxu0 0.0
    %3270 = vmatprep.subr.mxu0 0.0
    %3271 = vmatpush1.msra.mxu0 0.0
    %3272 = vmatprep.subr.mxu0 0.0
    %3273 = vmatpush1.msra.mxu0 0.0
    %3274 = vmatprep.subr.mxu0 0.0
    %3275 = vmatpush1.msra.mxu0 0.0
    %3276 = vmatprep.subr.mxu0 0.0
    %3277 = vmatpush1.msra.mxu0 0.0
    %3278 = vmatprep.subr.mxu0 0.0
    %3279 = vmatpush1.msra.mxu0 0.0
    %3280 = vmatprep.subr.mxu0 0.0
    %3281 = vmatpush1.msra.mxu0 0.0
    %3282 = vmatprep.mubr.f32.mxu0 0.0
    %v3283 = vand.u32 %v3212, 4294901760
    %v3284 = vsub.f32 %v3212, %v3283
    %v3285 = vand.u32 %v3284, 4294901760
    %v3286 = vsub.f32 %v3284, %v3285
    %v3287 = vand.u32 %v3286, 4294901760
    %3288 = vmatmul.mubr.f32.gmra.mrb[0].mxu0 %v3287
    %v3289 = vpop.f32.mrb[0].mxu0
    %v3290 = vadd.f32 0.0, %v3289
    %v3291 = vpop.f32.mrb[0].mxu0
    %3292 = vdwg.mxu0
    %3293 = vmatprep.subr.mxu0 0.0
    %v3294 = vand.u32 %v571, 4294901760
    %v3295 = vsub.f32 %v571, %v3294
    %v3296 = vand.u32 %v3295, 4294901760
    %v3297 = vsub.f32 %v3295, %v3296
    %v3298 = vand.u32 %v3297, 4294901760
    %3299 = vmatpush1.msra.mxu0 %v3298
    %3300 = vmatprep.subr.mxu0 0.0
    %v3301 = vand.u32 %v572, 4294901760
    %v3302 = vsub.f32 %v572, %v3301
    %v3303 = vand.u32 %v3302, 4294901760
    %v3304 = vsub.f32 %v3302, %v3303
    %v3305 = vand.u32 %v3304, 4294901760
    %3306 = vmatpush1.msra.mxu0 %v3305
    %3307 = vmatprep.subr.mxu0 0.0
    %v3308 = vand.u32 %v573, 4294901760
    %v3309 = vsub.f32 %v573, %v3308
    %v3310 = vand.u32 %v3309, 4294901760
    %v3311 = vsub.f32 %v3309, %v3310
    %v3312 = vand.u32 %v3311, 4294901760
    %3313 = vmatpush1.msra.mxu0 %v3312
    %3314 = vmatprep.subr.mxu0 0.0
    %v3315 = vand.u32 %v574, 4294901760
    %v3316 = vsub.f32 %v574, %v3315
    %v3317 = vand.u32 %v3316, 4294901760
    %v3318 = vsub.f32 %v3316, %v3317
    %v3319 = vand.u32 %v3318, 4294901760
    %3320 = vmatpush1.msra.mxu0 %v3319
    %3321 = vmatprep.subr.mxu0 0.0
    %3322 = vmatpush1.msra.mxu0 0.0
    %3323 = vmatprep.subr.mxu0 0.0
    %3324 = vmatpush1.msra.mxu0 0.0
    %3325 = vmatprep.subr.mxu0 0.0
    %3326 = vmatpush1.msra.mxu0 0.0
    %3327 = vmatprep.subr.mxu0 0.0
    %3328 = vmatpush1.msra.mxu0 0.0
    %3329 = vmatprep.subr.mxu0 0.0
    %3330 = vmatpush1.msra.mxu0 0.0
    %3331 = vmatprep.subr.mxu0 0.0
    %3332 = vmatpush1.msra.mxu0 0.0
    %3333 = vmatprep.subr.mxu0 0.0
    %3334 = vmatpush1.msra.mxu0 0.0
    %3335 = vmatprep.subr.mxu0 0.0
    %3336 = vmatpush1.msra.mxu0 0.0
    %3337 = vmatprep.subr.mxu0 0.0
    %3338 = vmatpush1.msra.mxu0 0.0
    %3339 = vmatprep.subr.mxu0 0.0
    %3340 = vmatpush1.msra.mxu0 0.0
    %3341 = vmatprep.subr.mxu0 0.0
    %3342 = vmatpush1.msra.mxu0 0.0
    %3343 = vmatprep.subr.mxu0 0.0
    %3344 = vmatpush1.msra.mxu0 0.0
    %3345 = vmatprep.subr.mxu0 0.0
    %3346 = vmatpush1.msra.mxu0 0.0
    %3347 = vmatprep.subr.mxu0 0.0
    %3348 = vmatpush1.msra.mxu0 0.0
    %3349 = vmatprep.subr.mxu0 0.0
    %3350 = vmatpush1.msra.mxu0 0.0
    %3351 = vmatprep.subr.mxu0 0.0
    %3352 = vmatpush1.msra.mxu0 0.0
    %3353 = vmatprep.subr.mxu0 0.0
    %3354 = vmatpush1.msra.mxu0 0.0
    %3355 = vmatprep.subr.mxu0 0.0
    %3356 = vmatpush1.msra.mxu0 0.0
    %3357 = vmatprep.subr.mxu0 0.0
    %3358 = vmatpush1.msra.mxu0 0.0
    %3359 = vmatprep.subr.mxu0 0.0
    %3360 = vmatpush1.msra.mxu0 0.0
    %3361 = vmatprep.subr.mxu0 0.0
    %3362 = vmatpush1.msra.mxu0 0.0
    %3363 = vmatprep.subr.mxu0 0.0
    %3364 = vmatpush1.msra.mxu0 0.0
    %3365 = vmatprep.subr.mxu0 0.0
    %3366 = vmatpush1.msra.mxu0 0.0
    %3367 = vmatprep.subr.mxu0 0.0
    %3368 = vmatpush1.msra.mxu0 0.0
    %3369 = vmatprep.subr.mxu0 0.0
    %3370 = vmatpush1.msra.mxu0 0.0
    %3371 = vmatprep.subr.mxu0 0.0
    %3372 = vmatpush1.msra.mxu0 0.0
    %3373 = vmatprep.subr.mxu0 0.0
    %3374 = vmatpush1.msra.mxu0 0.0
    %3375 = vmatprep.subr.mxu0 0.0
    %3376 = vmatpush1.msra.mxu0 0.0
    %3377 = vmatprep.mubr.f32.mxu0 0.0
    %v3378 = vand.u32 %v3212, 4294901760
    %3379 = vmatmul.mubr.f32.gmra.mrb[0].mxu0 %v3378
    %v3380 = vpop.f32.mrb[0].mxu0
    %v3381 = vadd.f32 %v3290, %v3380
    %v3382 = vpop.f32.mrb[0].mxu0
    %3383 = vdwg.mxu0
    %3384 = vmatprep.subr.mxu0 0.0
    %v3385 = vand.u32 %v571, 4294901760
    %v3386 = vsub.f32 %v571, %v3385
    %3387 = vmatpush1.msra.mxu0 %v3386
    %3388 = vmatprep.subr.mxu0 0.0
    %v3389 = vand.u32 %v572, 4294901760
    %v3390 = vsub.f32 %v572, %v3389
    %3391 = vmatpush1.msra.mxu0 %v3390
    %3392 = vmatprep.subr.mxu0 0.0
    %v3393 = vand.u32 %v573, 4294901760
    %v3394 = vsub.f32 %v573, %v3393
    %3395 = vmatpush1.msra.mxu0 %v3394
    %3396 = vmatprep.subr.mxu0 0.0
    %v3397 = vand.u32 %v574, 4294901760
    %v3398 = vsub.f32 %v574, %v3397
    %3399 = vmatpush1.msra.mxu0 %v3398
    %3400 = vmatprep.subr.mxu0 0.0
    %3401 = vmatpush1.msra.mxu0 0.0
    %3402 = vmatprep.subr.mxu0 0.0
    %3403 = vmatpush1.msra.mxu0 0.0
    %3404 = vmatprep.subr.mxu0 0.0
    %3405 = vmatpush1.msra.mxu0 0.0
    %3406 = vmatprep.subr.mxu0 0.0
    %3407 = vmatpush1.msra.mxu0 0.0
    %3408 = vmatprep.subr.mxu0 0.0
    %3409 = vmatpush1.msra.mxu0 0.0
    %3410 = vmatprep.subr.mxu0 0.0
    %3411 = vmatpush1.msra.mxu0 0.0
    %3412 = vmatprep.subr.mxu0 0.0
    %3413 = vmatpush1.msra.mxu0 0.0
    %3414 = vmatprep.subr.mxu0 0.0
    %3415 = vmatpush1.msra.mxu0 0.0
    %3416 = vmatprep.subr.mxu0 0.0
    %3417 = vmatpush1.msra.mxu0 0.0
    %3418 = vmatprep.subr.mxu0 0.0
    %3419 = vmatpush1.msra.mxu0 0.0
    %3420 = vmatprep.subr.mxu0 0.0
    %3421 = vmatpush1.msra.mxu0 0.0
    %3422 = vmatprep.subr.mxu0 0.0
    %3423 = vmatpush1.msra.mxu0 0.0
    %3424 = vmatprep.subr.mxu0 0.0
    %3425 = vmatpush1.msra.mxu0 0.0
    %3426 = vmatprep.subr.mxu0 0.0
    %3427 = vmatpush1.msra.mxu0 0.0
    %3428 = vmatprep.subr.mxu0 0.0
    %3429 = vmatpush1.msra.mxu0 0.0
    %3430 = vmatprep.subr.mxu0 0.0
    %3431 = vmatpush1.msra.mxu0 0.0
    %3432 = vmatprep.subr.mxu0 0.0
    %3433 = vmatpush1.msra.mxu0 0.0
    %3434 = vmatprep.subr.mxu0 0.0
    %3435 = vmatpush1.msra.mxu0 0.0
    %3436 = vmatprep.subr.mxu0 0.0
    %3437 = vmatpush1.msra.mxu0 0.0
    %3438 = vmatprep.subr.mxu0 0.0
    %3439 = vmatpush1.msra.mxu0 0.0
    %3440 = vmatprep.subr.mxu0 0.0
    %3441 = vmatpush1.msra.mxu0 0.0
    %3442 = vmatprep.subr.mxu0 0.0
    %3443 = vmatpush1.msra.mxu0 0.0
    %3444 = vmatprep.subr.mxu0 0.0
    %3445 = vmatpush1.msra.mxu0 0.0
    %3446 = vmatprep.subr.mxu0 0.0
    %3447 = vmatpush1.msra.mxu0 0.0
    %3448 = vmatprep.subr.mxu0 0.0
    %3449 = vmatpush1.msra.mxu0 0.0
    %3450 = vmatprep.subr.mxu0 0.0
    %3451 = vmatpush1.msra.mxu0 0.0
    %3452 = vmatprep.subr.mxu0 0.0
    %3453 = vmatpush1.msra.mxu0 0.0
    %3454 = vmatprep.subr.mxu0 0.0
    %3455 = vmatpush1.msra.mxu0 0.0
    %3456 = vmatprep.mubr.f32.mxu0 0.0
    %v3457 = vand.u32 %v3212, 4294901760
    %v3458 = vsub.f32 %v3212, %v3457
    %3459 = vmatmul.mubr.f32.gmra.mrb[0].mxu0 %v3458
    %v3460 = vpop.f32.mrb[0].mxu0
    %v3461 = vadd.f32 %v3381, %v3460
    %v3462 = vpop.f32.mrb[0].mxu0
    %3463 = vdwg.mxu0
    %3464 = vmatprep.subr.mxu0 0.0
    %v3465 = vand.u32 %v571, 4294901760
    %3466 = vmatpush1.msra.mxu0 %v3465
    %3467 = vmatprep.subr.mxu0 0.0
    %v3468 = vand.u32 %v572, 4294901760
    %3469 = vmatpush1.msra.mxu0 %v3468
    %3470 = vmatprep.subr.mxu0 0.0
    %v3471 = vand.u32 %v573, 4294901760
    %3472 = vmatpush1.msra.mxu0 %v3471
    %3473 = vmatprep.subr.mxu0 0.0
    %v3474 = vand.u32 %v574, 4294901760
    %3475 = vmatpush1.msra.mxu0 %v3474
    %3476 = vmatprep.subr.mxu0 0.0
    %3477 = vmatpush1.msra.mxu0 0.0
    %3478 = vmatprep.subr.mxu0 0.0
    %3479 = vmatpush1.msra.mxu0 0.0
    %3480 = vmatprep.subr.mxu0 0.0
    %3481 = vmatpush1.msra.mxu0 0.0
    %3482 = vmatprep.subr.mxu0 0.0
    %3483 = vmatpush1.msra.mxu0 0.0
    %3484 = vmatprep.subr.mxu0 0.0
    %3485 = vmatpush1.msra.mxu0 0.0
    %3486 = vmatprep.subr.mxu0 0.0
    %3487 = vmatpush1.msra.mxu0 0.0
    %3488 = vmatprep.subr.mxu0 0.0
    %3489 = vmatpush1.msra.mxu0 0.0
    %3490 = vmatprep.subr.mxu0 0.0
    %3491 = vmatpush1.msra.mxu0 0.0
    %3492 = vmatprep.subr.mxu0 0.0
    %3493 = vmatpush1.msra.mxu0 0.0
    %3494 = vmatprep.subr.mxu0 0.0
    %3495 = vmatpush1.msra.mxu0 0.0
    %3496 = vmatprep.subr.mxu0 0.0
    %3497 = vmatpush1.msra.mxu0 0.0
    %3498 = vmatprep.subr.mxu0 0.0
    %3499 = vmatpush1.msra.mxu0 0.0
    %3500 = vmatprep.subr.mxu0 0.0
    %3501 = vmatpush1.msra.mxu0 0.0
    %3502 = vmatprep.subr.mxu0 0.0
    %3503 = vmatpush1.msra.mxu0 0.0
    %3504 = vmatprep.subr.mxu0 0.0
    %3505 = vmatpush1.msra.mxu0 0.0
    %3506 = vmatprep.subr.mxu0 0.0
    %3507 = vmatpush1.msra.mxu0 0.0
    %3508 = vmatprep.subr.mxu0 0.0
    %3509 = vmatpush1.msra.mxu0 0.0
    %3510 = vmatprep.subr.mxu0 0.0
    %3511 = vmatpush1.msra.mxu0 0.0
    %3512 = vmatprep.subr.mxu0 0.0
    %3513 = vmatpush1.msra.mxu0 0.0
    %3514 = vmatprep.subr.mxu0 0.0
    %3515 = vmatpush1.msra.mxu0 0.0
    %3516 = vmatprep.subr.mxu0 0.0
    %3517 = vmatpush1.msra.mxu0 0.0
    %3518 = vmatprep.subr.mxu0 0.0
    %3519 = vmatpush1.msra.mxu0 0.0
    %3520 = vmatprep.subr.mxu0 0.0
    %3521 = vmatpush1.msra.mxu0 0.0
    %3522 = vmatprep.subr.mxu0 0.0
    %3523 = vmatpush1.msra.mxu0 0.0
    %3524 = vmatprep.subr.mxu0 0.0
    %3525 = vmatpush1.msra.mxu0 0.0
    %3526 = vmatprep.subr.mxu0 0.0
    %3527 = vmatpush1.msra.mxu0 0.0
    %3528 = vmatprep.subr.mxu0 0.0
    %3529 = vmatpush1.msra.mxu0 0.0
    %3530 = vmatprep.subr.mxu0 0.0
    %3531 = vmatpush1.msra.mxu0 0.0
    %3532 = vmatprep.mubr.f32.mxu0 0.0
    %v3533 = vand.u32 %v3212, 4294901760
    %v3534 = vsub.f32 %v3212, %v3533
    %v3535 = vand.u32 %v3534, 4294901760
    %3536 = vmatmul.mubr.f32.gmra.mrb[0].mxu0 %v3535
    %v3537 = vpop.f32.mrb[0].mxu0
    %v3538 = vadd.f32 %v3461, %v3537
    %v3539 = vpop.f32.mrb[0].mxu0
    %3540 = vdwg.mxu0
    %3541 = vmatprep.subr.mxu0 0.0
    %v3542 = vand.u32 %v571, 4294901760
    %v3543 = vsub.f32 %v571, %v3542
    %v3544 = vand.u32 %v3543, 4294901760
    %3545 = vmatpush1.msra.mxu0 %v3544
    %3546 = vmatprep.subr.mxu0 0.0
    %v3547 = vand.u32 %v572, 4294901760
    %v3548 = vsub.f32 %v572, %v3547
    %v3549 = vand.u32 %v3548, 4294901760
    %3550 = vmatpush1.msra.mxu0 %v3549
    %3551 = vmatprep.subr.mxu0 0.0
    %v3552 = vand.u32 %v573, 4294901760
    %v3553 = vsub.f32 %v573, %v3552
    %v3554 = vand.u32 %v3553, 4294901760
    %3555 = vmatpush1.msra.mxu0 %v3554
    %3556 = vmatprep.subr.mxu0 0.0
    %v3557 = vand.u32 %v574, 4294901760
    %v3558 = vsub.f32 %v574, %v3557
    %v3559 = vand.u32 %v3558, 4294901760
    %3560 = vmatpush1.msra.mxu0 %v3559
    %3561 = vmatprep.subr.mxu0 0.0
    %3562 = vmatpush1.msra.mxu0 0.0
    %3563 = vmatprep.subr.mxu0 0.0
    %3564 = vmatpush1.msra.mxu0 0.0
    %3565 = vmatprep.subr.mxu0 0.0
    %3566 = vmatpush1.msra.mxu0 0.0
    %3567 = vmatprep.subr.mxu0 0.0
    %3568 = vmatpush1.msra.mxu0 0.0
    %3569 = vmatprep.subr.mxu0 0.0
    %3570 = vmatpush1.msra.mxu0 0.0
    %3571 = vmatprep.subr.mxu0 0.0
    %3572 = vmatpush1.msra.mxu0 0.0
    %3573 = vmatprep.subr.mxu0 0.0
    %3574 = vmatpush1.msra.mxu0 0.0
    %3575 = vmatprep.subr.mxu0 0.0
    %3576 = vmatpush1.msra.mxu0 0.0
    %3577 = vmatprep.subr.mxu0 0.0
    %3578 = vmatpush1.msra.mxu0 0.0
    %3579 = vmatprep.subr.mxu0 0.0
    %3580 = vmatpush1.msra.mxu0 0.0
    %3581 = vmatprep.subr.mxu0 0.0
    %3582 = vmatpush1.msra.mxu0 0.0
    %3583 = vmatprep.subr.mxu0 0.0
    %3584 = vmatpush1.msra.mxu0 0.0
    %3585 = vmatprep.subr.mxu0 0.0
    %3586 = vmatpush1.msra.mxu0 0.0
    %3587 = vmatprep.subr.mxu0 0.0
    %3588 = vmatpush1.msra.mxu0 0.0
    %3589 = vmatprep.subr.mxu0 0.0
    %3590 = vmatpush1.msra.mxu0 0.0
    %3591 = vmatprep.subr.mxu0 0.0
    %3592 = vmatpush1.msra.mxu0 0.0
    %3593 = vmatprep.subr.mxu0 0.0
    %3594 = vmatpush1.msra.mxu0 0.0
    %3595 = vmatprep.subr.mxu0 0.0
    %3596 = vmatpush1.msra.mxu0 0.0
    %3597 = vmatprep.subr.mxu0 0.0
    %3598 = vmatpush1.msra.mxu0 0.0
    %3599 = vmatprep.subr.mxu0 0.0
    %3600 = vmatpush1.msra.mxu0 0.0
    %3601 = vmatprep.subr.mxu0 0.0
    %3602 = vmatpush1.msra.mxu0 0.0
    %3603 = vmatprep.subr.mxu0 0.0
    %3604 = vmatpush1.msra.mxu0 0.0
    %3605 = vmatprep.subr.mxu0 0.0
    %3606 = vmatpush1.msra.mxu0 0.0
    %3607 = vmatprep.subr.mxu0 0.0
    %3608 = vmatpush1.msra.mxu0 0.0
    %3609 = vmatprep.subr.mxu0 0.0
    %3610 = vmatpush1.msra.mxu0 0.0
    %3611 = vmatprep.subr.mxu0 0.0
    %3612 = vmatpush1.msra.mxu0 0.0
    %3613 = vmatprep.subr.mxu0 0.0
    %3614 = vmatpush1.msra.mxu0 0.0
    %3615 = vmatprep.subr.mxu0 0.0
    %3616 = vmatpush1.msra.mxu0 0.0
    %3617 = vmatprep.mubr.f32.mxu0 0.0
    %v3618 = vand.u32 %v3212, 4294901760
    %3619 = vmatmul.mubr.f32.gmra.mrb[0].mxu0 %v3618
    %v3620 = vpop.f32.mrb[0].mxu0
    %v3621 = vadd.f32 %v3538, %v3620
    %v3622 = vpop.f32.mrb[0].mxu0
    %3623 = vdwg.mxu0
    %3624 = vmatprep.subr.mxu0 0.0
    %v3625 = vand.u32 %v571, 4294901760
    %3626 = vmatpush1.msra.mxu0 %v3625
    %3627 = vmatprep.subr.mxu0 0.0
    %v3628 = vand.u32 %v572, 4294901760
    %3629 = vmatpush1.msra.mxu0 %v3628
    %3630 = vmatprep.subr.mxu0 0.0
    %v3631 = vand.u32 %v573, 4294901760
    %3632 = vmatpush1.msra.mxu0 %v3631
    %3633 = vmatprep.subr.mxu0 0.0
    %v3634 = vand.u32 %v574, 4294901760
    %3635 = vmatpush1.msra.mxu0 %v3634
    %3636 = vmatprep.subr.mxu0 0.0
    %3637 = vmatpush1.msra.mxu0 0.0
    %3638 = vmatprep.subr.mxu0 0.0
    %3639 = vmatpush1.msra.mxu0 0.0
    %3640 = vmatprep.subr.mxu0 0.0
    %3641 = vmatpush1.msra.mxu0 0.0
    %3642 = vmatprep.subr.mxu0 0.0
    %3643 = vmatpush1.msra.mxu0 0.0
    %3644 = vmatprep.subr.mxu0 0.0
    %3645 = vmatpush1.msra.mxu0 0.0
    %3646 = vmatprep.subr.mxu0 0.0
    %3647 = vmatpush1.msra.mxu0 0.0
    %3648 = vmatprep.subr.mxu0 0.0
    %3649 = vmatpush1.msra.mxu0 0.0
    %3650 = vmatprep.subr.mxu0 0.0
    %3651 = vmatpush1.msra.mxu0 0.0
    %3652 = vmatprep.subr.mxu0 0.0
    %3653 = vmatpush1.msra.mxu0 0.0
    %3654 = vmatprep.subr.mxu0 0.0
    %3655 = vmatpush1.msra.mxu0 0.0
    %3656 = vmatprep.subr.mxu0 0.0
    %3657 = vmatpush1.msra.mxu0 0.0
    %3658 = vmatprep.subr.mxu0 0.0
    %3659 = vmatpush1.msra.mxu0 0.0
    %3660 = vmatprep.subr.mxu0 0.0
    %3661 = vmatpush1.msra.mxu0 0.0
    %3662 = vmatprep.subr.mxu0 0.0
    %3663 = vmatpush1.msra.mxu0 0.0
    %3664 = vmatprep.subr.mxu0 0.0
    %3665 = vmatpush1.msra.mxu0 0.0
    %3666 = vmatprep.subr.mxu0 0.0
    %3667 = vmatpush1.msra.mxu0 0.0
    %3668 = vmatprep.subr.mxu0 0.0
    %3669 = vmatpush1.msra.mxu0 0.0
    %3670 = vmatprep.subr.mxu0 0.0
    %3671 = vmatpush1.msra.mxu0 0.0
    %3672 = vmatprep.subr.mxu0 0.0
    %3673 = vmatpush1.msra.mxu0 0.0
    %3674 = vmatprep.subr.mxu0 0.0
    %3675 = vmatpush1.msra.mxu0 0.0
    %3676 = vmatprep.subr.mxu0 0.0
    %3677 = vmatpush1.msra.mxu0 0.0
    %3678 = vmatprep.subr.mxu0 0.0
    %3679 = vmatpush1.msra.mxu0 0.0
    %3680 = vmatprep.subr.mxu0 0.0
    %3681 = vmatpush1.msra.mxu0 0.0
    %3682 = vmatprep.subr.mxu0 0.0
    %3683 = vmatpush1.msra.mxu0 0.0
    %3684 = vmatprep.subr.mxu0 0.0
    %3685 = vmatpush1.msra.mxu0 0.0
    %3686 = vmatprep.subr.mxu0 0.0
    %3687 = vmatpush1.msra.mxu0 0.0
    %3688 = vmatprep.subr.mxu0 0.0
    %3689 = vmatpush1.msra.mxu0 0.0
    %3690 = vmatprep.subr.mxu0 0.0
    %3691 = vmatpush1.msra.mxu0 0.0
    %3692 = vmatprep.mubr.f32.mxu0 0.0
    %v3693 = vand.u32 %v3212, 4294901760
    %3694 = vmatmul.mubr.f32.gmra.mrb[0].mxu0 %v3693
    %v3695 = vpop.f32.mrb[0].mxu0
    %v3696 = vadd.f32 %v3621, %v3695
    %v3697 = vpop.f32.mrb[0].mxu0
    %3698 = vdwg.mxu0
    %v3700 = vrot.slane %v3696, 3
    %v3702 = vadd.f32 %v568, %v3700
    %v3703 = vxor.u32 %v3702, 2147483648
    %v3704 = vmul.f32 %v3703, 1.442695
    %v3705 = vpow.pop %v3704
    %v3706 = vadd.f32 %v3705, 1.0
    %v3707 = vrcp.pop %v3706
    %v3708 = vmul.f32 1.0, %v3707
    %v3709 = vtanh.pop %v3702
    %v3711 = vrot.slane %v3196, 7
    %v3713 = vmul.f32 %v3708, %v3711
    %3715 = vrot.lane.b32.xlu0 %v3709, 64
    %v3716 = vpop.permute.xlu0 %3715
    %v3718 = vmul.f32 %v3708, %v3716
    %3720 = vrot.lane.b32.xlu0 %v3718, 32
    %v3721 = vpop.permute.xlu0 %3720
    %v3723 = vadd.f32 %v3713, %v3721
    %v3724 = vtanh.pop %v3723
    %3726 = vrot.lane.b32.xlu0 %v3724, 64
    %v3727 = vpop.permute.xlu0 %3726
    %v3729 = vmul.f32 %v3708, %v3727
    %3731 = vrot.lane.b32.xlu0 %v3729, 32
    %v3732 = vpop.permute.xlu0 %3731
    %vm3734 = vcmask 259077
    %3735 = vst.msk [vmem:[#allocation2] sm:$0x20] %vm3734, %v3732
    %v3736 = vrot.slane %v3729, 5
    %3737 = vrot.lane.b32.xlu0 %v3736, 32
    %v3738 = vpop.permute.xlu0 %3737
    %v3739 = vsel %vm82, %v3738, 0
    %3741 = vmatprep.subr.mxu0 0.0
    %v3742 = vand.u32 %v571, 4294901760
    %3743 = vmatpush1.msra.mxu0 %v3742
    %3744 = vmatprep.subr.mxu0 0.0
    %v3745 = vand.u32 %v572, 4294901760
    %3746 = vmatpush1.msra.mxu0 %v3745
    %3747 = vmatprep.subr.mxu0 0.0
    %v3748 = vand.u32 %v573, 4294901760
    %3749 = vmatpush1.msra.mxu0 %v3748
    %3750 = vmatprep.subr.mxu0 0.0
    %v3751 = vand.u32 %v574, 4294901760
    %3752 = vmatpush1.msra.mxu0 %v3751
    %3753 = vmatprep.subr.mxu0 0.0
    %3754 = vmatpush1.msra.mxu0 0.0
    %3755 = vmatprep.subr.mxu0 0.0
    %3756 = vmatpush1.msra.mxu0 0.0
    %3757 = vmatprep.subr.mxu0 0.0
    %3758 = vmatpush1.msra.mxu0 0.0
    %3759 = vmatprep.subr.mxu0 0.0
    %3760 = vmatpush1.msra.mxu0 0.0
    %3761 = vmatprep.subr.mxu0 0.0
    %3762 = vmatpush1.msra.mxu0 0.0
    %3763 = vmatprep.subr.mxu0 0.0
    %3764 = vmatpush1.msra.mxu0 0.0
    %3765 = vmatprep.subr.mxu0 0.0
    %3766 = vmatpush1.msra.mxu0 0.0
    %3767 = vmatprep.subr.mxu0 0.0
    %3768 = vmatpush1.msra.mxu0 0.0
    %3769 = vmatprep.subr.mxu0 0.0
    %3770 = vmatpush1.msra.mxu0 0.0
    %3771 = vmatprep.subr.mxu0 0.0
    %3772 = vmatpush1.msra.mxu0 0.0
    %3773 = vmatprep.subr.mxu0 0.0
    %3774 = vmatpush1.msra.mxu0 0.0
    %3775 = vmatprep.subr.mxu0 0.0
    %3776 = vmatpush1.msra.mxu0 0.0
    %3777 = vmatprep.subr.mxu0 0.0
    %3778 = vmatpush1.msra.mxu0 0.0
    %3779 = vmatprep.subr.mxu0 0.0
    %3780 = vmatpush1.msra.mxu0 0.0
    %3781 = vmatprep.subr.mxu0 0.0
    %3782 = vmatpush1.msra.mxu0 0.0
    %3783 = vmatprep.subr.mxu0 0.0
    %3784 = vmatpush1.msra.mxu0 0.0
    %3785 = vmatprep.subr.mxu0 0.0
    %3786 = vmatpush1.msra.mxu0 0.0
    %3787 = vmatprep.subr.mxu0 0.0
    %3788 = vmatpush1.msra.mxu0 0.0
    %3789 = vmatprep.subr.mxu0 0.0
    %3790 = vmatpush1.msra.mxu0 0.0
    %3791 = vmatprep.subr.mxu0 0.0
    %3792 = vmatpush1.msra.mxu0 0.0
    %3793 = vmatprep.subr.mxu0 0.0
    %3794 = vmatpush1.msra.mxu0 0.0
    %3795 = vmatprep.subr.mxu0 0.0
    %3796 = vmatpush1.msra.mxu0 0.0
    %3797 = vmatprep.subr.mxu0 0.0
    %3798 = vmatpush1.msra.mxu0 0.0
    %3799 = vmatprep.subr.mxu0 0.0
    %3800 = vmatpush1.msra.mxu0 0.0
    %3801 = vmatprep.subr.mxu0 0.0
    %3802 = vmatpush1.msra.mxu0 0.0
    %3803 = vmatprep.subr.mxu0 0.0
    %3804 = vmatpush1.msra.mxu0 0.0
    %3805 = vmatprep.subr.mxu0 0.0
    %3806 = vmatpush1.msra.mxu0 0.0
    %3807 = vmatprep.subr.mxu0 0.0
    %3808 = vmatpush1.msra.mxu0 0.0
    %3809 = vmatprep.mubr.f32.mxu0 0.0
    %v3810 = vand.u32 %v3739, 4294901760
    %v3811 = vsub.f32 %v3739, %v3810
    %v3812 = vand.u32 %v3811, 4294901760
    %v3813 = vsub.f32 %v3811, %v3812
    %v3814 = vand.u32 %v3813, 4294901760
    %3815 = vmatmul.mubr.f32.gmra.mrb[0].mxu0 %v3814
    %v3816 = vpop.f32.mrb[0].mxu0
    %v3817 = vadd.f32 0.0, %v3816
    %v3818 = vpop.f32.mrb[0].mxu0
    %3819 = vdwg.mxu0
    %3820 = vmatprep.subr.mxu0 0.0
    %v3821 = vand.u32 %v571, 4294901760
    %v3822 = vsub.f32 %v571, %v3821
    %v3823 = vand.u32 %v3822, 4294901760
    %v3824 = vsub.f32 %v3822, %v3823
    %v3825 = vand.u32 %v3824, 4294901760
    %3826 = vmatpush1.msra.mxu0 %v3825
    %3827 = vmatprep.subr.mxu0 0.0
    %v3828 = vand.u32 %v572, 4294901760
    %v3829 = vsub.f32 %v572, %v3828
    %v3830 = vand.u32 %v3829, 4294901760
    %v3831 = vsub.f32 %v3829, %v3830
    %v3832 = vand.u32 %v3831, 4294901760
    %3833 = vmatpush1.msra.mxu0 %v3832
    %3834 = vmatprep.subr.mxu0 0.0
    %v3835 = vand.u32 %v573, 4294901760
    %v3836 = vsub.f32 %v573, %v3835
    %v3837 = vand.u32 %v3836, 4294901760
    %v3838 = vsub.f32 %v3836, %v3837
    %v3839 = vand.u32 %v3838, 4294901760
    %3840 = vmatpush1.msra.mxu0 %v3839
    %3841 = vmatprep.subr.mxu0 0.0
    %v3842 = vand.u32 %v574, 4294901760
    %v3843 = vsub.f32 %v574, %v3842
    %v3844 = vand.u32 %v3843, 4294901760
    %v3845 = vsub.f32 %v3843, %v3844
    %v3846 = vand.u32 %v3845, 4294901760
    %3847 = vmatpush1.msra.mxu0 %v3846
    %3848 = vmatprep.subr.mxu0 0.0
    %3849 = vmatpush1.msra.mxu0 0.0
    %3850 = vmatprep.subr.mxu0 0.0
    %3851 = vmatpush1.msra.mxu0 0.0
    %3852 = vmatprep.subr.mxu0 0.0
    %3853 = vmatpush1.msra.mxu0 0.0
    %3854 = vmatprep.subr.mxu0 0.0
    %3855 = vmatpush1.msra.mxu0 0.0
    %3856 = vmatprep.subr.mxu0 0.0
    %3857 = vmatpush1.msra.mxu0 0.0
    %3858 = vmatprep.subr.mxu0 0.0
    %3859 = vmatpush1.msra.mxu0 0.0
    %3860 = vmatprep.subr.mxu0 0.0
    %3861 = vmatpush1.msra.mxu0 0.0
    %3862 = vmatprep.subr.mxu0 0.0
    %3863 = vmatpush1.msra.mxu0 0.0
    %3864 = vmatprep.subr.mxu0 0.0
    %3865 = vmatpush1.msra.mxu0 0.0
    %3866 = vmatprep.subr.mxu0 0.0
    %3867 = vmatpush1.msra.mxu0 0.0
    %3868 = vmatprep.subr.mxu0 0.0
    %3869 = vmatpush1.msra.mxu0 0.0
    %3870 = vmatprep.subr.mxu0 0.0
    %3871 = vmatpush1.msra.mxu0 0.0
    %3872 = vmatprep.subr.mxu0 0.0
    %3873 = vmatpush1.msra.mxu0 0.0
    %3874 = vmatprep.subr.mxu0 0.0
    %3875 = vmatpush1.msra.mxu0 0.0
    %3876 = vmatprep.subr.mxu0 0.0
    %3877 = vmatpush1.msra.mxu0 0.0
    %3878 = vmatprep.subr.mxu0 0.0
    %3879 = vmatpush1.msra.mxu0 0.0
    %3880 = vmatprep.subr.mxu0 0.0
    %3881 = vmatpush1.msra.mxu0 0.0
    %3882 = vmatprep.subr.mxu0 0.0
    %3883 = vmatpush1.msra.mxu0 0.0
    %3884 = vmatprep.subr.mxu0 0.0
    %3885 = vmatpush1.msra.mxu0 0.0
    %3886 = vmatprep.subr.mxu0 0.0
    %3887 = vmatpush1.msra.mxu0 0.0
    %3888 = vmatprep.subr.mxu0 0.0
    %3889 = vmatpush1.msra.mxu0 0.0
    %3890 = vmatprep.subr.mxu0 0.0
    %3891 = vmatpush1.msra.mxu0 0.0
    %3892 = vmatprep.subr.mxu0 0.0
    %3893 = vmatpush1.msra.mxu0 0.0
    %3894 = vmatprep.subr.mxu0 0.0
    %3895 = vmatpush1.msra.mxu0 0.0
    %3896 = vmatprep.subr.mxu0 0.0
    %3897 = vmatpush1.msra.mxu0 0.0
    %3898 = vmatprep.subr.mxu0 0.0
    %3899 = vmatpush1.msra.mxu0 0.0
    %3900 = vmatprep.subr.mxu0 0.0
    %3901 = vmatpush1.msra.mxu0 0.0
    %3902 = vmatprep.subr.mxu0 0.0
    %3903 = vmatpush1.msra.mxu0 0.0
    %3904 = vmatprep.mubr.f32.mxu0 0.0
    %v3905 = vand.u32 %v3739, 4294901760
    %3906 = vmatmul.mubr.f32.gmra.mrb[0].mxu0 %v3905
    %v3907 = vpop.f32.mrb[0].mxu0
    %v3908 = vadd.f32 %v3817, %v3907
    %v3909 = vpop.f32.mrb[0].mxu0
    %3910 = vdwg.mxu0
    %3911 = vmatprep.subr.mxu0 0.0
    %v3912 = vand.u32 %v571, 4294901760
    %v3913 = vsub.f32 %v571, %v3912
    %3914 = vmatpush1.msra.mxu0 %v3913
    %3915 = vmatprep.subr.mxu0 0.0
    %v3916 = vand.u32 %v572, 4294901760
    %v3917 = vsub.f32 %v572, %v3916
    %3918 = vmatpush1.msra.mxu0 %v3917
    %3919 = vmatprep.subr.mxu0 0.0
    %v3920 = vand.u32 %v573, 4294901760
    %v3921 = vsub.f32 %v573, %v3920
    %3922 = vmatpush1.msra.mxu0 %v3921
    %3923 = vmatprep.subr.mxu0 0.0
    %v3924 = vand.u32 %v574, 4294901760
    %v3925 = vsub.f32 %v574, %v3924
    %3926 = vmatpush1.msra.mxu0 %v3925
    %3927 = vmatprep.subr.mxu0 0.0
    %3928 = vmatpush1.msra.mxu0 0.0
    %3929 = vmatprep.subr.mxu0 0.0
    %3930 = vmatpush1.msra.mxu0 0.0
    %3931 = vmatprep.subr.mxu0 0.0
    %3932 = vmatpush1.msra.mxu0 0.0
    %3933 = vmatprep.subr.mxu0 0.0
    %3934 = vmatpush1.msra.mxu0 0.0
    %3935 = vmatprep.subr.mxu0 0.0
    %3936 = vmatpush1.msra.mxu0 0.0
    %3937 = vmatprep.subr.mxu0 0.0
    %3938 = vmatpush1.msra.mxu0 0.0
    %3939 = vmatprep.subr.mxu0 0.0
    %3940 = vmatpush1.msra.mxu0 0.0
    %3941 = vmatprep.subr.mxu0 0.0
    %3942 = vmatpush1.msra.mxu0 0.0
    %3943 = vmatprep.subr.mxu0 0.0
    %3944 = vmatpush1.msra.mxu0 0.0
    %3945 = vmatprep.subr.mxu0 0.0
    %3946 = vmatpush1.msra.mxu0 0.0
    %3947 = vmatprep.subr.mxu0 0.0
    %3948 = vmatpush1.msra.mxu0 0.0
    %3949 = vmatprep.subr.mxu0 0.0
    %3950 = vmatpush1.msra.mxu0 0.0
    %3951 = vmatprep.subr.mxu0 0.0
    %3952 = vmatpush1.msra.mxu0 0.0
    %3953 = vmatprep.subr.mxu0 0.0
    %3954 = vmatpush1.msra.mxu0 0.0
    %3955 = vmatprep.subr.mxu0 0.0
    %3956 = vmatpush1.msra.mxu0 0.0
    %3957 = vmatprep.subr.mxu0 0.0
    %3958 = vmatpush1.msra.mxu0 0.0
    %3959 = vmatprep.subr.mxu0 0.0
    %3960 = vmatpush1.msra.mxu0 0.0
    %3961 = vmatprep.subr.mxu0 0.0
    %3962 = vmatpush1.msra.mxu0 0.0
    %3963 = vmatprep.subr.mxu0 0.0
    %3964 = vmatpush1.msra.mxu0 0.0
    %3965 = vmatprep.subr.mxu0 0.0
    %3966 = vmatpush1.msra.mxu0 0.0
    %3967 = vmatprep.subr.mxu0 0.0
    %3968 = vmatpush1.msra.mxu0 0.0
    %3969 = vmatprep.subr.mxu0 0.0
    %3970 = vmatpush1.msra.mxu0 0.0
    %3971 = vmatprep.subr.mxu0 0.0
    %3972 = vmatpush1.msra.mxu0 0.0
    %3973 = vmatprep.subr.mxu0 0.0
    %3974 = vmatpush1.msra.mxu0 0.0
    %3975 = vmatprep.subr.mxu0 0.0
    %3976 = vmatpush1.msra.mxu0 0.0
    %3977 = vmatprep.subr.mxu0 0.0
    %3978 = vmatpush1.msra.mxu0 0.0
    %3979 = vmatprep.subr.mxu0 0.0
    %3980 = vmatpush1.msra.mxu0 0.0
    %3981 = vmatprep.subr.mxu0 0.0
    %3982 = vmatpush1.msra.mxu0 0.0
    %3983 = vmatprep.mubr.f32.mxu0 0.0
    %v3984 = vand.u32 %v3739, 4294901760
    %v3985 = vsub.f32 %v3739, %v3984
    %3986 = vmatmul.mubr.f32.gmra.mrb[0].mxu0 %v3985
    %v3987 = vpop.f32.mrb[0].mxu0
    %v3988 = vadd.f32 %v3908, %v3987
    %v3989 = vpop.f32.mrb[0].mxu0
    %3990 = vdwg.mxu0
    %3991 = vmatprep.subr.mxu0 0.0
    %v3992 = vand.u32 %v571, 4294901760
    %3993 = vmatpush1.msra.mxu0 %v3992
    %3994 = vmatprep.subr.mxu0 0.0
    %v3995 = vand.u32 %v572, 4294901760
    %3996 = vmatpush1.msra.mxu0 %v3995
    %3997 = vmatprep.subr.mxu0 0.0
    %v3998 = vand.u32 %v573, 4294901760
    %3999 = vmatpush1.msra.mxu0 %v3998
    %4000 = vmatprep.subr.mxu0 0.0
    %v4001 = vand.u32 %v574, 4294901760
    %4002 = vmatpush1.msra.mxu0 %v4001
    %4003 = vmatprep.subr.mxu0 0.0
    %4004 = vmatpush1.msra.mxu0 0.0
    %4005 = vmatprep.subr.mxu0 0.0
    %4006 = vmatpush1.msra.mxu0 0.0
    %4007 = vmatprep.subr.mxu0 0.0
    %4008 = vmatpush1.msra.mxu0 0.0
    %4009 = vmatprep.subr.mxu0 0.0
    %4010 = vmatpush1.msra.mxu0 0.0
    %4011 = vmatprep.subr.mxu0 0.0
    %4012 = vmatpush1.msra.mxu0 0.0
    %4013 = vmatprep.subr.mxu0 0.0
    %4014 = vmatpush1.msra.mxu0 0.0
    %4015 = vmatprep.subr.mxu0 0.0
    %4016 = vmatpush1.msra.mxu0 0.0
    %4017 = vmatprep.subr.mxu0 0.0
    %4018 = vmatpush1.msra.mxu0 0.0
    %4019 = vmatprep.subr.mxu0 0.0
    %4020 = vmatpush1.msra.mxu0 0.0
    %4021 = vmatprep.subr.mxu0 0.0
    %4022 = vmatpush1.msra.mxu0 0.0
    %4023 = vmatprep.subr.mxu0 0.0
    %4024 = vmatpush1.msra.mxu0 0.0
    %4025 = vmatprep.subr.mxu0 0.0
    %4026 = vmatpush1.msra.mxu0 0.0
    %4027 = vmatprep.subr.mxu0 0.0
    %4028 = vmatpush1.msra.mxu0 0.0
    %4029 = vmatprep.subr.mxu0 0.0
    %4030 = vmatpush1.msra.mxu0 0.0
    %4031 = vmatprep.subr.mxu0 0.0
    %4032 = vmatpush1.msra.mxu0 0.0
    %4033 = vmatprep.subr.mxu0 0.0
    %4034 = vmatpush1.msra.mxu0 0.0
    %4035 = vmatprep.subr.mxu0 0.0
    %4036 = vmatpush1.msra.mxu0 0.0
    %4037 = vmatprep.subr.mxu0 0.0
    %4038 = vmatpush1.msra.mxu0 0.0
    %4039 = vmatprep.subr.mxu0 0.0
    %4040 = vmatpush1.msra.mxu0 0.0
    %4041 = vmatprep.subr.mxu0 0.0
    %4042 = vmatpush1.msra.mxu0 0.0
    %4043 = vmatprep.subr.mxu0 0.0
    %4044 = vmatpush1.msra.mxu0 0.0
    %4045 = vmatprep.subr.mxu0 0.0
    %4046 = vmatpush1.msra.mxu0 0.0
    %4047 = vmatprep.subr.mxu0 0.0
    %4048 = vmatpush1.msra.mxu0 0.0
    %4049 = vmatprep.subr.mxu0 0.0
    %4050 = vmatpush1.msra.mxu0 0.0
    %4051 = vmatprep.subr.mxu0 0.0
    %4052 = vmatpush1.msra.mxu0 0.0
    %4053 = vmatprep.subr.mxu0 0.0
    %4054 = vmatpush1.msra.mxu0 0.0
    %4055 = vmatprep.subr.mxu0 0.0
    %4056 = vmatpush1.msra.mxu0 0.0
    %4057 = vmatprep.subr.mxu0 0.0
    %4058 = vmatpush1.msra.mxu0 0.0
    %4059 = vmatprep.mubr.f32.mxu0 0.0
    %v4060 = vand.u32 %v3739, 4294901760
    %v4061 = vsub.f32 %v3739, %v4060
    %v4062 = vand.u32 %v4061, 4294901760
    %4063 = vmatmul.mubr.f32.gmra.mrb[0].mxu0 %v4062
    %v4064 = vpop.f32.mrb[0].mxu0
    %v4065 = vadd.f32 %v3988, %v4064
    %v4066 = vpop.f32.mrb[0].mxu0
    %4067 = vdwg.mxu0
    %4068 = vmatprep.subr.mxu0 0.0
    %v4069 = vand.u32 %v571, 4294901760
    %v4070 = vsub.f32 %v571, %v4069
    %v4071 = vand.u32 %v4070, 4294901760
    %4072 = vmatpush1.msra.mxu0 %v4071
    %4073 = vmatprep.subr.mxu0 0.0
    %v4074 = vand.u32 %v572, 4294901760
    %v4075 = vsub.f32 %v572, %v4074
    %v4076 = vand.u32 %v4075, 4294901760
    %4077 = vmatpush1.msra.mxu0 %v4076
    %4078 = vmatprep.subr.mxu0 0.0
    %v4079 = vand.u32 %v573, 4294901760
    %v4080 = vsub.f32 %v573, %v4079
    %v4081 = vand.u32 %v4080, 4294901760
    %4082 = vmatpush1.msra.mxu0 %v4081
    %4083 = vmatprep.subr.mxu0 0.0
    %v4084 = vand.u32 %v574, 4294901760
    %v4085 = vsub.f32 %v574, %v4084
    %v4086 = vand.u32 %v4085, 4294901760
    %4087 = vmatpush1.msra.mxu0 %v4086
    %4088 = vmatprep.subr.mxu0 0.0
    %4089 = vmatpush1.msra.mxu0 0.0
    %4090 = vmatprep.subr.mxu0 0.0
    %4091 = vmatpush1.msra.mxu0 0.0
    %4092 = vmatprep.subr.mxu0 0.0
    %4093 = vmatpush1.msra.mxu0 0.0
    %4094 = vmatprep.subr.mxu0 0.0
    %4095 = vmatpush1.msra.mxu0 0.0
    %4096 = vmatprep.subr.mxu0 0.0
    %4097 = vmatpush1.msra.mxu0 0.0
    %4098 = vmatprep.subr.mxu0 0.0
    %4099 = vmatpush1.msra.mxu0 0.0
    %4100 = vmatprep.subr.mxu0 0.0
    %4101 = vmatpush1.msra.mxu0 0.0
    %4102 = vmatprep.subr.mxu0 0.0
    %4103 = vmatpush1.msra.mxu0 0.0
    %4104 = vmatprep.subr.mxu0 0.0
    %4105 = vmatpush1.msra.mxu0 0.0
    %4106 = vmatprep.subr.mxu0 0.0
    %4107 = vmatpush1.msra.mxu0 0.0
    %4108 = vmatprep.subr.mxu0 0.0
    %4109 = vmatpush1.msra.mxu0 0.0
    %4110 = vmatprep.subr.mxu0 0.0
    %4111 = vmatpush1.msra.mxu0 0.0
    %4112 = vmatprep.subr.mxu0 0.0
    %4113 = vmatpush1.msra.mxu0 0.0
    %4114 = vmatprep.subr.mxu0 0.0
    %4115 = vmatpush1.msra.mxu0 0.0
    %4116 = vmatprep.subr.mxu0 0.0
    %4117 = vmatpush1.msra.mxu0 0.0
    %4118 = vmatprep.subr.mxu0 0.0
    %4119 = vmatpush1.msra.mxu0 0.0
    %4120 = vmatprep.subr.mxu0 0.0
    %4121 = vmatpush1.msra.mxu0 0.0
    %4122 = vmatprep.subr.mxu0 0.0
    %4123 = vmatpush1.msra.mxu0 0.0
    %4124 = vmatprep.subr.mxu0 0.0
    %4125 = vmatpush1.msra.mxu0 0.0
    %4126 = vmatprep.subr.mxu0 0.0
    %4127 = vmatpush1.msra.mxu0 0.0
    %4128 = vmatprep.subr.mxu0 0.0
    %4129 = vmatpush1.msra.mxu0 0.0
    %4130 = vmatprep.subr.mxu0 0.0
    %4131 = vmatpush1.msra.mxu0 0.0
    %4132 = vmatprep.subr.mxu0 0.0
    %4133 = vmatpush1.msra.mxu0 0.0
    %4134 = vmatprep.subr.mxu0 0.0
    %4135 = vmatpush1.msra.mxu0 0.0
    %4136 = vmatprep.subr.mxu0 0.0
    %4137 = vmatpush1.msra.mxu0 0.0
    %4138 = vmatprep.subr.mxu0 0.0
    %4139 = vmatpush1.msra.mxu0 0.0
    %4140 = vmatprep.subr.mxu0 0.0
    %4141 = vmatpush1.msra.mxu0 0.0
    %4142 = vmatprep.subr.mxu0 0.0
    %4143 = vmatpush1.msra.mxu0 0.0
    %4144 = vmatprep.mubr.f32.mxu0 0.0
    %v4145 = vand.u32 %v3739, 4294901760
    %4146 = vmatmul.mubr.f32.gmra.mrb[0].mxu0 %v4145
    %v4147 = vpop.f32.mrb[0].mxu0
    %v4148 = vadd.f32 %v4065, %v4147
    %v4149 = vpop.f32.mrb[0].mxu0
    %4150 = vdwg.mxu0
    %4151 = vmatprep.subr.mxu0 0.0
    %v4152 = vand.u32 %v571, 4294901760
    %4153 = vmatpush1.msra.mxu0 %v4152
    %4154 = vmatprep.subr.mxu0 0.0
    %v4155 = vand.u32 %v572, 4294901760
    %4156 = vmatpush1.msra.mxu0 %v4155
    %4157 = vmatprep.subr.mxu0 0.0
    %v4158 = vand.u32 %v573, 4294901760
    %4159 = vmatpush1.msra.mxu0 %v4158
    %4160 = vmatprep.subr.mxu0 0.0
    %v4161 = vand.u32 %v574, 4294901760
    %4162 = vmatpush1.msra.mxu0 %v4161
    %4163 = vmatprep.subr.mxu0 0.0
    %4164 = vmatpush1.msra.mxu0 0.0
    %4165 = vmatprep.subr.mxu0 0.0
    %4166 = vmatpush1.msra.mxu0 0.0
    %4167 = vmatprep.subr.mxu0 0.0
    %4168 = vmatpush1.msra.mxu0 0.0
    %4169 = vmatprep.subr.mxu0 0.0
    %4170 = vmatpush1.msra.mxu0 0.0
    %4171 = vmatprep.subr.mxu0 0.0
    %4172 = vmatpush1.msra.mxu0 0.0
    %4173 = vmatprep.subr.mxu0 0.0
    %4174 = vmatpush1.msra.mxu0 0.0
    %4175 = vmatprep.subr.mxu0 0.0
    %4176 = vmatpush1.msra.mxu0 0.0
    %4177 = vmatprep.subr.mxu0 0.0
    %4178 = vmatpush1.msra.mxu0 0.0
    %4179 = vmatprep.subr.mxu0 0.0
    %4180 = vmatpush1.msra.mxu0 0.0
    %4181 = vmatprep.subr.mxu0 0.0
    %4182 = vmatpush1.msra.mxu0 0.0
    %4183 = vmatprep.subr.mxu0 0.0
    %4184 = vmatpush1.msra.mxu0 0.0
    %4185 = vmatprep.subr.mxu0 0.0
    %4186 = vmatpush1.msra.mxu0 0.0
    %4187 = vmatprep.subr.mxu0 0.0
    %4188 = vmatpush1.msra.mxu0 0.0
    %4189 = vmatprep.subr.mxu0 0.0
    %4190 = vmatpush1.msra.mxu0 0.0
    %4191 = vmatprep.subr.mxu0 0.0
    %4192 = vmatpush1.msra.mxu0 0.0
    %4193 = vmatprep.subr.mxu0 0.0
    %4194 = vmatpush1.msra.mxu0 0.0
    %4195 = vmatprep.subr.mxu0 0.0
    %4196 = vmatpush1.msra.mxu0 0.0
    %4197 = vmatprep.subr.mxu0 0.0
    %4198 = vmatpush1.msra.mxu0 0.0
    %4199 = vmatprep.subr.mxu0 0.0
    %4200 = vmatpush1.msra.mxu0 0.0
    %4201 = vmatprep.subr.mxu0 0.0
    %4202 = vmatpush1.msra.mxu0 0.0
    %4203 = vmatprep.subr.mxu0 0.0
    %4204 = vmatpush1.msra.mxu0 0.0
    %4205 = vmatprep.subr.mxu0 0.0
    %4206 = vmatpush1.msra.mxu0 0.0
    %4207 = vmatprep.subr.mxu0 0.0
    %4208 = vmatpush1.msra.mxu0 0.0
    %4209 = vmatprep.subr.mxu0 0.0
    %4210 = vmatpush1.msra.mxu0 0.0
    %4211 = vmatprep.subr.mxu0 0.0
    %4212 = vmatpush1.msra.mxu0 0.0
    %4213 = vmatprep.subr.mxu0 0.0
    %4214 = vmatpush1.msra.mxu0 0.0
    %4215 = vmatprep.subr.mxu0 0.0
    %4216 = vmatpush1.msra.mxu0 0.0
    %4217 = vmatprep.subr.mxu0 0.0
    %4218 = vmatpush1.msra.mxu0 0.0
    %4219 = vmatprep.mubr.f32.mxu0 0.0
    %v4220 = vand.u32 %v3739, 4294901760
    %4221 = vmatmul.mubr.f32.gmra.mrb[0].mxu0 %v4220
    %v4222 = vpop.f32.mrb[0].mxu0
    %v4223 = vadd.f32 %v4148, %v4222
    %v4224 = vpop.f32.mrb[0].mxu0
    %4225 = vdwg.mxu0
    %v4227 = vrot.slane %v4223, 2
    %v4229 = vadd.f32 %v568, %v4227
    %v4230 = vxor.u32 %v4229, 2147483648
    %v4231 = vmul.f32 %v4230, 1.442695
    %v4232 = vpow.pop %v4231
    %v4233 = vadd.f32 %v4232, 1.0
    %v4234 = vrcp.pop %v4233
    %v4235 = vmul.f32 1.0, %v4234
    %v4236 = vtanh.pop %v4229
    %v4238 = vrot.slane %v3723, 7
    %v4240 = vmul.f32 %v4235, %v4238
    %4242 = vrot.lane.b32.xlu0 %v4236, 64
    %v4243 = vpop.permute.xlu0 %4242
    %v4245 = vmul.f32 %v4235, %v4243
    %4247 = vrot.lane.b32.xlu0 %v4245, 32
    %v4248 = vpop.permute.xlu0 %4247
    %v4250 = vadd.f32 %v4240, %v4248
    %v4251 = vtanh.pop %v4250
    %4253 = vrot.lane.b32.xlu0 %v4251, 64
    %v4254 = vpop.permute.xlu0 %4253
    %v4256 = vmul.f32 %v4235, %v4254
    %4258 = vrot.lane.b32.xlu0 %v4256, 32
    %v4259 = vpop.permute.xlu0 %4258
    %vm4261 = vcmask 260102
    %4262 = vst.msk [vmem:[#allocation2] sm:$0x40] %vm4261, %v4259
    %v4263 = vrot.slane %v4256, 6
    %4264 = vrot.lane.b32.xlu0 %v4263, 32
    %v4265 = vpop.permute.xlu0 %4264
    %v4266 = vsel %vm82, %v4265, 0
    %4268 = vmatprep.subr.mxu0 0.0
    %v4269 = vand.u32 %v571, 4294901760
    %4270 = vmatpush1.msra.mxu0 %v4269
    %4271 = vmatprep.subr.mxu0 0.0
    %v4272 = vand.u32 %v572, 4294901760
    %4273 = vmatpush1.msra.mxu0 %v4272
    %4274 = vmatprep.subr.mxu0 0.0
    %v4275 = vand.u32 %v573, 4294901760
    %4276 = vmatpush1.msra.mxu0 %v4275
    %4277 = vmatprep.subr.mxu0 0.0
    %v4278 = vand.u32 %v574, 4294901760
    %4279 = vmatpush1.msra.mxu0 %v4278
    %4280 = vmatprep.subr.mxu0 0.0
    %4281 = vmatpush1.msra.mxu0 0.0
    %4282 = vmatprep.subr.mxu0 0.0
    %4283 = vmatpush1.msra.mxu0 0.0
    %4284 = vmatprep.subr.mxu0 0.0
    %4285 = vmatpush1.msra.mxu0 0.0
    %4286 = vmatprep.subr.mxu0 0.0
    %4287 = vmatpush1.msra.mxu0 0.0
    %4288 = vmatprep.subr.mxu0 0.0
    %4289 = vmatpush1.msra.mxu0 0.0
    %4290 = vmatprep.subr.mxu0 0.0
    %4291 = vmatpush1.msra.mxu0 0.0
    %4292 = vmatprep.subr.mxu0 0.0
    %4293 = vmatpush1.msra.mxu0 0.0
    %4294 = vmatprep.subr.mxu0 0.0
    %4295 = vmatpush1.msra.mxu0 0.0
    %4296 = vmatprep.subr.mxu0 0.0
    %4297 = vmatpush1.msra.mxu0 0.0
    %4298 = vmatprep.subr.mxu0 0.0
    %4299 = vmatpush1.msra.mxu0 0.0
    %4300 = vmatprep.subr.mxu0 0.0
    %4301 = vmatpush1.msra.mxu0 0.0
    %4302 = vmatprep.subr.mxu0 0.0
    %4303 = vmatpush1.msra.mxu0 0.0
    %4304 = vmatprep.subr.mxu0 0.0
    %4305 = vmatpush1.msra.mxu0 0.0
    %4306 = vmatprep.subr.mxu0 0.0
    %4307 = vmatpush1.msra.mxu0 0.0
    %4308 = vmatprep.subr.mxu0 0.0
    %4309 = vmatpush1.msra.mxu0 0.0
    %4310 = vmatprep.subr.mxu0 0.0
    %4311 = vmatpush1.msra.mxu0 0.0
    %4312 = vmatprep.subr.mxu0 0.0
    %4313 = vmatpush1.msra.mxu0 0.0
    %4314 = vmatprep.subr.mxu0 0.0
    %4315 = vmatpush1.msra.mxu0 0.0
    %4316 = vmatprep.subr.mxu0 0.0
    %4317 = vmatpush1.msra.mxu0 0.0
    %4318 = vmatprep.subr.mxu0 0.0
    %4319 = vmatpush1.msra.mxu0 0.0
    %4320 = vmatprep.subr.mxu0 0.0
    %4321 = vmatpush1.msra.mxu0 0.0
    %4322 = vmatprep.subr.mxu0 0.0
    %4323 = vmatpush1.msra.mxu0 0.0
    %4324 = vmatprep.subr.mxu0 0.0
    %4325 = vmatpush1.msra.mxu0 0.0
    %4326 = vmatprep.subr.mxu0 0.0
    %4327 = vmatpush1.msra.mxu0 0.0
    %4328 = vmatprep.subr.mxu0 0.0
    %4329 = vmatpush1.msra.mxu0 0.0
    %4330 = vmatprep.subr.mxu0 0.0
    %4331 = vmatpush1.msra.mxu0 0.0
    %4332 = vmatprep.subr.mxu0 0.0
    %4333 = vmatpush1.msra.mxu0 0.0
    %4334 = vmatprep.subr.mxu0 0.0
    %4335 = vmatpush1.msra.mxu0 0.0
    %4336 = vmatprep.mubr.f32.mxu0 0.0
    %v4337 = vand.u32 %v4266, 4294901760
    %v4338 = vsub.f32 %v4266, %v4337
    %v4339 = vand.u32 %v4338, 4294901760
    %v4340 = vsub.f32 %v4338, %v4339
    %v4341 = vand.u32 %v4340, 4294901760
    %4342 = vmatmul.mubr.f32.gmra.mrb[0].mxu0 %v4341
    %v4343 = vpop.f32.mrb[0].mxu0
    %v4344 = vadd.f32 0.0, %v4343
    %v4345 = vpop.f32.mrb[0].mxu0
    %4346 = vdwg.mxu0
    %4347 = vmatprep.subr.mxu0 0.0
    %v4348 = vand.u32 %v571, 4294901760
    %v4349 = vsub.f32 %v571, %v4348
    %v4350 = vand.u32 %v4349, 4294901760
    %v4351 = vsub.f32 %v4349, %v4350
    %v4352 = vand.u32 %v4351, 4294901760
    %4353 = vmatpush1.msra.mxu0 %v4352
    %4354 = vmatprep.subr.mxu0 0.0
    %v4355 = vand.u32 %v572, 4294901760
    %v4356 = vsub.f32 %v572, %v4355
    %v4357 = vand.u32 %v4356, 4294901760
    %v4358 = vsub.f32 %v4356, %v4357
    %v4359 = vand.u32 %v4358, 4294901760
    %4360 = vmatpush1.msra.mxu0 %v4359
    %4361 = vmatprep.subr.mxu0 0.0
    %v4362 = vand.u32 %v573, 4294901760
    %v4363 = vsub.f32 %v573, %v4362
    %v4364 = vand.u32 %v4363, 4294901760
    %v4365 = vsub.f32 %v4363, %v4364
    %v4366 = vand.u32 %v4365, 4294901760
    %4367 = vmatpush1.msra.mxu0 %v4366
    %4368 = vmatprep.subr.mxu0 0.0
    %v4369 = vand.u32 %v574, 4294901760
    %v4370 = vsub.f32 %v574, %v4369
    %v4371 = vand.u32 %v4370, 4294901760
    %v4372 = vsub.f32 %v4370, %v4371
    %v4373 = vand.u32 %v4372, 4294901760
    %4374 = vmatpush1.msra.mxu0 %v4373
    %4375 = vmatprep.subr.mxu0 0.0
    %4376 = vmatpush1.msra.mxu0 0.0
    %4377 = vmatprep.subr.mxu0 0.0
    %4378 = vmatpush1.msra.mxu0 0.0
    %4379 = vmatprep.subr.mxu0 0.0
    %4380 = vmatpush1.msra.mxu0 0.0
    %4381 = vmatprep.subr.mxu0 0.0
    %4382 = vmatpush1.msra.mxu0 0.0
    %4383 = vmatprep.subr.mxu0 0.0
    %4384 = vmatpush1.msra.mxu0 0.0
    %4385 = vmatprep.subr.mxu0 0.0
    %4386 = vmatpush1.msra.mxu0 0.0
    %4387 = vmatprep.subr.mxu0 0.0
    %4388 = vmatpush1.msra.mxu0 0.0
    %4389 = vmatprep.subr.mxu0 0.0
    %4390 = vmatpush1.msra.mxu0 0.0
    %4391 = vmatprep.subr.mxu0 0.0
    %4392 = vmatpush1.msra.mxu0 0.0
    %4393 = vmatprep.subr.mxu0 0.0
    %4394 = vmatpush1.msra.mxu0 0.0
    %4395 = vmatprep.subr.mxu0 0.0
    %4396 = vmatpush1.msra.mxu0 0.0
    %4397 = vmatprep.subr.mxu0 0.0
    %4398 = vmatpush1.msra.mxu0 0.0
    %4399 = vmatprep.subr.mxu0 0.0
    %4400 = vmatpush1.msra.mxu0 0.0
    %4401 = vmatprep.subr.mxu0 0.0
    %4402 = vmatpush1.msra.mxu0 0.0
    %4403 = vmatprep.subr.mxu0 0.0
    %4404 = vmatpush1.msra.mxu0 0.0
    %4405 = vmatprep.subr.mxu0 0.0
    %4406 = vmatpush1.msra.mxu0 0.0
    %4407 = vmatprep.subr.mxu0 0.0
    %4408 = vmatpush1.msra.mxu0 0.0
    %4409 = vmatprep.subr.mxu0 0.0
    %4410 = vmatpush1.msra.mxu0 0.0
    %4411 = vmatprep.subr.mxu0 0.0
    %4412 = vmatpush1.msra.mxu0 0.0
    %4413 = vmatprep.subr.mxu0 0.0
    %4414 = vmatpush1.msra.mxu0 0.0
    %4415 = vmatprep.subr.mxu0 0.0
    %4416 = vmatpush1.msra.mxu0 0.0
    %4417 = vmatprep.subr.mxu0 0.0
    %4418 = vmatpush1.msra.mxu0 0.0
    %4419 = vmatprep.subr.mxu0 0.0
    %4420 = vmatpush1.msra.mxu0 0.0
    %4421 = vmatprep.subr.mxu0 0.0
    %4422 = vmatpush1.msra.mxu0 0.0
    %4423 = vmatprep.subr.mxu0 0.0
    %4424 = vmatpush1.msra.mxu0 0.0
    %4425 = vmatprep.subr.mxu0 0.0
    %4426 = vmatpush1.msra.mxu0 0.0
    %4427 = vmatprep.subr.mxu0 0.0
    %4428 = vmatpush1.msra.mxu0 0.0
    %4429 = vmatprep.subr.mxu0 0.0
    %4430 = vmatpush1.msra.mxu0 0.0
    %4431 = vmatprep.mubr.f32.mxu0 0.0
    %v4432 = vand.u32 %v4266, 4294901760
    %4433 = vmatmul.mubr.f32.gmra.mrb[0].mxu0 %v4432
    %v4434 = vpop.f32.mrb[0].mxu0
    %v4435 = vadd.f32 %v4344, %v4434
    %v4436 = vpop.f32.mrb[0].mxu0
    %4437 = vdwg.mxu0
    %4438 = vmatprep.subr.mxu0 0.0
    %v4439 = vand.u32 %v571, 4294901760
    %v4440 = vsub.f32 %v571, %v4439
    %4441 = vmatpush1.msra.mxu0 %v4440
    %4442 = vmatprep.subr.mxu0 0.0
    %v4443 = vand.u32 %v572, 4294901760
    %v4444 = vsub.f32 %v572, %v4443
    %4445 = vmatpush1.msra.mxu0 %v4444
    %4446 = vmatprep.subr.mxu0 0.0
    %v4447 = vand.u32 %v573, 4294901760
    %v4448 = vsub.f32 %v573, %v4447
    %4449 = vmatpush1.msra.mxu0 %v4448
    %4450 = vmatprep.subr.mxu0 0.0
    %v4451 = vand.u32 %v574, 4294901760
    %v4452 = vsub.f32 %v574, %v4451
    %4453 = vmatpush1.msra.mxu0 %v4452
    %4454 = vmatprep.subr.mxu0 0.0
    %4455 = vmatpush1.msra.mxu0 0.0
    %4456 = vmatprep.subr.mxu0 0.0
    %4457 = vmatpush1.msra.mxu0 0.0
    %4458 = vmatprep.subr.mxu0 0.0
    %4459 = vmatpush1.msra.mxu0 0.0
    %4460 = vmatprep.subr.mxu0 0.0
    %4461 = vmatpush1.msra.mxu0 0.0
    %4462 = vmatprep.subr.mxu0 0.0
    %4463 = vmatpush1.msra.mxu0 0.0
    %4464 = vmatprep.subr.mxu0 0.0
    %4465 = vmatpush1.msra.mxu0 0.0
    %4466 = vmatprep.subr.mxu0 0.0
    %4467 = vmatpush1.msra.mxu0 0.0
    %4468 = vmatprep.subr.mxu0 0.0
    %4469 = vmatpush1.msra.mxu0 0.0
    %4470 = vmatprep.subr.mxu0 0.0
    %4471 = vmatpush1.msra.mxu0 0.0
    %4472 = vmatprep.subr.mxu0 0.0
    %4473 = vmatpush1.msra.mxu0 0.0
    %4474 = vmatprep.subr.mxu0 0.0
    %4475 = vmatpush1.msra.mxu0 0.0
    %4476 = vmatprep.subr.mxu0 0.0
    %4477 = vmatpush1.msra.mxu0 0.0
    %4478 = vmatprep.subr.mxu0 0.0
    %4479 = vmatpush1.msra.mxu0 0.0
    %4480 = vmatprep.subr.mxu0 0.0
    %4481 = vmatpush1.msra.mxu0 0.0
    %4482 = vmatprep.subr.mxu0 0.0
    %4483 = vmatpush1.msra.mxu0 0.0
    %4484 = vmatprep.subr.mxu0 0.0
    %4485 = vmatpush1.msra.mxu0 0.0
    %4486 = vmatprep.subr.mxu0 0.0
    %4487 = vmatpush1.msra.mxu0 0.0
    %4488 = vmatprep.subr.mxu0 0.0
    %4489 = vmatpush1.msra.mxu0 0.0
    %4490 = vmatprep.subr.mxu0 0.0
    %4491 = vmatpush1.msra.mxu0 0.0
    %4492 = vmatprep.subr.mxu0 0.0
    %4493 = vmatpush1.msra.mxu0 0.0
    %4494 = vmatprep.subr.mxu0 0.0
    %4495 = vmatpush1.msra.mxu0 0.0
    %4496 = vmatprep.subr.mxu0 0.0
    %4497 = vmatpush1.msra.mxu0 0.0
    %4498 = vmatprep.subr.mxu0 0.0
    %4499 = vmatpush1.msra.mxu0 0.0
    %4500 = vmatprep.subr.mxu0 0.0
    %4501 = vmatpush1.msra.mxu0 0.0
    %4502 = vmatprep.subr.mxu0 0.0
    %4503 = vmatpush1.msra.mxu0 0.0
    %4504 = vmatprep.subr.mxu0 0.0
    %4505 = vmatpush1.msra.mxu0 0.0
    %4506 = vmatprep.subr.mxu0 0.0
    %4507 = vmatpush1.msra.mxu0 0.0
    %4508 = vmatprep.subr.mxu0 0.0
    %4509 = vmatpush1.msra.mxu0 0.0
    %4510 = vmatprep.mubr.f32.mxu0 0.0
    %v4511 = vand.u32 %v4266, 4294901760
    %v4512 = vsub.f32 %v4266, %v4511
    %4513 = vmatmul.mubr.f32.gmra.mrb[0].mxu0 %v4512
    %v4514 = vpop.f32.mrb[0].mxu0
    %v4515 = vadd.f32 %v4435, %v4514
    %v4516 = vpop.f32.mrb[0].mxu0
    %4517 = vdwg.mxu0
    %4518 = vmatprep.subr.mxu0 0.0
    %v4519 = vand.u32 %v571, 4294901760
    %4520 = vmatpush1.msra.mxu0 %v4519
    %4521 = vmatprep.subr.mxu0 0.0
    %v4522 = vand.u32 %v572, 4294901760
    %4523 = vmatpush1.msra.mxu0 %v4522
    %4524 = vmatprep.subr.mxu0 0.0
    %v4525 = vand.u32 %v573, 4294901760
    %4526 = vmatpush1.msra.mxu0 %v4525
    %4527 = vmatprep.subr.mxu0 0.0
    %v4528 = vand.u32 %v574, 4294901760
    %4529 = vmatpush1.msra.mxu0 %v4528
    %4530 = vmatprep.subr.mxu0 0.0
    %4531 = vmatpush1.msra.mxu0 0.0
    %4532 = vmatprep.subr.mxu0 0.0
    %4533 = vmatpush1.msra.mxu0 0.0
    %4534 = vmatprep.subr.mxu0 0.0
    %4535 = vmatpush1.msra.mxu0 0.0
    %4536 = vmatprep.subr.mxu0 0.0
    %4537 = vmatpush1.msra.mxu0 0.0
    %4538 = vmatprep.subr.mxu0 0.0
    %4539 = vmatpush1.msra.mxu0 0.0
    %4540 = vmatprep.subr.mxu0 0.0
    %4541 = vmatpush1.msra.mxu0 0.0
    %4542 = vmatprep.subr.mxu0 0.0
    %4543 = vmatpush1.msra.mxu0 0.0
    %4544 = vmatprep.subr.mxu0 0.0
    %4545 = vmatpush1.msra.mxu0 0.0
    %4546 = vmatprep.subr.mxu0 0.0
    %4547 = vmatpush1.msra.mxu0 0.0
    %4548 = vmatprep.subr.mxu0 0.0
    %4549 = vmatpush1.msra.mxu0 0.0
    %4550 = vmatprep.subr.mxu0 0.0
    %4551 = vmatpush1.msra.mxu0 0.0
    %4552 = vmatprep.subr.mxu0 0.0
    %4553 = vmatpush1.msra.mxu0 0.0
    %4554 = vmatprep.subr.mxu0 0.0
    %4555 = vmatpush1.msra.mxu0 0.0
    %4556 = vmatprep.subr.mxu0 0.0
    %4557 = vmatpush1.msra.mxu0 0.0
    %4558 = vmatprep.subr.mxu0 0.0
    %4559 = vmatpush1.msra.mxu0 0.0
    %4560 = vmatprep.subr.mxu0 0.0
    %4561 = vmatpush1.msra.mxu0 0.0
    %4562 = vmatprep.subr.mxu0 0.0
    %4563 = vmatpush1.msra.mxu0 0.0
    %4564 = vmatprep.subr.mxu0 0.0
    %4565 = vmatpush1.msra.mxu0 0.0
    %4566 = vmatprep.subr.mxu0 0.0
    %4567 = vmatpush1.msra.mxu0 0.0
    %4568 = vmatprep.subr.mxu0 0.0
    %4569 = vmatpush1.msra.mxu0 0.0
    %4570 = vmatprep.subr.mxu0 0.0
    %4571 = vmatpush1.msra.mxu0 0.0
    %4572 = vmatprep.subr.mxu0 0.0
    %4573 = vmatpush1.msra.mxu0 0.0
    %4574 = vmatprep.subr.mxu0 0.0
    %4575 = vmatpush1.msra.mxu0 0.0
    %4576 = vmatprep.subr.mxu0 0.0
    %4577 = vmatpush1.msra.mxu0 0.0
    %4578 = vmatprep.subr.mxu0 0.0
    %4579 = vmatpush1.msra.mxu0 0.0
    %4580 = vmatprep.subr.mxu0 0.0
    %4581 = vmatpush1.msra.mxu0 0.0
    %4582 = vmatprep.subr.mxu0 0.0
    %4583 = vmatpush1.msra.mxu0 0.0
    %4584 = vmatprep.subr.mxu0 0.0
    %4585 = vmatpush1.msra.mxu0 0.0
    %4586 = vmatprep.mubr.f32.mxu0 0.0
    %v4587 = vand.u32 %v4266, 4294901760
    %v4588 = vsub.f32 %v4266, %v4587
    %v4589 = vand.u32 %v4588, 4294901760
    %4590 = vmatmul.mubr.f32.gmra.mrb[0].mxu0 %v4589
    %v4591 = vpop.f32.mrb[0].mxu0
    %v4592 = vadd.f32 %v4515, %v4591
    %v4593 = vpop.f32.mrb[0].mxu0
    %4594 = vdwg.mxu0
    %4595 = vmatprep.subr.mxu0 0.0
    %v4596 = vand.u32 %v571, 4294901760
    %v4597 = vsub.f32 %v571, %v4596
    %v4598 = vand.u32 %v4597, 4294901760
    %4599 = vmatpush1.msra.mxu0 %v4598
    %4600 = vmatprep.subr.mxu0 0.0
    %v4601 = vand.u32 %v572, 4294901760
    %v4602 = vsub.f32 %v572, %v4601
    %v4603 = vand.u32 %v4602, 4294901760
    %4604 = vmatpush1.msra.mxu0 %v4603
    %4605 = vmatprep.subr.mxu0 0.0
    %v4606 = vand.u32 %v573, 4294901760
    %v4607 = vsub.f32 %v573, %v4606
    %v4608 = vand.u32 %v4607, 4294901760
    %4609 = vmatpush1.msra.mxu0 %v4608
    %4610 = vmatprep.subr.mxu0 0.0
    %v4611 = vand.u32 %v574, 4294901760
    %v4612 = vsub.f32 %v574, %v4611
    %v4613 = vand.u32 %v4612, 4294901760
    %4614 = vmatpush1.msra.mxu0 %v4613
    %4615 = vmatprep.subr.mxu0 0.0
    %4616 = vmatpush1.msra.mxu0 0.0
    %4617 = vmatprep.subr.mxu0 0.0
    %4618 = vmatpush1.msra.mxu0 0.0
    %4619 = vmatprep.subr.mxu0 0.0
    %4620 = vmatpush1.msra.mxu0 0.0
    %4621 = vmatprep.subr.mxu0 0.0
    %4622 = vmatpush1.msra.mxu0 0.0
    %4623 = vmatprep.subr.mxu0 0.0
    %4624 = vmatpush1.msra.mxu0 0.0
    %4625 = vmatprep.subr.mxu0 0.0
    %4626 = vmatpush1.msra.mxu0 0.0
    %4627 = vmatprep.subr.mxu0 0.0
    %4628 = vmatpush1.msra.mxu0 0.0
    %4629 = vmatprep.subr.mxu0 0.0
    %4630 = vmatpush1.msra.mxu0 0.0
    %4631 = vmatprep.subr.mxu0 0.0
    %4632 = vmatpush1.msra.mxu0 0.0
    %4633 = vmatprep.subr.mxu0 0.0
    %4634 = vmatpush1.msra.mxu0 0.0
    %4635 = vmatprep.subr.mxu0 0.0
    %4636 = vmatpush1.msra.mxu0 0.0
    %4637 = vmatprep.subr.mxu0 0.0
    %4638 = vmatpush1.msra.mxu0 0.0
    %4639 = vmatprep.subr.mxu0 0.0
    %4640 = vmatpush1.msra.mxu0 0.0
    %4641 = vmatprep.subr.mxu0 0.0
    %4642 = vmatpush1.msra.mxu0 0.0
    %4643 = vmatprep.subr.mxu0 0.0
    %4644 = vmatpush1.msra.mxu0 0.0
    %4645 = vmatprep.subr.mxu0 0.0
    %4646 = vmatpush1.msra.mxu0 0.0
    %4647 = vmatprep.subr.mxu0 0.0
    %4648 = vmatpush1.msra.mxu0 0.0
    %4649 = vmatprep.subr.mxu0 0.0
    %4650 = vmatpush1.msra.mxu0 0.0
    %4651 = vmatprep.subr.mxu0 0.0
    %4652 = vmatpush1.msra.mxu0 0.0
    %4653 = vmatprep.subr.mxu0 0.0
    %4654 = vmatpush1.msra.mxu0 0.0
    %4655 = vmatprep.subr.mxu0 0.0
    %4656 = vmatpush1.msra.mxu0 0.0
    %4657 = vmatprep.subr.mxu0 0.0
    %4658 = vmatpush1.msra.mxu0 0.0
    %4659 = vmatprep.subr.mxu0 0.0
    %4660 = vmatpush1.msra.mxu0 0.0
    %4661 = vmatprep.subr.mxu0 0.0
    %4662 = vmatpush1.msra.mxu0 0.0
    %4663 = vmatprep.subr.mxu0 0.0
    %4664 = vmatpush1.msra.mxu0 0.0
    %4665 = vmatprep.subr.mxu0 0.0
    %4666 = vmatpush1.msra.mxu0 0.0
    %4667 = vmatprep.subr.mxu0 0.0
    %4668 = vmatpush1.msra.mxu0 0.0
    %4669 = vmatprep.subr.mxu0 0.0
    %4670 = vmatpush1.msra.mxu0 0.0
    %4671 = vmatprep.mubr.f32.mxu0 0.0
    %v4672 = vand.u32 %v4266, 4294901760
    %4673 = vmatmul.mubr.f32.gmra.mrb[0].mxu0 %v4672
    %v4674 = vpop.f32.mrb[0].mxu0
    %v4675 = vadd.f32 %v4592, %v4674
    %v4676 = vpop.f32.mrb[0].mxu0
    %4677 = vdwg.mxu0
    %4678 = vmatprep.subr.mxu0 0.0
    %v4679 = vand.u32 %v571, 4294901760
    %4680 = vmatpush1.msra.mxu0 %v4679
    %4681 = vmatprep.subr.mxu0 0.0
    %v4682 = vand.u32 %v572, 4294901760
    %4683 = vmatpush1.msra.mxu0 %v4682
    %4684 = vmatprep.subr.mxu0 0.0
    %v4685 = vand.u32 %v573, 4294901760
    %4686 = vmatpush1.msra.mxu0 %v4685
    %4687 = vmatprep.subr.mxu0 0.0
    %v4688 = vand.u32 %v574, 4294901760
    %4689 = vmatpush1.msra.mxu0 %v4688
    %4690 = vmatprep.subr.mxu0 0.0
    %4691 = vmatpush1.msra.mxu0 0.0
    %4692 = vmatprep.subr.mxu0 0.0
    %4693 = vmatpush1.msra.mxu0 0.0
    %4694 = vmatprep.subr.mxu0 0.0
    %4695 = vmatpush1.msra.mxu0 0.0
    %4696 = vmatprep.subr.mxu0 0.0
    %4697 = vmatpush1.msra.mxu0 0.0
    %4698 = vmatprep.subr.mxu0 0.0
    %4699 = vmatpush1.msra.mxu0 0.0
    %4700 = vmatprep.subr.mxu0 0.0
    %4701 = vmatpush1.msra.mxu0 0.0
    %4702 = vmatprep.subr.mxu0 0.0
    %4703 = vmatpush1.msra.mxu0 0.0
    %4704 = vmatprep.subr.mxu0 0.0
    %4705 = vmatpush1.msra.mxu0 0.0
    %4706 = vmatprep.subr.mxu0 0.0
    %4707 = vmatpush1.msra.mxu0 0.0
    %4708 = vmatprep.subr.mxu0 0.0
    %4709 = vmatpush1.msra.mxu0 0.0
    %4710 = vmatprep.subr.mxu0 0.0
    %4711 = vmatpush1.msra.mxu0 0.0
    %4712 = vmatprep.subr.mxu0 0.0
    %4713 = vmatpush1.msra.mxu0 0.0
    %4714 = vmatprep.subr.mxu0 0.0
    %4715 = vmatpush1.msra.mxu0 0.0
    %4716 = vmatprep.subr.mxu0 0.0
    %4717 = vmatpush1.msra.mxu0 0.0
    %4718 = vmatprep.subr.mxu0 0.0
    %4719 = vmatpush1.msra.mxu0 0.0
    %4720 = vmatprep.subr.mxu0 0.0
    %4721 = vmatpush1.msra.mxu0 0.0
    %4722 = vmatprep.subr.mxu0 0.0
    %4723 = vmatpush1.msra.mxu0 0.0
    %4724 = vmatprep.subr.mxu0 0.0
    %4725 = vmatpush1.msra.mxu0 0.0
    %4726 = vmatprep.subr.mxu0 0.0
    %4727 = vmatpush1.msra.mxu0 0.0
    %4728 = vmatprep.subr.mxu0 0.0
    %4729 = vmatpush1.msra.mxu0 0.0
    %4730 = vmatprep.subr.mxu0 0.0
    %4731 = vmatpush1.msra.mxu0 0.0
    %4732 = vmatprep.subr.mxu0 0.0
    %4733 = vmatpush1.msra.mxu0 0.0
    %4734 = vmatprep.subr.mxu0 0.0
    %4735 = vmatpush1.msra.mxu0 0.0
    %4736 = vmatprep.subr.mxu0 0.0
    %4737 = vmatpush1.msra.mxu0 0.0
    %4738 = vmatprep.subr.mxu0 0.0
    %4739 = vmatpush1.msra.mxu0 0.0
    %4740 = vmatprep.subr.mxu0 0.0
    %4741 = vmatpush1.msra.mxu0 0.0
    %4742 = vmatprep.subr.mxu0 0.0
    %4743 = vmatpush1.msra.mxu0 0.0
    %4744 = vmatprep.subr.mxu0 0.0
    %4745 = vmatpush1.msra.mxu0 0.0
    %4746 = vmatprep.mubr.f32.mxu0 0.0
    %v4747 = vand.u32 %v4266, 4294901760
    %4748 = vmatmul.mubr.f32.gmra.mrb[0].mxu0 %v4747
    %v4749 = vpop.f32.mrb[0].mxu0
    %v4750 = vadd.f32 %v4675, %v4749
    %v4751 = vpop.f32.mrb[0].mxu0
    %4752 = vdwg.mxu0
    %v4754 = vrot.slane %v4750, 1
    %v4756 = vadd.f32 %v568, %v4754
    %v4757 = vxor.u32 %v4756, 2147483648
    %v4758 = vmul.f32 %v4757, 1.442695
    %v4759 = vpow.pop %v4758
    %v4760 = vadd.f32 %v4759, 1.0
    %v4761 = vrcp.pop %v4760
    %v4762 = vmul.f32 1.0, %v4761
    %v4763 = vtanh.pop %v4756
    %v4765 = vrot.slane %v4250, 7
    %v4767 = vmul.f32 %v4762, %v4765
    %4769 = vrot.lane.b32.xlu0 %v4763, 64
    %v4770 = vpop.permute.xlu0 %4769
    %v4772 = vmul.f32 %v4762, %v4770
    %4774 = vrot.lane.b32.xlu0 %v4772, 32
    %v4775 = vpop.permute.xlu0 %4774
    %v4777 = vadd.f32 %v4767, %v4775
    %v4778 = vtanh.pop %v4777
    %4780 = vrot.lane.b32.xlu0 %v4778, 64
    %v4781 = vpop.permute.xlu0 %4780
    %v4783 = vmul.f32 %v4762, %v4781
    %4785 = vrot.lane.b32.xlu0 %v4783, 32
    %v4786 = vpop.permute.xlu0 %4785
    %vm4788 = vcmask 261127
    %4789 = vst.msk [vmem:[#allocation2] sm:$0x80] %vm4788, %v4786
    %4790 = vst.msk [vmem:[#allocation9 - $0x7] sm:$0x80] %vm4788, %v4786
    %4792 = vrot.lane.b32.xlu0 %v4777, 96
    %v4793 = vpop.permute.xlu0 %4792
    %4795 = vst.msk [vmem:[#allocation11 - $0x7] sm:$0x80] %vm4788, %v4793
    %v4796 = vld [vmem:[#allocation2] sm:$0xff]
    %v4797 = vld [vmem:[%s6] sm:$0xff]
    %v4798 = vld [vmem:[%s6 + $0x8] sm:$0xff]
    %v4799 = vld [vmem:[%s6 + $0x10] sm:$0xff]
    %v4800 = vld [vmem:[%s6 + $0x18] sm:$0xff]
    %v4801 = vld [vmem:[%s7] sm:$0x1]
    %v4803 = vlaneseq
    %v4804 = vshrl.u32 %v4803, 7
    %v4805 = vsub.s32 0, %v4804
    %v4806 = vrot.slane %v4801, %v4805
    %v4809 = vsel %vm82, %v4796, 0
    %4811 = vmatprep.subr.mxu0 0.0
    %v4812 = vand.u32 %v4797, 4294901760
    %4813 = vmatpush1.msra.mxu0 %v4812
    %4814 = vmatprep.subr.mxu0 0.0
    %v4815 = vand.u32 %v4798, 4294901760
    %4816 = vmatpush1.msra.mxu0 %v4815
    %4817 = vmatprep.subr.mxu0 0.0
    %v4818 = vand.u32 %v4799, 4294901760
    %4819 = vmatpush1.msra.mxu0 %v4818
    %4820 = vmatprep.subr.mxu0 0.0
    %v4821 = vand.u32 %v4800, 4294901760
    %4822 = vmatpush1.msra.mxu0 %v4821
    %4823 = vmatprep.subr.mxu0 0.0
    %4824 = vmatpush1.msra.mxu0 0.0
    %4825 = vmatprep.subr.mxu0 0.0
    %4826 = vmatpush1.msra.mxu0 0.0
    %4827 = vmatprep.subr.mxu0 0.0
    %4828 = vmatpush1.msra.mxu0 0.0
    %4829 = vmatprep.subr.mxu0 0.0
    %4830 = vmatpush1.msra.mxu0 0.0
    %4831 = vmatprep.subr.mxu0 0.0
    %4832 = vmatpush1.msra.mxu0 0.0
    %4833 = vmatprep.subr.mxu0 0.0
    %4834 = vmatpush1.msra.mxu0 0.0
    %4835 = vmatprep.subr.mxu0 0.0
    %4836 = vmatpush1.msra.mxu0 0.0
    %4837 = vmatprep.subr.mxu0 0.0
    %4838 = vmatpush1.msra.mxu0 0.0
    %4839 = vmatprep.subr.mxu0 0.0
    %4840 = vmatpush1.msra.mxu0 0.0
    %4841 = vmatprep.subr.mxu0 0.0
    %4842 = vmatpush1.msra.mxu0 0.0
    %4843 = vmatprep.subr.mxu0 0.0
    %4844 = vmatpush1.msra.mxu0 0.0
    %4845 = vmatprep.subr.mxu0 0.0
    %4846 = vmatpush1.msra.mxu0 0.0
    %4847 = vmatprep.subr.mxu0 0.0
    %4848 = vmatpush1.msra.mxu0 0.0
    %4849 = vmatprep.subr.mxu0 0.0
    %4850 = vmatpush1.msra.mxu0 0.0
    %4851 = vmatprep.subr.mxu0 0.0
    %4852 = vmatpush1.msra.mxu0 0.0
    %4853 = vmatprep.subr.mxu0 0.0
    %4854 = vmatpush1.msra.mxu0 0.0
    %4855 = vmatprep.subr.mxu0 0.0
    %4856 = vmatpush1.msra.mxu0 0.0
    %4857 = vmatprep.subr.mxu0 0.0
    %4858 = vmatpush1.msra.mxu0 0.0
    %4859 = vmatprep.subr.mxu0 0.0
    %4860 = vmatpush1.msra.mxu0 0.0
    %4861 = vmatprep.subr.mxu0 0.0
    %4862 = vmatpush1.msra.mxu0 0.0
    %4863 = vmatprep.subr.mxu0 0.0
    %4864 = vmatpush1.msra.mxu0 0.0
    %4865 = vmatprep.subr.mxu0 0.0
    %4866 = vmatpush1.msra.mxu0 0.0
    %4867 = vmatprep.subr.mxu0 0.0
    %4868 = vmatpush1.msra.mxu0 0.0
    %4869 = vmatprep.subr.mxu0 0.0
    %4870 = vmatpush1.msra.mxu0 0.0
    %4871 = vmatprep.subr.mxu0 0.0
    %4872 = vmatpush1.msra.mxu0 0.0
    %4873 = vmatprep.subr.mxu0 0.0
    %4874 = vmatpush1.msra.mxu0 0.0
    %4875 = vmatprep.subr.mxu0 0.0
    %4876 = vmatpush1.msra.mxu0 0.0
    %4877 = vmatprep.subr.mxu0 0.0
    %4878 = vmatpush1.msra.mxu0 0.0
    %4879 = vmatprep.mubr.f32.mxu0 0.0
    %v4880 = vand.u32 %v4809, 4294901760
    %v4881 = vsub.f32 %v4809, %v4880
    %v4882 = vand.u32 %v4881, 4294901760
    %v4883 = vsub.f32 %v4881, %v4882
    %v4884 = vand.u32 %v4883, 4294901760
    %4885 = vmatmul.mubr.f32.gmra.mrb[0].mxu0 %v4884
    %v4886 = vpop.f32.mrb[0].mxu0
    %v4887 = vadd.f32 %v4806, %v4886
    %v4888 = vpop.f32.mrb[0].mxu0
    %4889 = vdwg.mxu0
    %4890 = vmatprep.subr.mxu0 0.0
    %v4891 = vand.u32 %v4797, 4294901760
    %v4892 = vsub.f32 %v4797, %v4891
    %v4893 = vand.u32 %v4892, 4294901760
    %v4894 = vsub.f32 %v4892, %v4893
    %v4895 = vand.u32 %v4894, 4294901760
    %4896 = vmatpush1.msra.mxu0 %v4895
    %4897 = vmatprep.subr.mxu0 0.0
    %v4898 = vand.u32 %v4798, 4294901760
    %v4899 = vsub.f32 %v4798, %v4898
    %v4900 = vand.u32 %v4899, 4294901760
    %v4901 = vsub.f32 %v4899, %v4900
    %v4902 = vand.u32 %v4901, 4294901760
    %4903 = vmatpush1.msra.mxu0 %v4902
    %4904 = vmatprep.subr.mxu0 0.0
    %v4905 = vand.u32 %v4799, 4294901760
    %v4906 = vsub.f32 %v4799, %v4905
    %v4907 = vand.u32 %v4906, 4294901760
    %v4908 = vsub.f32 %v4906, %v4907
    %v4909 = vand.u32 %v4908, 4294901760
    %4910 = vmatpush1.msra.mxu0 %v4909
    %4911 = vmatprep.subr.mxu0 0.0
    %v4912 = vand.u32 %v4800, 4294901760
    %v4913 = vsub.f32 %v4800, %v4912
    %v4914 = vand.u32 %v4913, 4294901760
    %v4915 = vsub.f32 %v4913, %v4914
    %v4916 = vand.u32 %v4915, 4294901760
    %4917 = vmatpush1.msra.mxu0 %v4916
    %4918 = vmatprep.subr.mxu0 0.0
    %4919 = vmatpush1.msra.mxu0 0.0
    %4920 = vmatprep.subr.mxu0 0.0
    %4921 = vmatpush1.msra.mxu0 0.0
    %4922 = vmatprep.subr.mxu0 0.0
    %4923 = vmatpush1.msra.mxu0 0.0
    %4924 = vmatprep.subr.mxu0 0.0
    %4925 = vmatpush1.msra.mxu0 0.0
    %4926 = vmatprep.subr.mxu0 0.0
    %4927 = vmatpush1.msra.mxu0 0.0
    %4928 = vmatprep.subr.mxu0 0.0
    %4929 = vmatpush1.msra.mxu0 0.0
    %4930 = vmatprep.subr.mxu0 0.0
    %4931 = vmatpush1.msra.mxu0 0.0
    %4932 = vmatprep.subr.mxu0 0.0
    %4933 = vmatpush1.msra.mxu0 0.0
    %4934 = vmatprep.subr.mxu0 0.0
    %4935 = vmatpush1.msra.mxu0 0.0
    %4936 = vmatprep.subr.mxu0 0.0
    %4937 = vmatpush1.msra.mxu0 0.0
    %4938 = vmatprep.subr.mxu0 0.0
    %4939 = vmatpush1.msra.mxu0 0.0
    %4940 = vmatprep.subr.mxu0 0.0
    %4941 = vmatpush1.msra.mxu0 0.0
    %4942 = vmatprep.subr.mxu0 0.0
    %4943 = vmatpush1.msra.mxu0 0.0
    %4944 = vmatprep.subr.mxu0 0.0
    %4945 = vmatpush1.msra.mxu0 0.0
    %4946 = vmatprep.subr.mxu0 0.0
    %4947 = vmatpush1.msra.mxu0 0.0
    %4948 = vmatprep.subr.mxu0 0.0
    %4949 = vmatpush1.msra.mxu0 0.0
    %4950 = vmatprep.subr.mxu0 0.0
    %4951 = vmatpush1.msra.mxu0 0.0
    %4952 = vmatprep.subr.mxu0 0.0
    %4953 = vmatpush1.msra.mxu0 0.0
    %4954 = vmatprep.subr.mxu0 0.0
    %4955 = vmatpush1.msra.mxu0 0.0
    %4956 = vmatprep.subr.mxu0 0.0
    %4957 = vmatpush1.msra.mxu0 0.0
    %4958 = vmatprep.subr.mxu0 0.0
    %4959 = vmatpush1.msra.mxu0 0.0
    %4960 = vmatprep.subr.mxu0 0.0
    %4961 = vmatpush1.msra.mxu0 0.0
    %4962 = vmatprep.subr.mxu0 0.0
    %4963 = vmatpush1.msra.mxu0 0.0
    %4964 = vmatprep.subr.mxu0 0.0
    %4965 = vmatpush1.msra.mxu0 0.0
    %4966 = vmatprep.subr.mxu0 0.0
    %4967 = vmatpush1.msra.mxu0 0.0
    %4968 = vmatprep.subr.mxu0 0.0
    %4969 = vmatpush1.msra.mxu0 0.0
    %4970 = vmatprep.subr.mxu0 0.0
    %4971 = vmatpush1.msra.mxu0 0.0
    %4972 = vmatprep.subr.mxu0 0.0
    %4973 = vmatpush1.msra.mxu0 0.0
    %4974 = vmatprep.mubr.f32.mxu0 0.0
    %v4975 = vand.u32 %v4809, 4294901760
    %4976 = vmatmul.mubr.f32.gmra.mrb[0].mxu0 %v4975
    %v4977 = vpop.f32.mrb[0].mxu0
    %v4978 = vadd.f32 %v4887, %v4977
    %v4979 = vpop.f32.mrb[0].mxu0
    %4980 = vdwg.mxu0
    %4981 = vmatprep.subr.mxu0 0.0
    %v4982 = vand.u32 %v4797, 4294901760
    %v4983 = vsub.f32 %v4797, %v4982
    %4984 = vmatpush1.msra.mxu0 %v4983
    %4985 = vmatprep.subr.mxu0 0.0
    %v4986 = vand.u32 %v4798, 4294901760
    %v4987 = vsub.f32 %v4798, %v4986
    %4988 = vmatpush1.msra.mxu0 %v4987
    %4989 = vmatprep.subr.mxu0 0.0
    %v4990 = vand.u32 %v4799, 4294901760
    %v4991 = vsub.f32 %v4799, %v4990
    %4992 = vmatpush1.msra.mxu0 %v4991
    %4993 = vmatprep.subr.mxu0 0.0
    %v4994 = vand.u32 %v4800, 4294901760
    %v4995 = vsub.f32 %v4800, %v4994
    %4996 = vmatpush1.msra.mxu0 %v4995
    %4997 = vmatprep.subr.mxu0 0.0
    %4998 = vmatpush1.msra.mxu0 0.0
    %4999 = vmatprep.subr.mxu0 0.0
    %5000 = vmatpush1.msra.mxu0 0.0
    %5001 = vmatprep.subr.mxu0 0.0
    %5002 = vmatpush1.msra.mxu0 0.0
    %5003 = vmatprep.subr.mxu0 0.0
    %5004 = vmatpush1.msra.mxu0 0.0
    %5005 = vmatprep.subr.mxu0 0.0
    %5006 = vmatpush1.msra.mxu0 0.0
    %5007 = vmatprep.subr.mxu0 0.0
    %5008 = vmatpush1.msra.mxu0 0.0
    %5009 = vmatprep.subr.mxu0 0.0
    %5010 = vmatpush1.msra.mxu0 0.0
    %5011 = vmatprep.subr.mxu0 0.0
    %5012 = vmatpush1.msra.mxu0 0.0
    %5013 = vmatprep.subr.mxu0 0.0
    %5014 = vmatpush1.msra.mxu0 0.0
    %5015 = vmatprep.subr.mxu0 0.0
    %5016 = vmatpush1.msra.mxu0 0.0
    %5017 = vmatprep.subr.mxu0 0.0
    %5018 = vmatpush1.msra.mxu0 0.0
    %5019 = vmatprep.subr.mxu0 0.0
    %5020 = vmatpush1.msra.mxu0 0.0
    %5021 = vmatprep.subr.mxu0 0.0
    %5022 = vmatpush1.msra.mxu0 0.0
    %5023 = vmatprep.subr.mxu0 0.0
    %5024 = vmatpush1.msra.mxu0 0.0
    %5025 = vmatprep.subr.mxu0 0.0
    %5026 = vmatpush1.msra.mxu0 0.0
    %5027 = vmatprep.subr.mxu0 0.0
    %5028 = vmatpush1.msra.mxu0 0.0
    %5029 = vmatprep.subr.mxu0 0.0
    %5030 = vmatpush1.msra.mxu0 0.0
    %5031 = vmatprep.subr.mxu0 0.0
    %5032 = vmatpush1.msra.mxu0 0.0
    %5033 = vmatprep.subr.mxu0 0.0
    %5034 = vmatpush1.msra.mxu0 0.0
    %5035 = vmatprep.subr.mxu0 0.0
    %5036 = vmatpush1.msra.mxu0 0.0
    %5037 = vmatprep.subr.mxu0 0.0
    %5038 = vmatpush1.msra.mxu0 0.0
    %5039 = vmatprep.subr.mxu0 0.0
    %5040 = vmatpush1.msra.mxu0 0.0
    %5041 = vmatprep.subr.mxu0 0.0
    %5042 = vmatpush1.msra.mxu0 0.0
    %5043 = vmatprep.subr.mxu0 0.0
    %5044 = vmatpush1.msra.mxu0 0.0
    %5045 = vmatprep.subr.mxu0 0.0
    %5046 = vmatpush1.msra.mxu0 0.0
    %5047 = vmatprep.subr.mxu0 0.0
    %5048 = vmatpush1.msra.mxu0 0.0
    %5049 = vmatprep.subr.mxu0 0.0
    %5050 = vmatpush1.msra.mxu0 0.0
    %5051 = vmatprep.subr.mxu0 0.0
    %5052 = vmatpush1.msra.mxu0 0.0
    %5053 = vmatprep.mubr.f32.mxu0 0.0
    %v5054 = vand.u32 %v4809, 4294901760
    %v5055 = vsub.f32 %v4809, %v5054
    %5056 = vmatmul.mubr.f32.gmra.mrb[0].mxu0 %v5055
    %v5057 = vpop.f32.mrb[0].mxu0
    %v5058 = vadd.f32 %v4978, %v5057
    %v5059 = vpop.f32.mrb[0].mxu0
    %5060 = vdwg.mxu0
    %5061 = vmatprep.subr.mxu0 0.0
    %v5062 = vand.u32 %v4797, 4294901760
    %5063 = vmatpush1.msra.mxu0 %v5062
    %5064 = vmatprep.subr.mxu0 0.0
    %v5065 = vand.u32 %v4798, 4294901760
    %5066 = vmatpush1.msra.mxu0 %v5065
    %5067 = vmatprep.subr.mxu0 0.0
    %v5068 = vand.u32 %v4799, 4294901760
    %5069 = vmatpush1.msra.mxu0 %v5068
    %5070 = vmatprep.subr.mxu0 0.0
    %v5071 = vand.u32 %v4800, 4294901760
    %5072 = vmatpush1.msra.mxu0 %v5071
    %5073 = vmatprep.subr.mxu0 0.0
    %5074 = vmatpush1.msra.mxu0 0.0
    %5075 = vmatprep.subr.mxu0 0.0
    %5076 = vmatpush1.msra.mxu0 0.0
    %5077 = vmatprep.subr.mxu0 0.0
    %5078 = vmatpush1.msra.mxu0 0.0
    %5079 = vmatprep.subr.mxu0 0.0
    %5080 = vmatpush1.msra.mxu0 0.0
    %5081 = vmatprep.subr.mxu0 0.0
    %5082 = vmatpush1.msra.mxu0 0.0
    %5083 = vmatprep.subr.mxu0 0.0
    %5084 = vmatpush1.msra.mxu0 0.0
    %5085 = vmatprep.subr.mxu0 0.0
    %5086 = vmatpush1.msra.mxu0 0.0
    %5087 = vmatprep.subr.mxu0 0.0
    %5088 = vmatpush1.msra.mxu0 0.0
    %5089 = vmatprep.subr.mxu0 0.0
    %5090 = vmatpush1.msra.mxu0 0.0
    %5091 = vmatprep.subr.mxu0 0.0
    %5092 = vmatpush1.msra.mxu0 0.0
    %5093 = vmatprep.subr.mxu0 0.0
    %5094 = vmatpush1.msra.mxu0 0.0
    %5095 = vmatprep.subr.mxu0 0.0
    %5096 = vmatpush1.msra.mxu0 0.0
    %5097 = vmatprep.subr.mxu0 0.0
    %5098 = vmatpush1.msra.mxu0 0.0
    %5099 = vmatprep.subr.mxu0 0.0
    %5100 = vmatpush1.msra.mxu0 0.0
    %5101 = vmatprep.subr.mxu0 0.0
    %5102 = vmatpush1.msra.mxu0 0.0
    %5103 = vmatprep.subr.mxu0 0.0
    %5104 = vmatpush1.msra.mxu0 0.0
    %5105 = vmatprep.subr.mxu0 0.0
    %5106 = vmatpush1.msra.mxu0 0.0
    %5107 = vmatprep.subr.mxu0 0.0
    %5108 = vmatpush1.msra.mxu0 0.0
    %5109 = vmatprep.subr.mxu0 0.0
    %5110 = vmatpush1.msra.mxu0 0.0
    %5111 = vmatprep.subr.mxu0 0.0
    %5112 = vmatpush1.msra.mxu0 0.0
    %5113 = vmatprep.subr.mxu0 0.0
    %5114 = vmatpush1.msra.mxu0 0.0
    %5115 = vmatprep.subr.mxu0 0.0
    %5116 = vmatpush1.msra.mxu0 0.0
    %5117 = vmatprep.subr.mxu0 0.0
    %5118 = vmatpush1.msra.mxu0 0.0
    %5119 = vmatprep.subr.mxu0 0.0
    %5120 = vmatpush1.msra.mxu0 0.0
    %5121 = vmatprep.subr.mxu0 0.0
    %5122 = vmatpush1.msra.mxu0 0.0
    %5123 = vmatprep.subr.mxu0 0.0
    %5124 = vmatpush1.msra.mxu0 0.0
    %5125 = vmatprep.subr.mxu0 0.0
    %5126 = vmatpush1.msra.mxu0 0.0
    %5127 = vmatprep.subr.mxu0 0.0
    %5128 = vmatpush1.msra.mxu0 0.0
    %5129 = vmatprep.mubr.f32.mxu0 0.0
    %v5130 = vand.u32 %v4809, 4294901760
    %v5131 = vsub.f32 %v4809, %v5130
    %v5132 = vand.u32 %v5131, 4294901760
    %5133 = vmatmul.mubr.f32.gmra.mrb[0].mxu0 %v5132
    %v5134 = vpop.f32.mrb[0].mxu0
    %v5135 = vadd.f32 %v5058, %v5134
    %v5136 = vpop.f32.mrb[0].mxu0
    %5137 = vdwg.mxu0
    %5138 = vmatprep.subr.mxu0 0.0
    %v5139 = vand.u32 %v4797, 4294901760
    %v5140 = vsub.f32 %v4797, %v5139
    %v5141 = vand.u32 %v5140, 4294901760
    %5142 = vmatpush1.msra.mxu0 %v5141
    %5143 = vmatprep.subr.mxu0 0.0
    %v5144 = vand.u32 %v4798, 4294901760
    %v5145 = vsub.f32 %v4798, %v5144
    %v5146 = vand.u32 %v5145, 4294901760
    %5147 = vmatpush1.msra.mxu0 %v5146
    %5148 = vmatprep.subr.mxu0 0.0
    %v5149 = vand.u32 %v4799, 4294901760
    %v5150 = vsub.f32 %v4799, %v5149
    %v5151 = vand.u32 %v5150, 4294901760
    %5152 = vmatpush1.msra.mxu0 %v5151
    %5153 = vmatprep.subr.mxu0 0.0
    %v5154 = vand.u32 %v4800, 4294901760
    %v5155 = vsub.f32 %v4800, %v5154
    %v5156 = vand.u32 %v5155, 4294901760
    %5157 = vmatpush1.msra.mxu0 %v5156
    %5158 = vmatprep.subr.mxu0 0.0
    %5159 = vmatpush1.msra.mxu0 0.0
    %5160 = vmatprep.subr.mxu0 0.0
    %5161 = vmatpush1.msra.mxu0 0.0
    %5162 = vmatprep.subr.mxu0 0.0
    %5163 = vmatpush1.msra.mxu0 0.0
    %5164 = vmatprep.subr.mxu0 0.0
    %5165 = vmatpush1.msra.mxu0 0.0
    %5166 = vmatprep.subr.mxu0 0.0
    %5167 = vmatpush1.msra.mxu0 0.0
    %5168 = vmatprep.subr.mxu0 0.0
    %5169 = vmatpush1.msra.mxu0 0.0
    %5170 = vmatprep.subr.mxu0 0.0
    %5171 = vmatpush1.msra.mxu0 0.0
    %5172 = vmatprep.subr.mxu0 0.0
    %5173 = vmatpush1.msra.mxu0 0.0
    %5174 = vmatprep.subr.mxu0 0.0
    %5175 = vmatpush1.msra.mxu0 0.0
    %5176 = vmatprep.subr.mxu0 0.0
    %5177 = vmatpush1.msra.mxu0 0.0
    %5178 = vmatprep.subr.mxu0 0.0
    %5179 = vmatpush1.msra.mxu0 0.0
    %5180 = vmatprep.subr.mxu0 0.0
    %5181 = vmatpush1.msra.mxu0 0.0
    %5182 = vmatprep.subr.mxu0 0.0
    %5183 = vmatpush1.msra.mxu0 0.0
    %5184 = vmatprep.subr.mxu0 0.0
    %5185 = vmatpush1.msra.mxu0 0.0
    %5186 = vmatprep.subr.mxu0 0.0
    %5187 = vmatpush1.msra.mxu0 0.0
    %5188 = vmatprep.subr.mxu0 0.0
    %5189 = vmatpush1.msra.mxu0 0.0
    %5190 = vmatprep.subr.mxu0 0.0
    %5191 = vmatpush1.msra.mxu0 0.0
    %5192 = vmatprep.subr.mxu0 0.0
    %5193 = vmatpush1.msra.mxu0 0.0
    %5194 = vmatprep.subr.mxu0 0.0
    %5195 = vmatpush1.msra.mxu0 0.0
    %5196 = vmatprep.subr.mxu0 0.0
    %5197 = vmatpush1.msra.mxu0 0.0
    %5198 = vmatprep.subr.mxu0 0.0
    %5199 = vmatpush1.msra.mxu0 0.0
    %5200 = vmatprep.subr.mxu0 0.0
    %5201 = vmatpush1.msra.mxu0 0.0
    %5202 = vmatprep.subr.mxu0 0.0
    %5203 = vmatpush1.msra.mxu0 0.0
    %5204 = vmatprep.subr.mxu0 0.0
    %5205 = vmatpush1.msra.mxu0 0.0
    %5206 = vmatprep.subr.mxu0 0.0
    %5207 = vmatpush1.msra.mxu0 0.0
    %5208 = vmatprep.subr.mxu0 0.0
    %5209 = vmatpush1.msra.mxu0 0.0
    %5210 = vmatprep.subr.mxu0 0.0
    %5211 = vmatpush1.msra.mxu0 0.0
    %5212 = vmatprep.subr.mxu0 0.0
    %5213 = vmatpush1.msra.mxu0 0.0
    %5214 = vmatprep.mubr.f32.mxu0 0.0
    %v5215 = vand.u32 %v4809, 4294901760
    %5216 = vmatmul.mubr.f32.gmra.mrb[0].mxu0 %v5215
    %v5217 = vpop.f32.mrb[0].mxu0
    %v5218 = vadd.f32 %v5135, %v5217
    %v5219 = vpop.f32.mrb[0].mxu0
    %5220 = vdwg.mxu0
    %5221 = vmatprep.subr.mxu0 0.0
    %v5222 = vand.u32 %v4797, 4294901760
    %5223 = vmatpush1.msra.mxu0 %v5222
    %5224 = vmatprep.subr.mxu0 0.0
    %v5225 = vand.u32 %v4798, 4294901760
    %5226 = vmatpush1.msra.mxu0 %v5225
    %5227 = vmatprep.subr.mxu0 0.0
    %v5228 = vand.u32 %v4799, 4294901760
    %5229 = vmatpush1.msra.mxu0 %v5228
    %5230 = vmatprep.subr.mxu0 0.0
    %v5231 = vand.u32 %v4800, 4294901760
    %5232 = vmatpush1.msra.mxu0 %v5231
    %5233 = vmatprep.subr.mxu0 0.0
    %5234 = vmatpush1.msra.mxu0 0.0
    %5235 = vmatprep.subr.mxu0 0.0
    %5236 = vmatpush1.msra.mxu0 0.0
    %5237 = vmatprep.subr.mxu0 0.0
    %5238 = vmatpush1.msra.mxu0 0.0
    %5239 = vmatprep.subr.mxu0 0.0
    %5240 = vmatpush1.msra.mxu0 0.0
    %5241 = vmatprep.subr.mxu0 0.0
    %5242 = vmatpush1.msra.mxu0 0.0
    %5243 = vmatprep.subr.mxu0 0.0
    %5244 = vmatpush1.msra.mxu0 0.0
    %5245 = vmatprep.subr.mxu0 0.0
    %5246 = vmatpush1.msra.mxu0 0.0
    %5247 = vmatprep.subr.mxu0 0.0
    %5248 = vmatpush1.msra.mxu0 0.0
    %5249 = vmatprep.subr.mxu0 0.0
    %5250 = vmatpush1.msra.mxu0 0.0
    %5251 = vmatprep.subr.mxu0 0.0
    %5252 = vmatpush1.msra.mxu0 0.0
    %5253 = vmatprep.subr.mxu0 0.0
    %5254 = vmatpush1.msra.mxu0 0.0
    %5255 = vmatprep.subr.mxu0 0.0
    %5256 = vmatpush1.msra.mxu0 0.0
    %5257 = vmatprep.subr.mxu0 0.0
    %5258 = vmatpush1.msra.mxu0 0.0
    %5259 = vmatprep.subr.mxu0 0.0
    %5260 = vmatpush1.msra.mxu0 0.0
    %5261 = vmatprep.subr.mxu0 0.0
    %5262 = vmatpush1.msra.mxu0 0.0
    %5263 = vmatprep.subr.mxu0 0.0
    %5264 = vmatpush1.msra.mxu0 0.0
    %5265 = vmatprep.subr.mxu0 0.0
    %5266 = vmatpush1.msra.mxu0 0.0
    %5267 = vmatprep.subr.mxu0 0.0
    %5268 = vmatpush1.msra.mxu0 0.0
    %5269 = vmatprep.subr.mxu0 0.0
    %5270 = vmatpush1.msra.mxu0 0.0
    %5271 = vmatprep.subr.mxu0 0.0
    %5272 = vmatpush1.msra.mxu0 0.0
    %5273 = vmatprep.subr.mxu0 0.0
    %5274 = vmatpush1.msra.mxu0 0.0
    %5275 = vmatprep.subr.mxu0 0.0
    %5276 = vmatpush1.msra.mxu0 0.0
    %5277 = vmatprep.subr.mxu0 0.0
    %5278 = vmatpush1.msra.mxu0 0.0
    %5279 = vmatprep.subr.mxu0 0.0
    %5280 = vmatpush1.msra.mxu0 0.0
    %5281 = vmatprep.subr.mxu0 0.0
    %5282 = vmatpush1.msra.mxu0 0.0
    %5283 = vmatprep.subr.mxu0 0.0
    %5284 = vmatpush1.msra.mxu0 0.0
    %5285 = vmatprep.subr.mxu0 0.0
    %5286 = vmatpush1.msra.mxu0 0.0
    %5287 = vmatprep.subr.mxu0 0.0
    %5288 = vmatpush1.msra.mxu0 0.0
    %5289 = vmatprep.mubr.f32.mxu0 0.0
    %v5290 = vand.u32 %v4809, 4294901760
    %5291 = vmatmul.mubr.f32.gmra.mrb[0].mxu0 %v5290
    %v5292 = vpop.f32.mrb[0].mxu0
    %v5293 = vadd.f32 %v5218, %v5292
    %v5294 = vpop.f32.mrb[0].mxu0
    %5295 = vdwg.mxu0
    %v5296 = vsel %vm82, %v5293, -inf
    %5297 = vmax.xlane.f32.xlu0 %v5296
    %v5298 = vpop.xlane.xlu0 %5297
    %v5299 = vsub.f32 %v5293, %v5298
    %v5300 = vmul.f32 %v5299, 1.442695
    %v5301 = vpow.pop %v5300
    %v5302 = vsel %vm82, %v5301, 0.0
    %5303 = vadd.xlane.f32.xlu0 %v5302
    %v5304 = vpop.xlane.xlu0 %5303
    %v5305 = vlog2.pop %v5304
    %v5306 = vmul.f32 %v5305, 0.6931472
    %v5307 = vsub.f32 %v5299, %v5306
    %5308 = vst.msk [vmem:[#allocation8] sm:$0xff] %vm82, %v5307
    // Predicated region
    $region42: #{lstm_forward.1} parent=1 // pred_check
      _
    $region43: #{lstm_forward.1} parent=1 // pred_check_branch
      %5310 = sbr.rel (0) target = $region45
    $region44: #{lstm_forward.1} parent=1 // pred_region
      %s5312 = ssub.s32 128, 128
      %5313 = vsyncadd [#allocation5], %s5312
      %s5315 = sshll.u32 [#allocation8], 4
      %s5316 = int_to_ptr.vmem [resolvable:$true] %s5315
      %5318 = dma.vmem_to_hbm [thread:$0]  %s5316, 128, %s8, [#allocation5]
    $region45: #{lstm_forward.1} parent=1 // pred_fallthru
      _
    // Predicated region
    $region46: #{lstm_forward.1} parent=1 // pred_check
      _
    $region47: #{lstm_forward.1} parent=1 // pred_check_branch
      %5320 = sbr.rel (0) target = $region49
    $region48: #{lstm_forward.1} parent=1 // pred_region
      %s5322 = ssub.s32 16, 16
      %5323 = vsyncadd [#allocation10], %s5322
      %s5325 = sshll.u32 [#allocation9], 4
      %s5326 = int_to_ptr.vmem [resolvable:$true] %s5325
      %5328 = dma.vmem_to_hbm [thread:$0]  %s5326, 16, %s9, [#allocation10]
    $region49: #{lstm_forward.1} parent=1 // pred_fallthru
      _
    // Predicated region
    $region50: #{lstm_forward.1} parent=1 // pred_check
      _
    $region51: #{lstm_forward.1} parent=1 // pred_check_branch
      %5330 = sbr.rel (0) target = $region53
    $region52: #{lstm_forward.1} parent=1 // pred_region
      %s5332 = ssub.s32 16, 16
      %5333 = vsyncadd [#allocation10], %s5332
      %s5335 = sshll.u32 [#allocation11], 4
      %s5336 = int_to_ptr.vmem [resolvable:$true] %s5335
      %5338 = dma.vmem_to_hbm [thread:$0]  %s5336, 16, %s10, [#allocation10]
    $region53: #{lstm_forward.1} parent=1 // pred_fallthru
      _
    // Predicated region
    $region54: #{lstm_forward.1} parent=1 // pred_check
      _
    $region55: #{lstm_forward.1} parent=1 // pred_check_branch
      %5340 = sbr.rel (0) target = $region57
    $region56: #{lstm_forward.1} parent=1 // pred_region
      %5341 = dma.done [#allocation5], 128
    $region57: #{lstm_forward.1} parent=1 // pred_fallthru
      _
    // Predicated region
    $region58: #{lstm_forward.1} parent=1 // pred_check
      _
    $region59: #{lstm_forward.1} parent=1 // pred_check_branch
      %5343 = sbr.rel (0) target = $region61
    $region60: #{lstm_forward.1} parent=1 // pred_region
      %5344 = dma.done [#allocation10], 16
    $region61: #{lstm_forward.1} parent=1 // pred_fallthru
      _
    // Predicated region
    $region62: #{lstm_forward.1} parent=1 // pred_check
      _
    $region63: #{lstm_forward.1} parent=1 // pred_check_branch
      %5346 = sbr.rel (0) target = $region65
    $region64: #{lstm_forward.1} parent=1 // pred_region
      %5347 = dma.done [#allocation10], 16
    $region65: #{lstm_forward.1} parent=1 // pred_fallthru
      _
    %5348 = vsyncpa [#allocation4], 1
    %5349 = vsyncpa [#allocation7], 1
    %5350 = vsyncpa [#allocation5], 1
    %5351 = vsyncpa [#allocation10], 1

</llo_original>
